<compile_context>
chip_gen: v5e
topology: v5e:2x2
jax: 0.10.0
libtpu: 0.0.40
codegen_flags: <defaults>
</compile_context>

<pallas_src>
import functools

import jax
import jax.numpy as jnp
from jax.experimental import pallas as pl
from jax.experimental.pallas import tpu as pltpu

LN_EPS = 1e-5  # PyTorch nn.LayerNorm default


# ----------------------------------------------------------------------------
# Tiling helpers
# ----------------------------------------------------------------------------
def _round_up(x, m):
    return ((x + m - 1) // m) * m


def _sublane_packing(dtype):
    # fp32 -> 8, bf16 -> 16, int8/fp8 -> 32 rows per packed vreg sublane group.
    return max(8, 32 // jnp.dtype(dtype).itemsize)


def _pick_tile_rows(rows, row_bytes, packing, block_byte_budget, max_rows=2048):
    """Largest sublane-aligned row tile whose block stays under the budget."""
    t = max(block_byte_budget // max(row_bytes, 1), packing)
    t = min(t, max_rows)
    t = max((t // packing) * packing, packing)
    if rows <= t:
        # Don't make one giant padded block for small inputs.
        t = _round_up(rows, packing)
    return t


def _vmem_limit(*block_bytes, temps_bytes=0):
    # 2x each block (double-buffered pipeline) + fp32 temporaries + ~40% slack.
    need = 2 * sum(block_bytes) + temps_bytes
    return int(min(max(need * 1.4, 16 << 20), 64 << 20))


# ----------------------------------------------------------------------------
# Kernel 1: plain LayerNorm over the trailing dim (generic path)
# ----------------------------------------------------------------------------
def _layernorm_kernel(x_ref, w_ref, b_ref, o_ref, *, inv_dim):
    x = x_ref[...].astype(jnp.float32)
    mean = jnp.sum(x, axis=-1, keepdims=True) * inv_dim
    c = x - mean
    var = jnp.sum(c * c, axis=-1, keepdims=True) * inv_dim
    y = c * jax.lax.rsqrt(var + LN_EPS)
    y = y * w_ref[...].astype(jnp.float32) + b_ref[...].astype(jnp.float32)
    o_ref[...] = y.astype(o_ref.dtype)


def layernorm_pallas(x, weight, bias, *, block_byte_budget=4 << 20):
    """LayerNorm over the last axis of x (any leading shape), via Pallas."""
    orig_shape = x.shape
    dim = orig_shape[-1]
    x2 = x.reshape(-1, dim)
    rows = x2.shape[0]

    itemsize = jnp.dtype(x.dtype).itemsize
    packing = _sublane_packing(x.dtype)
    tile_rows = _pick_tile_rows(rows, dim * itemsize, packing, block_byte_budget)
    padded = _round_up(rows, tile_rows)
    if padded != rows:
        x2 = jnp.pad(x2, ((0, padded - rows), (0, 0)))

    w2 = weight.reshape(1, dim)
    b2 = bias.reshape(1, dim)

    blk_io = tile_rows * dim * itemsize
    temps = 3 * tile_rows * dim * 4  # fp32 upcast + intermediates
    vmem_limit = _vmem_limit(blk_io, blk_io, temps_bytes=temps)

    kernel = functools.partial(_layernorm_kernel, inv_dim=1.0 / dim)
    out = pl.pallas_call(
        kernel,
        out_shape=jax.ShapeDtypeStruct((padded, dim), x.dtype),
        grid_spec=pltpu.PrefetchScalarGridSpec(
            num_scalar_prefetch=0,
            grid=(padded // tile_rows,),
            in_specs=[
                pl.BlockSpec((tile_rows, dim), lambda i: (i, 0)),
                pl.BlockSpec((1, dim), lambda i: (0, 0)),
                pl.BlockSpec((1, dim), lambda i: (0, 0)),
            ],
            out_specs=pl.BlockSpec((tile_rows, dim), lambda i: (i, 0)),
        ),
        compiler_params=pltpu.CompilerParams(
            dimension_semantics=("parallel",),
            vmem_limit_bytes=vmem_limit,
        ),
    )(x2, w2, b2)
    if padded != rows:
        out = out[:rows]
    return out.reshape(orig_shape)


# ----------------------------------------------------------------------------
# Kernel 2: fused LayerNorm + linear projection (LN output never hits HBM)
# ----------------------------------------------------------------------------
def _layernorm_linear_kernel(x_ref, g_ref, b_ref, w_ref, pb_ref, o_ref, *, inv_dim):
    x = x_ref[...].astype(jnp.float32)
    mean = jnp.sum(x, axis=-1, keepdims=True) * inv_dim
    c = x - mean
    var = jnp.sum(c * c, axis=-1, keepdims=True) * inv_dim
    y = c * jax.lax.rsqrt(var + LN_EPS)
    y = y * g_ref[...].astype(jnp.float32) + b_ref[...].astype(jnp.float32)
    acc = jnp.dot(y.astype(w_ref.dtype), w_ref[...],
                  preferred_element_type=jnp.float32)
    acc = acc + pb_ref[...].astype(jnp.float32)
    o_ref[...] = acc.astype(o_ref.dtype)


def layernorm_linear_pallas(x, ln_w, ln_b, proj_w, proj_b=None,
                            *, block_byte_budget=4 << 20):
    """fn(norm(x)) where fn(y) = y @ proj_w (+ proj_b), fused in one kernel."""
    orig_shape = x.shape
    dim = orig_shape[-1]
    out_dim = proj_w.shape[-1]
    x2 = x.reshape(-1, dim)
    rows = x2.shape[0]

    itemsize = jnp.dtype(x.dtype).itemsize
    packing = _sublane_packing(x.dtype)
    row_bytes = max(dim, out_dim) * itemsize
    tile_rows = _pick_tile_rows(rows, row_bytes, packing, block_byte_budget)
    padded = _round_up(rows, tile_rows)
    if padded != rows:
        x2 = jnp.pad(x2, ((0, padded - rows), (0, 0)))

    g2 = ln_w.reshape(1, dim)
    b2 = ln_b.reshape(1, dim)
    if proj_b is None:
        proj_b = jnp.zeros((out_dim,), dtype=proj_w.dtype)
    pb2 = proj_b.reshape(1, out_dim)

    blk_in = tile_rows * dim * itemsize
    blk_w = dim * out_dim * jnp.dtype(proj_w.dtype).itemsize
    blk_out = tile_rows * out_dim * itemsize
    temps = tile_rows * (2 * dim + out_dim) * 4
    vmem_limit = _vmem_limit(blk_in, blk_w, blk_out, temps_bytes=temps)

    kernel = functools.partial(_layernorm_linear_kernel, inv_dim=1.0 / dim)
    out = pl.pallas_call(
        kernel,
        out_shape=jax.ShapeDtypeStruct((padded, out_dim), x.dtype),
        grid_spec=pltpu.PrefetchScalarGridSpec(
            num_scalar_prefetch=0,
            grid=(padded // tile_rows,),
            in_specs=[
                pl.BlockSpec((tile_rows, dim), lambda i: (i, 0)),
                pl.BlockSpec((1, dim), lambda i: (0, 0)),
                pl.BlockSpec((1, dim), lambda i: (0, 0)),
                pl.BlockSpec((dim, out_dim), lambda i: (0, 0)),
                pl.BlockSpec((1, out_dim), lambda i: (0, 0)),
            ],
            out_specs=pl.BlockSpec((tile_rows, out_dim), lambda i: (i, 0)),
        ),
        compiler_params=pltpu.CompilerParams(
            dimension_semantics=("parallel",),
            vmem_limit_bytes=vmem_limit,
        ),
    )(x2, g2, b2, proj_w, pb2)
    if padded != rows:
        out = out[:rows]
    return out.reshape(orig_shape[:-1] + (out_dim,))


# ----------------------------------------------------------------------------
# Module wrappers
# ----------------------------------------------------------------------------
class Linear:
    """Simple linear fn (y @ W + b) — recognized by PreNorm for kernel fusion."""

    def __init__(self, weight, bias=None):
        self.weight = weight  # (in_dim, out_dim)
        self.bias = bias

    def __call__(self, y):
        out = y @ self.weight
        if self.bias is not None:
            out = out + self.bias
        return out


class PreNorm:
    """JAX/Pallas equivalent of:
        class PreNorm(nn.Module):
            def __init__(self, dim, fn):
                self.norm = nn.LayerNorm(dim); self.fn = fn
            def forward(self, x, **kw): return self.fn(self.norm(x), **kw)

    If `fn` is a Linear, LN + projection are fused into one Pallas kernel
    (saves a full HBM round trip of the normalized activations). Otherwise LN
    runs in the Pallas kernel and `fn` is applied as plain JAX.
    """

    def __init__(self, dim, fn, param_dtype=jnp.float32):
        # nn.LayerNorm(dim) init: weight = ones(dim), bias = zeros(dim)
        self.weight = jnp.ones((dim,), dtype=param_dtype)
        self.bias = jnp.zeros((dim,), dtype=param_dtype)
        self.fn = fn

    def __call__(self, x, **kwargs):
        if isinstance(self.fn, Linear) and not kwargs:
            return layernorm_linear_pallas(
                x, self.weight, self.bias, self.fn.weight, self.fn.bias)
        # TODO(synk): arbitrary wrapped `fn` modules cannot be fused generically;
        # they run as plain JAX on the Pallas-normalized output.
        return self.fn(layernorm_pallas(x, self.weight, self.bias), **kwargs)


if __name__ == "__main__":
    # Small shapes consistent with PreNorm's (batch, seq, dim) usage; dim=1024
    # matches the spec and keeps the output lane-dense (multiple of 128).
    batch, seq, dim = 2, 8, 1024
    key = jax.random.PRNGKey(0)
    kx, kw, kb = jax.random.split(key, 3)
    x = jax.random.normal(kx, (batch, seq, dim), dtype=jnp.float32)
    w_fn = jax.random.normal(kw, (dim, dim), dtype=jnp.float32) * 0.02
    b_fn = jax.random.normal(kb, (dim,), dtype=jnp.float32) * 0.02

    # Fused path (fn is a known linear projection).
    prenorm_fused = PreNorm(dim, Linear(w_fn, b_fn))
    out_fused = jax.block_until_ready(prenorm_fused(x))

    # Generic path (fn is an arbitrary callable).
    prenorm_generic = PreNorm(dim, lambda y: y @ w_fn + b_fn)
    out_generic = jax.block_until_ready(prenorm_generic(x))

    # Pure-JAX reference.
    mean = jnp.mean(x, axis=-1, keepdims=True)
    var = jnp.mean((x - mean) ** 2, axis=-1, keepdims=True)
    ln_ref = (x - mean) * jax.lax.rsqrt(var + LN_EPS)
    ref = ln_ref @ w_fn + b_fn

    # LayerNorm-only check (tight).
    ln_pallas = layernorm_pallas(x, jnp.ones((dim,)), jnp.zeros((dim,)))
    assert jnp.allclose(ln_pallas, ln_ref, atol=1e-4, rtol=1e-4), "LN mismatch"

    # Full PreNorm checks (looser: in/out-of-kernel matmul precision differs).
    assert jnp.allclose(out_generic, ref, atol=1e-2, rtol=1e-2), \
        "generic PreNorm mismatch"
    assert jnp.allclose(out_fused, ref, atol=1e-2, rtol=1e-2), \
        "fused PreNorm mismatch"

    print("KERNEL_OK")
</pallas_src>

<mosaic_0001>
module attributes {stable_mosaic.version = 11 : i64} {
  func.func @_layernorm_linear_kernel(%arg0: i32, %arg1: memref<16x1024xf32, #tpu.memory_space<vmem>>, %arg2: memref<1x1024xf32, #tpu.memory_space<vmem>>, %arg3: memref<1x1024xf32, #tpu.memory_space<vmem>>, %arg4: memref<1024x1024xf32, #tpu.memory_space<vmem>>, %arg5: memref<1x1024xf32, #tpu.memory_space<vmem>>, %arg6: memref<16x1024xf32, #tpu.memory_space<vmem>>) attributes {dimension_semantics = [#tpu.dimension_semantics<parallel>], iteration_bounds = array<i64: 1>, scalar_prefetch = 0 : i64, scratch_operands = 0 : i64, tpu.core_type = #tpu.core_type<tc>, window_params = [{transform_indices = @transform_0, window_bounds = array<i64: 16, 1024>}, {pipeline_mode = #tpu.pipeline_mode<synchronous>, transform_indices = @transform_1, window_bounds = array<i64: 1, 1024>}, {pipeline_mode = #tpu.pipeline_mode<synchronous>, transform_indices = @transform_2, window_bounds = array<i64: 1, 1024>}, {pipeline_mode = #tpu.pipeline_mode<synchronous>, transform_indices = @transform_3, window_bounds = array<i64: 1024, 1024>}, {pipeline_mode = #tpu.pipeline_mode<synchronous>, transform_indices = @transform_4, window_bounds = array<i64: 1, 1024>}, {transform_indices = @transform_5, window_bounds = array<i64: 16, 1024>}]} {
    %c0 = arith.constant 0 : index
    %c0_0 = arith.constant 0 : index
    %0 = vector.load %arg1[%c0, %c0_0] : memref<16x1024xf32, #tpu.memory_space<vmem>>, vector<16x1024xf32>
    %cst = arith.constant dense<0.000000e+00> : vector<16xf32>
    %1 = vector.multi_reduction <add>, %0, %cst [1] : vector<16x1024xf32> to vector<16xf32>
    %2 = vector.shape_cast %1 : vector<16xf32> to vector<16x1xf32>
    %cst_1 = arith.constant 9.765625E-4 : f32
    %3 = vector.broadcast %cst_1 : f32 to vector<16x1xf32>
    %4 = arith.mulf %2, %3 : vector<16x1xf32>
    %5 = vector.broadcast %4 : vector<16x1xf32> to vector<16x1024xf32>
    %6 = arith.subf %0, %5 : vector<16x1024xf32>
    %7 = arith.mulf %6, %6 : vector<16x1024xf32>
    %cst_2 = arith.constant dense<0.000000e+00> : vector<16xf32>
    %8 = vector.multi_reduction <add>, %7, %cst_2 [1] : vector<16x1024xf32> to vector<16xf32>
    %9 = vector.shape_cast %8 : vector<16xf32> to vector<16x1xf32>
    %cst_3 = arith.constant 9.765625E-4 : f32
    %10 = vector.broadcast %cst_3 : f32 to vector<16x1xf32>
    %11 = arith.mulf %9, %10 : vector<16x1xf32>
    %cst_4 = arith.constant 9.99999974E-6 : f32
    %12 = vector.broadcast %cst_4 : f32 to vector<16x1xf32>
    %13 = arith.addf %11, %12 : vector<16x1xf32>
    %14 = math.rsqrt %13 : vector<16x1xf32>
    %15 = vector.broadcast %14 : vector<16x1xf32> to vector<16x1024xf32>
    %16 = arith.mulf %6, %15 : vector<16x1024xf32>
    %c0_5 = arith.constant 0 : index
    %c0_6 = arith.constant 0 : index
    %17 = vector.load %arg2[%c0_5, %c0_6] : memref<1x1024xf32, #tpu.memory_space<vmem>>, vector<1x1024xf32>
    %18 = vector.broadcast %17 : vector<1x1024xf32> to vector<16x1024xf32>
    %19 = arith.mulf %16, %18 : vector<16x1024xf32>
    %c0_7 = arith.constant 0 : index
    %c0_8 = arith.constant 0 : index
    %20 = vector.load %arg3[%c0_7, %c0_8] : memref<1x1024xf32, #tpu.memory_space<vmem>>, vector<1x1024xf32>
    %21 = vector.broadcast %20 : vector<1x1024xf32> to vector<16x1024xf32>
    %22 = arith.addf %19, %21 : vector<16x1024xf32>
    %c0_9 = arith.constant 0 : index
    %c0_10 = arith.constant 0 : index
    %23 = vector.load %arg4[%c0_9, %c0_10] : memref<1024x1024xf32, #tpu.memory_space<vmem>>, vector<1024x1024xf32>
    %cst_11 = arith.constant dense<0.000000e+00> : vector<16x1024xf32>
    %24 = tpu.matmul %22, %23, %cst_11 {dimension_numbers = #tpu.dot_dimension_numbers<[1], [0], [0], [1], [0, 0, 1, 1], [], []>} : vector<16x1024xf32>, vector<1024x1024xf32>, vector<16x1024xf32> -> vector<16x1024xf32>
    %c0_12 = arith.constant 0 : index
    %c0_13 = arith.constant 0 : index
    %25 = vector.load %arg5[%c0_12, %c0_13] : memref<1x1024xf32, #tpu.memory_space<vmem>>, vector<1x1024xf32>
    %26 = vector.broadcast %25 : vector<1x1024xf32> to vector<16x1024xf32>
    %27 = arith.addf %24, %26 : vector<16x1024xf32>
    %c0_14 = arith.constant 0 : index
    %c0_15 = arith.constant 0 : index
    %28 = vector.load %arg6[%c0_14, %c0_15] : memref<16x1024xf32, #tpu.memory_space<vmem>>, vector<16x1024xf32>
    tpu.vector_store %arg6[%c0_14, %c0_15], %27 {strides = array<i32>} : memref<16x1024xf32, #tpu.memory_space<vmem>>, vector<16x1024xf32>,
    return
  }
  func.func @transform_0(%arg0: i32) -> (i32, i32) {
    %c0_i32 = arith.constant 0 : i32
    %c0_i32_0 = arith.constant 0 : i32
    return %arg0, %c0_i32 : i32, i32
  }
  func.func @transform_1(%arg0: i32) -> (i32, i32) {
    %c0_i32 = arith.constant 0 : i32
    %c0_i32_0 = arith.constant 0 : i32
    %c0_i32_1 = arith.constant 0 : i32
    return %c0_i32, %c0_i32_0 : i32, i32
  }
  func.func @transform_2(%arg0: i32) -> (i32, i32) {
    %c0_i32 = arith.constant 0 : i32
    %c0_i32_0 = arith.constant 0 : i32
    %c0_i32_1 = arith.constant 0 : i32
    return %c0_i32, %c0_i32_0 : i32, i32
  }
  func.func @transform_3(%arg0: i32) -> (i32, i32) {
    %c0_i32 = arith.constant 0 : i32
    %c0_i32_0 = arith.constant 0 : i32
    %c0_i32_1 = arith.constant 0 : i32
    return %c0_i32, %c0_i32_0 : i32, i32
  }
  func.func @transform_4(%arg0: i32) -> (i32, i32) {
    %c0_i32 = arith.constant 0 : i32
    %c0_i32_0 = arith.constant 0 : i32
    %c0_i32_1 = arith.constant 0 : i32
    return %c0_i32, %c0_i32_0 : i32, i32
  }
  func.func @transform_5(%arg0: i32) -> (i32, i32) {
    %c0_i32 = arith.constant 0 : i32
    %c0_i32_0 = arith.constant 0 : i32
    return %arg0, %c0_i32 : i32, i32
  }
}

</mosaic_0001>

<llo_original>
// kernel: tpu_custom_call.1
$region0: #{tpu_custom_call.1}
  #allocation0 [shape = 'u32[]', space=smem, size = 0x4, offset = 0x4, fixed_abs, tag = 'smem constant byte address 0x4 - core index']
  #allocation1 [shape = 'u32[72,128]{1,0:T(1,128)}', space=vmem, size = 0x9000, scoped, tag = 'internal scratch']
  %s0 = inlined_call_operand.hbm [shape: f32[16,1024], index: 0, kind: input, shape index: {}]
  %s1 = inlined_call_operand.hbm [shape: f32[1,1024], index: 1, kind: input, shape index: {}]
  %s2 = inlined_call_operand.hbm [shape: f32[1,1024], index: 2, kind: input, shape index: {}]
  %s3 = inlined_call_operand.hbm [shape: f32[1024,1024], index: 3, kind: input, shape index: {}]
  %s4 = inlined_call_operand.hbm [shape: f32[1,1024], index: 4, kind: input, shape index: {}]
  %s5 = inlined_call_operand.hbm [shape: f32[16,1024], index: 5, kind: output, shape index: {}]
  %s6 = sld [smem:[#allocation0]]
  $region50: #{tpu_custom_call.1} parent=0
    _
  %s8 = ssub.s32 1, %s6
  %s9 = scalar_select 0, %s8, %s6
  $region1: #{tpu_custom_call.1} parent=0
    #allocation2 [shape = 'u8[65536]{0}', space=vmem, size = 0x10000, scoped, tag = 'input window, operand 0, single buffered']
    #allocation3 [shape = 's32[1]{0}', space=sflag, size = 0x4, scoped, tag = 'scoped memory for tpu_custom_call.1']
    #allocation4 [shape = 's32[1]{0}', space=sflag, size = 0x4, scoped, tag = 'scoped memory for tpu_custom_call.1']
    #allocation5 [shape = 'u8[4096]{0}', space=vmem, size = 0x1000, scoped, tag = 'input window, operand 1, single buffered']
    #allocation6 [shape = 's32[1]{0}', space=sflag, size = 0x4, scoped, tag = 'scoped memory for tpu_custom_call.1']
    #allocation7 [shape = 'u8[4096]{0}', space=vmem, size = 0x1000, scoped, tag = 'input window, operand 2, single buffered']
    #allocation8 [shape = 'u8[4194304]{0}', space=vmem, size = 0x400000, scoped, tag = 'input window, operand 3, single buffered']
    #allocation9 [shape = 's32[1]{0}', space=sflag, size = 0x4, scoped, tag = 'scoped memory for tpu_custom_call.1']
    #allocation10 [shape = 'u8[4096]{0}', space=vmem, size = 0x1000, scoped, tag = 'input window, operand 4, single buffered']
    #allocation11 [shape = 'u8[65536]{0}', space=vmem, size = 0x10000, scoped, tag = 'output window, operand 0, single buffered']
    %10 = vsyncpa [#allocation3], 0
    %11 = vsyncpa [#allocation6], 0
    %12 = vsyncpa [#allocation9], 0
    %13 = vsyncpa [#allocation4], 0
    // Predicated region
    $region2: #{tpu_custom_call.1} parent=1 // pred_check
      _
    $region3: #{tpu_custom_call.1} parent=1 // pred_check_branch
      %15 = sbr.rel (0) target = $region5
    $region4: #{tpu_custom_call.1} parent=1 // pred_region
      %17 = vsyncadd [#allocation3], 0
      %s18 = sshll.u32 %s0, 4
      %s19 = int_to_ptr.hbm [resolvable:$true] %s18
      %s20 = sshll.u32 [#allocation2], 4
      %s21 = int_to_ptr.vmem [resolvable:$true] %s20
      %26 = dma.hbm_to_vmem [thread:$0]  %s19, 2048, %s21, [#allocation3], 1024, 1024, 64
    $region5: #{tpu_custom_call.1} parent=1 // pred_fallthru
      _
    // Predicated region
    $region6: #{tpu_custom_call.1} parent=1 // pred_check
      _
    $region7: #{tpu_custom_call.1} parent=1 // pred_check_branch
      %28 = sbr.rel (0) target = $region9
    $region8: #{tpu_custom_call.1} parent=1 // pred_region
      %30 = vsyncadd [#allocation6], 0
      %s32 = sshll.u32 %s1, 4
      %s33 = int_to_ptr.hbm [resolvable:$true] %s32
      %s34 = sshll.u32 [#allocation5], 4
      %s35 = int_to_ptr.vmem [resolvable:$true] %s34
      %37 = dma.hbm_to_vmem [thread:$0]  %s33, 128, %s35, [#allocation6]
    $region9: #{tpu_custom_call.1} parent=1 // pred_fallthru
      _
    // Predicated region
    $region10: #{tpu_custom_call.1} parent=1 // pred_check
      _
    $region11: #{tpu_custom_call.1} parent=1 // pred_check_branch
      %39 = sbr.rel (0) target = $region13
    $region12: #{tpu_custom_call.1} parent=1 // pred_region
      %41 = vsyncadd [#allocation6], 0
      %s43 = sshll.u32 %s2, 4
      %s44 = int_to_ptr.hbm [resolvable:$true] %s43
      %s45 = sshll.u32 [#allocation7], 4
      %s46 = int_to_ptr.vmem [resolvable:$true] %s45
      %48 = dma.hbm_to_vmem [thread:$0]  %s44, 128, %s46, [#allocation6]
    $region13: #{tpu_custom_call.1} parent=1 // pred_fallthru
      _
    // Predicated region
    $region14: #{tpu_custom_call.1} parent=1 // pred_check
      _
    $region15: #{tpu_custom_call.1} parent=1 // pred_check_branch
      %50 = sbr.rel (0) target = $region17
    $region16: #{tpu_custom_call.1} parent=1 // pred_region
      %52 = vsyncadd [#allocation9], 0
      %s53 = sshll.u32 %s3, 4
      %s54 = int_to_ptr.hbm [resolvable:$true] %s53
      %s55 = sshll.u32 [#allocation8], 4
      %s56 = int_to_ptr.vmem [resolvable:$true] %s55
      %61 = dma.hbm_to_vmem [thread:$0]  %s54, 131072, %s56, [#allocation9], 1024, 1024, 64
    $region17: #{tpu_custom_call.1} parent=1 // pred_fallthru
      _
    // Predicated region
    $region18: #{tpu_custom_call.1} parent=1 // pred_check
      _
    $region19: #{tpu_custom_call.1} parent=1 // pred_check_branch
      %63 = sbr.rel (0) target = $region21
    $region20: #{tpu_custom_call.1} parent=1 // pred_region
      %65 = vsyncadd [#allocation9], 0
      %s67 = sshll.u32 %s4, 4
      %s68 = int_to_ptr.hbm [resolvable:$true] %s67
      %s69 = sshll.u32 [#allocation10], 4
      %s70 = int_to_ptr.vmem [resolvable:$true] %s69
      %72 = dma.hbm_to_vmem [thread:$0]  %s68, 128, %s70, [#allocation9]
    $region21: #{tpu_custom_call.1} parent=1 // pred_fallthru
      _
    // Predicated region
    $region22: #{tpu_custom_call.1} parent=1 // pred_check
      _
    $region23: #{tpu_custom_call.1} parent=1 // pred_check_branch
      %74 = sbr.rel (0) target = $region25
    $region24: #{tpu_custom_call.1} parent=1 // pred_region
      %76 = dma.done [#allocation3], 2048
    $region25: #{tpu_custom_call.1} parent=1 // pred_fallthru
      _
    // Predicated region
    $region26: #{tpu_custom_call.1} parent=1 // pred_check
      _
    $region27: #{tpu_custom_call.1} parent=1 // pred_check_branch
      %78 = sbr.rel (0) target = $region29
    $region28: #{tpu_custom_call.1} parent=1 // pred_region
      %80 = dma.done [#allocation6], 128
    $region29: #{tpu_custom_call.1} parent=1 // pred_fallthru
      _
    // Predicated region
    $region30: #{tpu_custom_call.1} parent=1 // pred_check
      _
    $region31: #{tpu_custom_call.1} parent=1 // pred_check_branch
      %82 = sbr.rel (0) target = $region33
    $region32: #{tpu_custom_call.1} parent=1 // pred_region
      %84 = dma.done [#allocation6], 128
    $region33: #{tpu_custom_call.1} parent=1 // pred_fallthru
      _
    // Predicated region
    $region34: #{tpu_custom_call.1} parent=1 // pred_check
      _
    $region35: #{tpu_custom_call.1} parent=1 // pred_check_branch
      %86 = sbr.rel (0) target = $region37
    $region36: #{tpu_custom_call.1} parent=1 // pred_region
      %88 = dma.done [#allocation9], 131072
    $region37: #{tpu_custom_call.1} parent=1 // pred_fallthru
      _
    // Predicated region
    $region38: #{tpu_custom_call.1} parent=1 // pred_check
      _
    $region39: #{tpu_custom_call.1} parent=1 // pred_check_branch
      %90 = sbr.rel (0) target = $region41
    $region40: #{tpu_custom_call.1} parent=1 // pred_region
      %92 = dma.done [#allocation9], 128
    $region41: #{tpu_custom_call.1} parent=1 // pred_fallthru
      _
    %v93 = vld [vmem:[#allocation2] sm:$0xff]
    %v94 = vld [vmem:[#allocation2 + $0x8] sm:$0xff]
    %v95 = vld [vmem:[#allocation2 + $0x10] sm:$0xff]
    %v96 = vld [vmem:[#allocation2 + $0x18] sm:$0xff]
    %v97 = vld [vmem:[#allocation2 + $0x20] sm:$0xff]
    %v98 = vld [vmem:[#allocation2 + $0x28] sm:$0xff]
    %v99 = vld [vmem:[#allocation2 + $0x30] sm:$0xff]
    %v100 = vld [vmem:[#allocation2 + $0x38] sm:$0xff]
    %v101 = vld [vmem:[#allocation2 + $0x40] sm:$0xff]
    %v102 = vld [vmem:[#allocation2 + $0x48] sm:$0xff]
    %v103 = vld [vmem:[#allocation2 + $0x50] sm:$0xff]
    %v104 = vld [vmem:[#allocation2 + $0x58] sm:$0xff]
    %v105 = vld [vmem:[#allocation2 + $0x60] sm:$0xff]
    %v106 = vld [vmem:[#allocation2 + $0x68] sm:$0xff]
    %v107 = vld [vmem:[#allocation2 + $0x70] sm:$0xff]
    %v108 = vld [vmem:[#allocation2 + $0x78] sm:$0xff]
    %v109 = vadd.f32 %v93, %v94
    %v110 = vadd.f32 %v109, %v95
    %v111 = vadd.f32 %v110, %v96
    %v112 = vadd.f32 %v111, %v97
    %v113 = vadd.f32 %v112, %v98
    %v114 = vadd.f32 %v113, %v99
    %v115 = vadd.f32 %v114, %v100
    %116 = vadd.xlane.f32.xlu0 %v115
    %v117 = vpop.xlane.xlu0 %116
    %v118 = vadd.f32 %v101, %v102
    %v119 = vadd.f32 %v118, %v103
    %v120 = vadd.f32 %v119, %v104
    %v121 = vadd.f32 %v120, %v105
    %v122 = vadd.f32 %v121, %v106
    %v123 = vadd.f32 %v122, %v107
    %v124 = vadd.f32 %v123, %v108
    %125 = vadd.xlane.f32.xlu0 %v124
    %v126 = vpop.xlane.xlu0 %125
    %v127 = vmul.f32 %v117, 0.0009765625
    %v128 = vmul.f32 %v126, 0.0009765625
    %v129 = vsub.f32 %v93, %v127
    %v130 = vsub.f32 %v94, %v127
    %v131 = vsub.f32 %v95, %v127
    %v132 = vsub.f32 %v96, %v127
    %v133 = vsub.f32 %v97, %v127
    %v134 = vsub.f32 %v98, %v127
    %v135 = vsub.f32 %v99, %v127
    %v136 = vsub.f32 %v100, %v127
    %v137 = vsub.f32 %v101, %v128
    %v138 = vsub.f32 %v102, %v128
    %v139 = vsub.f32 %v103, %v128
    %v140 = vsub.f32 %v104, %v128
    %v141 = vsub.f32 %v105, %v128
    %v142 = vsub.f32 %v106, %v128
    %v143 = vsub.f32 %v107, %v128
    %v144 = vsub.f32 %v108, %v128
    %v145 = vmul.f32 %v129, %v129
    %v146 = vmul.f32 %v130, %v130
    %v147 = vmul.f32 %v131, %v131
    %v148 = vmul.f32 %v132, %v132
    %v149 = vmul.f32 %v133, %v133
    %v150 = vmul.f32 %v134, %v134
    %v151 = vmul.f32 %v135, %v135
    %v152 = vmul.f32 %v136, %v136
    %v153 = vmul.f32 %v137, %v137
    %v154 = vmul.f32 %v138, %v138
    %v155 = vmul.f32 %v139, %v139
    %v156 = vmul.f32 %v140, %v140
    %v157 = vmul.f32 %v141, %v141
    %v158 = vmul.f32 %v142, %v142
    %v159 = vmul.f32 %v143, %v143
    %v160 = vmul.f32 %v144, %v144
    %v161 = vadd.f32 %v145, %v146
    %v162 = vadd.f32 %v161, %v147
    %v163 = vadd.f32 %v162, %v148
    %v164 = vadd.f32 %v163, %v149
    %v165 = vadd.f32 %v164, %v150
    %v166 = vadd.f32 %v165, %v151
    %v167 = vadd.f32 %v166, %v152
    %168 = vadd.xlane.f32.xlu0 %v167
    %v169 = vpop.xlane.xlu0 %168
    %v170 = vadd.f32 %v153, %v154
    %v171 = vadd.f32 %v170, %v155
    %v172 = vadd.f32 %v171, %v156
    %v173 = vadd.f32 %v172, %v157
    %v174 = vadd.f32 %v173, %v158
    %v175 = vadd.f32 %v174, %v159
    %v176 = vadd.f32 %v175, %v160
    %177 = vadd.xlane.f32.xlu0 %v176
    %v178 = vpop.xlane.xlu0 %177
    %v179 = vmul.f32 %v169, 0.0009765625
    %v180 = vmul.f32 %v178, 0.0009765625
    %v181 = vadd.f32 %v179, 1e-05
    %v182 = vadd.f32 %v180, 1e-05
    %v183 = vrsqrt.pop %v181
    %v184 = vmul.f32 %v183, %v181
    %v185 = vmul.f32 %v184, %v183
    %v186 = vmul.f32 0.5, %v185
    %v187 = vsub.f32 1.5, %v186
    %v188 = vmul.f32 %v183, %v187
    %vm189 = vweird.f32 %v181
    %vm190 = vweird.f32 %v183
    %vm191 = vmor %vm189, %vm190
    %v192 = vsel %vm191, %v183, %v188
    %v193 = vrsqrt.pop %v182
    %v194 = vmul.f32 %v193, %v182
    %v195 = vmul.f32 %v194, %v193
    %v196 = vmul.f32 0.5, %v195
    %v197 = vsub.f32 1.5, %v196
    %v198 = vmul.f32 %v193, %v197
    %vm199 = vweird.f32 %v182
    %vm200 = vweird.f32 %v193
    %vm201 = vmor %vm199, %vm200
    %v202 = vsel %vm201, %v193, %v198
    %v203 = vmul.f32 %v129, %v192
    %v204 = vmul.f32 %v130, %v192
    %v205 = vmul.f32 %v131, %v192
    %v206 = vmul.f32 %v132, %v192
    %v207 = vmul.f32 %v133, %v192
    %v208 = vmul.f32 %v134, %v192
    %v209 = vmul.f32 %v135, %v192
    %v210 = vmul.f32 %v136, %v192
    %v211 = vmul.f32 %v137, %v202
    %v212 = vmul.f32 %v138, %v202
    %v213 = vmul.f32 %v139, %v202
    %v214 = vmul.f32 %v140, %v202
    %v215 = vmul.f32 %v141, %v202
    %v216 = vmul.f32 %v142, %v202
    %v217 = vmul.f32 %v143, %v202
    %v218 = vmul.f32 %v144, %v202
    %v219 = vld [vmem:[#allocation5] sm:$0xff]
    %v221 = vperm.slane %v219, 0
    %v222 = vperm.slane %v219, 1
    %v223 = vperm.slane %v219, 2
    %v224 = vperm.slane %v219, 3
    %v225 = vperm.slane %v219, 4
    %v226 = vperm.slane %v219, 5
    %v227 = vperm.slane %v219, 6
    %v228 = vperm.slane %v219, 7
    %v237 = vmul.f32 %v203, %v221
    %v238 = vmul.f32 %v204, %v222
    %v239 = vmul.f32 %v205, %v223
    %v240 = vmul.f32 %v206, %v224
    %v241 = vmul.f32 %v207, %v225
    %v242 = vmul.f32 %v208, %v226
    %v243 = vmul.f32 %v209, %v227
    %v244 = vmul.f32 %v210, %v228
    %v245 = vmul.f32 %v211, %v221
    %v246 = vmul.f32 %v212, %v222
    %v247 = vmul.f32 %v213, %v223
    %v248 = vmul.f32 %v214, %v224
    %v249 = vmul.f32 %v215, %v225
    %v250 = vmul.f32 %v216, %v226
    %v251 = vmul.f32 %v217, %v227
    %v252 = vmul.f32 %v218, %v228
    %v253 = vld [vmem:[#allocation7] sm:$0xff]
    %v255 = vperm.slane %v253, 0
    %v256 = vperm.slane %v253, 1
    %v257 = vperm.slane %v253, 2
    %v258 = vperm.slane %v253, 3
    %v259 = vperm.slane %v253, 4
    %v260 = vperm.slane %v253, 5
    %v261 = vperm.slane %v253, 6
    %v262 = vperm.slane %v253, 7
    %v271 = vadd.f32 %v237, %v255
    %v272 = vadd.f32 %v238, %v256
    %v273 = vadd.f32 %v239, %v257
    %v274 = vadd.f32 %v240, %v258
    %v275 = vadd.f32 %v241, %v259
    %v276 = vadd.f32 %v242, %v260
    %v277 = vadd.f32 %v243, %v261
    %v278 = vadd.f32 %v244, %v262
    %v279 = vadd.f32 %v245, %v255
    %v280 = vadd.f32 %v246, %v256
    %v281 = vadd.f32 %v247, %v257
    %v282 = vadd.f32 %v248, %v258
    %v283 = vadd.f32 %v249, %v259
    %v284 = vadd.f32 %v250, %v260
    %v285 = vadd.f32 %v251, %v261
    %v286 = vadd.f32 %v252, %v262
    %v287 = vld [vmem:[#allocation8] sm:$0xff]
    %v288 = vld [vmem:[#allocation8 + $0x8] sm:$0xff]
    %v289 = vld [vmem:[#allocation8 + $0x10] sm:$0xff]
    %v290 = vld [vmem:[#allocation8 + $0x18] sm:$0xff]
    %v291 = vld [vmem:[#allocation8 + $0x20] sm:$0xff]
    %v292 = vld [vmem:[#allocation8 + $0x28] sm:$0xff]
    %v293 = vld [vmem:[#allocation8 + $0x30] sm:$0xff]
    %v294 = vld [vmem:[#allocation8 + $0x38] sm:$0xff]
    %v295 = vld [vmem:[#allocation8 + $0x40] sm:$0xff]
    %v296 = vld [vmem:[#allocation8 + $0x48] sm:$0xff]
    %v297 = vld [vmem:[#allocation8 + $0x50] sm:$0xff]
    %v298 = vld [vmem:[#allocation8 + $0x58] sm:$0xff]
    %v299 = vld [vmem:[#allocation8 + $0x60] sm:$0xff]
    %v300 = vld [vmem:[#allocation8 + $0x68] sm:$0xff]
    %v301 = vld [vmem:[#allocation8 + $0x70] sm:$0xff]
    %v302 = vld [vmem:[#allocation8 + $0x78] sm:$0xff]
    %v303 = vld [vmem:[#allocation8 + $0x80] sm:$0xff]
    %v304 = vld [vmem:[#allocation8 + $0x88] sm:$0xff]
    %v305 = vld [vmem:[#allocation8 + $0x90] sm:$0xff]
    %v306 = vld [vmem:[#allocation8 + $0x98] sm:$0xff]
    %v307 = vld [vmem:[#allocation8 + $0xa0] sm:$0xff]
    %v308 = vld [vmem:[#allocation8 + $0xa8] sm:$0xff]
    %v309 = vld [vmem:[#allocation8 + $0xb0] sm:$0xff]
    %v310 = vld [vmem:[#allocation8 + $0xb8] sm:$0xff]
    %v311 = vld [vmem:[#allocation8 + $0xc0] sm:$0xff]
    %v312 = vld [vmem:[#allocation8 + $0xc8] sm:$0xff]
    %v313 = vld [vmem:[#allocation8 + $0xd0] sm:$0xff]
    %v314 = vld [vmem:[#allocation8 + $0xd8] sm:$0xff]
    %v315 = vld [vmem:[#allocation8 + $0xe0] sm:$0xff]
    %v316 = vld [vmem:[#allocation8 + $0xe8] sm:$0xff]
    %v317 = vld [vmem:[#allocation8 + $0xf0] sm:$0xff]
    %v318 = vld [vmem:[#allocation8 + $0xf8] sm:$0xff]
    %v319 = vld [vmem:[#allocation8 + $0x100] sm:$0xff]
    %v320 = vld [vmem:[#allocation8 + $0x108] sm:$0xff]
    %v321 = vld [vmem:[#allocation8 + $0x110] sm:$0xff]
    %v322 = vld [vmem:[#allocation8 + $0x118] sm:$0xff]
    %v323 = vld [vmem:[#allocation8 + $0x120] sm:$0xff]
    %v324 = vld [vmem:[#allocation8 + $0x128] sm:$0xff]
    %v325 = vld [vmem:[#allocation8 + $0x130] sm:$0xff]
    %v326 = vld [vmem:[#allocation8 + $0x138] sm:$0xff]
    %v327 = vld [vmem:[#allocation8 + $0x140] sm:$0xff]
    %v328 = vld [vmem:[#allocation8 + $0x148] sm:$0xff]
    %v329 = vld [vmem:[#allocation8 + $0x150] sm:$0xff]
    %v330 = vld [vmem:[#allocation8 + $0x158] sm:$0xff]
    %v331 = vld [vmem:[#allocation8 + $0x160] sm:$0xff]
    %v332 = vld [vmem:[#allocation8 + $0x168] sm:$0xff]
    %v333 = vld [vmem:[#allocation8 + $0x170] sm:$0xff]
    %v334 = vld [vmem:[#allocation8 + $0x178] sm:$0xff]
    %v335 = vld [vmem:[#allocation8 + $0x180] sm:$0xff]
    %v336 = vld [vmem:[#allocation8 + $0x188] sm:$0xff]
    %v337 = vld [vmem:[#allocation8 + $0x190] sm:$0xff]
    %v338 = vld [vmem:[#allocation8 + $0x198] sm:$0xff]
    %v339 = vld [vmem:[#allocation8 + $0x1a0] sm:$0xff]
    %v340 = vld [vmem:[#allocation8 + $0x1a8] sm:$0xff]
    %v341 = vld [vmem:[#allocation8 + $0x1b0] sm:$0xff]
    %v342 = vld [vmem:[#allocation8 + $0x1b8] sm:$0xff]
    %v343 = vld [vmem:[#allocation8 + $0x1c0] sm:$0xff]
    %v344 = vld [vmem:[#allocation8 + $0x1c8] sm:$0xff]
    %v345 = vld [vmem:[#allocation8 + $0x1d0] sm:$0xff]
    %v346 = vld [vmem:[#allocation8 + $0x1d8] sm:$0xff]
    %v347 = vld [vmem:[#allocation8 + $0x1e0] sm:$0xff]
    %v348 = vld [vmem:[#allocation8 + $0x1e8] sm:$0xff]
    %v349 = vld [vmem:[#allocation8 + $0x1f0] sm:$0xff]
    %v350 = vld [vmem:[#allocation8 + $0x1f8] sm:$0xff]
    %v351 = vld [vmem:[#allocation8 + $0x200] sm:$0xff]
    %v352 = vld [vmem:[#allocation8 + $0x208] sm:$0xff]
    %v353 = vld [vmem:[#allocation8 + $0x210] sm:$0xff]
    %v354 = vld [vmem:[#allocation8 + $0x218] sm:$0xff]
    %v355 = vld [vmem:[#allocation8 + $0x220] sm:$0xff]
    %v356 = vld [vmem:[#allocation8 + $0x228] sm:$0xff]
    %v357 = vld [vmem:[#allocation8 + $0x230] sm:$0xff]
    %v358 = vld [vmem:[#allocation8 + $0x238] sm:$0xff]
    %v359 = vld [vmem:[#allocation8 + $0x240] sm:$0xff]
    %v360 = vld [vmem:[#allocation8 + $0x248] sm:$0xff]
    %v361 = vld [vmem:[#allocation8 + $0x250] sm:$0xff]
    %v362 = vld [vmem:[#allocation8 + $0x258] sm:$0xff]
    %v363 = vld [vmem:[#allocation8 + $0x260] sm:$0xff]
    %v364 = vld [vmem:[#allocation8 + $0x268] sm:$0xff]
    %v365 = vld [vmem:[#allocation8 + $0x270] sm:$0xff]
    %v366 = vld [vmem:[#allocation8 + $0x278] sm:$0xff]
    %v367 = vld [vmem:[#allocation8 + $0x280] sm:$0xff]
    %v368 = vld [vmem:[#allocation8 + $0x288] sm:$0xff]
    %v369 = vld [vmem:[#allocation8 + $0x290] sm:$0xff]
    %v370 = vld [vmem:[#allocation8 + $0x298] sm:$0xff]
    %v371 = vld [vmem:[#allocation8 + $0x2a0] sm:$0xff]
    %v372 = vld [vmem:[#allocation8 + $0x2a8] sm:$0xff]
    %v373 = vld [vmem:[#allocation8 + $0x2b0] sm:$0xff]
    %v374 = vld [vmem:[#allocation8 + $0x2b8] sm:$0xff]
    %v375 = vld [vmem:[#allocation8 + $0x2c0] sm:$0xff]
    %v376 = vld [vmem:[#allocation8 + $0x2c8] sm:$0xff]
    %v377 = vld [vmem:[#allocation8 + $0x2d0] sm:$0xff]
    %v378 = vld [vmem:[#allocation8 + $0x2d8] sm:$0xff]
    %v379 = vld [vmem:[#allocation8 + $0x2e0] sm:$0xff]
    %v380 = vld [vmem:[#allocation8 + $0x2e8] sm:$0xff]
    %v381 = vld [vmem:[#allocation8 + $0x2f0] sm:$0xff]
    %v382 = vld [vmem:[#allocation8 + $0x2f8] sm:$0xff]
    %v383 = vld [vmem:[#allocation8 + $0x300] sm:$0xff]
    %v384 = vld [vmem:[#allocation8 + $0x308] sm:$0xff]
    %v385 = vld [vmem:[#allocation8 + $0x310] sm:$0xff]
    %v386 = vld [vmem:[#allocation8 + $0x318] sm:$0xff]
    %v387 = vld [vmem:[#allocation8 + $0x320] sm:$0xff]
    %v388 = vld [vmem:[#allocation8 + $0x328] sm:$0xff]
    %v389 = vld [vmem:[#allocation8 + $0x330] sm:$0xff]
    %v390 = vld [vmem:[#allocation8 + $0x338] sm:$0xff]
    %v391 = vld [vmem:[#allocation8 + $0x340] sm:$0xff]
    %v392 = vld [vmem:[#allocation8 + $0x348] sm:$0xff]
    %v393 = vld [vmem:[#allocation8 + $0x350] sm:$0xff]
    %v394 = vld [vmem:[#allocation8 + $0x358] sm:$0xff]
    %v395 = vld [vmem:[#allocation8 + $0x360] sm:$0xff]
    %v396 = vld [vmem:[#allocation8 + $0x368] sm:$0xff]
    %v397 = vld [vmem:[#allocation8 + $0x370] sm:$0xff]
    %v398 = vld [vmem:[#allocation8 + $0x378] sm:$0xff]
    %v399 = vld [vmem:[#allocation8 + $0x380] sm:$0xff]
    %v400 = vld [vmem:[#allocation8 + $0x388] sm:$0xff]
    %v401 = vld [vmem:[#allocation8 + $0x390] sm:$0xff]
    %v402 = vld [vmem:[#allocation8 + $0x398] sm:$0xff]
    %v403 = vld [vmem:[#allocation8 + $0x3a0] sm:$0xff]
    %v404 = vld [vmem:[#allocation8 + $0x3a8] sm:$0xff]
    %v405 = vld [vmem:[#allocation8 + $0x3b0] sm:$0xff]
    %v406 = vld [vmem:[#allocation8 + $0x3b8] sm:$0xff]
    %v407 = vld [vmem:[#allocation8 + $0x3c0] sm:$0xff]
    %v408 = vld [vmem:[#allocation8 + $0x3c8] sm:$0xff]
    %v409 = vld [vmem:[#allocation8 + $0x3d0] sm:$0xff]
    %v410 = vld [vmem:[#allocation8 + $0x3d8] sm:$0xff]
    %v411 = vld [vmem:[#allocation8 + $0x3e0] sm:$0xff]
    %v412 = vld [vmem:[#allocation8 + $0x3e8] sm:$0xff]
    %v413 = vld [vmem:[#allocation8 + $0x3f0] sm:$0xff]
    %v414 = vld [vmem:[#allocation8 + $0x3f8] sm:$0xff]
    %v415 = vld [vmem:[#allocation8 + $0x400] sm:$0xff]
    %v416 = vld [vmem:[#allocation8 + $0x408] sm:$0xff]
    %v417 = vld [vmem:[#allocation8 + $0x410] sm:$0xff]
    %v418 = vld [vmem:[#allocation8 + $0x418] sm:$0xff]
    %v419 = vld [vmem:[#allocation8 + $0x420] sm:$0xff]
    %v420 = vld [vmem:[#allocation8 + $0x428] sm:$0xff]
    %v421 = vld [vmem:[#allocation8 + $0x430] sm:$0xff]
    %v422 = vld [vmem:[#allocation8 + $0x438] sm:$0xff]
    %v423 = vld [vmem:[#allocation8 + $0x440] sm:$0xff]
    %v424 = vld [vmem:[#allocation8 + $0x448] sm:$0xff]
    %v425 = vld [vmem:[#allocation8 + $0x450] sm:$0xff]
    %v426 = vld [vmem:[#allocation8 + $0x458] sm:$0xff]
    %v427 = vld [vmem:[#allocation8 + $0x460] sm:$0xff]
    %v428 = vld [vmem:[#allocation8 + $0x468] sm:$0xff]
    %v429 = vld [vmem:[#allocation8 + $0x470] sm:$0xff]
    %v430 = vld [vmem:[#allocation8 + $0x478] sm:$0xff]
    %v431 = vld [vmem:[#allocation8 + $0x480] sm:$0xff]
    %v432 = vld [vmem:[#allocation8 + $0x488] sm:$0xff]
    %v433 = vld [vmem:[#allocation8 + $0x490] sm:$0xff]
    %v434 = vld [vmem:[#allocation8 + $0x498] sm:$0xff]
    %v435 = vld [vmem:[#allocation8 + $0x4a0] sm:$0xff]
    %v436 = vld [vmem:[#allocation8 + $0x4a8] sm:$0xff]
    %v437 = vld [vmem:[#allocation8 + $0x4b0] sm:$0xff]
    %v438 = vld [vmem:[#allocation8 + $0x4b8] sm:$0xff]
    %v439 = vld [vmem:[#allocation8 + $0x4c0] sm:$0xff]
    %v440 = vld [vmem:[#allocation8 + $0x4c8] sm:$0xff]
    %v441 = vld [vmem:[#allocation8 + $0x4d0] sm:$0xff]
    %v442 = vld [vmem:[#allocation8 + $0x4d8] sm:$0xff]
    %v443 = vld [vmem:[#allocation8 + $0x4e0] sm:$0xff]
    %v444 = vld [vmem:[#allocation8 + $0x4e8] sm:$0xff]
    %v445 = vld [vmem:[#allocation8 + $0x4f0] sm:$0xff]
    %v446 = vld [vmem:[#allocation8 + $0x4f8] sm:$0xff]
    %v447 = vld [vmem:[#allocation8 + $0x500] sm:$0xff]
    %v448 = vld [vmem:[#allocation8 + $0x508] sm:$0xff]
    %v449 = vld [vmem:[#allocation8 + $0x510] sm:$0xff]
    %v450 = vld [vmem:[#allocation8 + $0x518] sm:$0xff]
    %v451 = vld [vmem:[#allocation8 + $0x520] sm:$0xff]
    %v452 = vld [vmem:[#allocation8 + $0x528] sm:$0xff]
    %v453 = vld [vmem:[#allocation8 + $0x530] sm:$0xff]
    %v454 = vld [vmem:[#allocation8 + $0x538] sm:$0xff]
    %v455 = vld [vmem:[#allocation8 + $0x540] sm:$0xff]
    %v456 = vld [vmem:[#allocation8 + $0x548] sm:$0xff]
    %v457 = vld [vmem:[#allocation8 + $0x550] sm:$0xff]
    %v458 = vld [vmem:[#allocation8 + $0x558] sm:$0xff]
    %v459 = vld [vmem:[#allocation8 + $0x560] sm:$0xff]
    %v460 = vld [vmem:[#allocation8 + $0x568] sm:$0xff]
    %v461 = vld [vmem:[#allocation8 + $0x570] sm:$0xff]
    %v462 = vld [vmem:[#allocation8 + $0x578] sm:$0xff]
    %v463 = vld [vmem:[#allocation8 + $0x580] sm:$0xff]
    %v464 = vld [vmem:[#allocation8 + $0x588] sm:$0xff]
    %v465 = vld [vmem:[#allocation8 + $0x590] sm:$0xff]
    %v466 = vld [vmem:[#allocation8 + $0x598] sm:$0xff]
    %v467 = vld [vmem:[#allocation8 + $0x5a0] sm:$0xff]
    %v468 = vld [vmem:[#allocation8 + $0x5a8] sm:$0xff]
    %v469 = vld [vmem:[#allocation8 + $0x5b0] sm:$0xff]
    %v470 = vld [vmem:[#allocation8 + $0x5b8] sm:$0xff]
    %v471 = vld [vmem:[#allocation8 + $0x5c0] sm:$0xff]
    %v472 = vld [vmem:[#allocation8 + $0x5c8] sm:$0xff]
    %v473 = vld [vmem:[#allocation8 + $0x5d0] sm:$0xff]
    %v474 = vld [vmem:[#allocation8 + $0x5d8] sm:$0xff]
    %v475 = vld [vmem:[#allocation8 + $0x5e0] sm:$0xff]
    %v476 = vld [vmem:[#allocation8 + $0x5e8] sm:$0xff]
    %v477 = vld [vmem:[#allocation8 + $0x5f0] sm:$0xff]
    %v478 = vld [vmem:[#allocation8 + $0x5f8] sm:$0xff]
    %v479 = vld [vmem:[#allocation8 + $0x600] sm:$0xff]
    %v480 = vld [vmem:[#allocation8 + $0x608] sm:$0xff]
    %v481 = vld [vmem:[#allocation8 + $0x610] sm:$0xff]
    %v482 = vld [vmem:[#allocation8 + $0x618] sm:$0xff]
    %v483 = vld [vmem:[#allocation8 + $0x620] sm:$0xff]
    %v484 = vld [vmem:[#allocation8 + $0x628] sm:$0xff]
    %v485 = vld [vmem:[#allocation8 + $0x630] sm:$0xff]
    %v486 = vld [vmem:[#allocation8 + $0x638] sm:$0xff]
    %v487 = vld [vmem:[#allocation8 + $0x640] sm:$0xff]
    %v488 = vld [vmem:[#allocation8 + $0x648] sm:$0xff]
    %v489 = vld [vmem:[#allocation8 + $0x650] sm:$0xff]
    %v490 = vld [vmem:[#allocation8 + $0x658] sm:$0xff]
    %v491 = vld [vmem:[#allocation8 + $0x660] sm:$0xff]
    %v492 = vld [vmem:[#allocation8 + $0x668] sm:$0xff]
    %v493 = vld [vmem:[#allocation8 + $0x670] sm:$0xff]
    %v494 = vld [vmem:[#allocation8 + $0x678] sm:$0xff]
    %v495 = vld [vmem:[#allocation8 + $0x680] sm:$0xff]
    %v496 = vld [vmem:[#allocation8 + $0x688] sm:$0xff]
    %v497 = vld [vmem:[#allocation8 + $0x690] sm:$0xff]
    %v498 = vld [vmem:[#allocation8 + $0x698] sm:$0xff]
    %v499 = vld [vmem:[#allocation8 + $0x6a0] sm:$0xff]
    %v500 = vld [vmem:[#allocation8 + $0x6a8] sm:$0xff]
    %v501 = vld [vmem:[#allocation8 + $0x6b0] sm:$0xff]
    %v502 = vld [vmem:[#allocation8 + $0x6b8] sm:$0xff]
    %v503 = vld [vmem:[#allocation8 + $0x6c0] sm:$0xff]
    %v504 = vld [vmem:[#allocation8 + $0x6c8] sm:$0xff]
    %v505 = vld [vmem:[#allocation8 + $0x6d0] sm:$0xff]
    %v506 = vld [vmem:[#allocation8 + $0x6d8] sm:$0xff]
    %v507 = vld [vmem:[#allocation8 + $0x6e0] sm:$0xff]
    %v508 = vld [vmem:[#allocation8 + $0x6e8] sm:$0xff]
    %v509 = vld [vmem:[#allocation8 + $0x6f0] sm:$0xff]
    %v510 = vld [vmem:[#allocation8 + $0x6f8] sm:$0xff]
    %v511 = vld [vmem:[#allocation8 + $0x700] sm:$0xff]
    %v512 = vld [vmem:[#allocation8 + $0x708] sm:$0xff]
    %v513 = vld [vmem:[#allocation8 + $0x710] sm:$0xff]
    %v514 = vld [vmem:[#allocation8 + $0x718] sm:$0xff]
    %v515 = vld [vmem:[#allocation8 + $0x720] sm:$0xff]
    %v516 = vld [vmem:[#allocation8 + $0x728] sm:$0xff]
    %v517 = vld [vmem:[#allocation8 + $0x730] sm:$0xff]
    %v518 = vld [vmem:[#allocation8 + $0x738] sm:$0xff]
    %v519 = vld [vmem:[#allocation8 + $0x740] sm:$0xff]
    %v520 = vld [vmem:[#allocation8 + $0x748] sm:$0xff]
    %v521 = vld [vmem:[#allocation8 + $0x750] sm:$0xff]
    %v522 = vld [vmem:[#allocation8 + $0x758] sm:$0xff]
    %v523 = vld [vmem:[#allocation8 + $0x760] sm:$0xff]
    %v524 = vld [vmem:[#allocation8 + $0x768] sm:$0xff]
    %v525 = vld [vmem:[#allocation8 + $0x770] sm:$0xff]
    %v526 = vld [vmem:[#allocation8 + $0x778] sm:$0xff]
    %v527 = vld [vmem:[#allocation8 + $0x780] sm:$0xff]
    %v528 = vld [vmem:[#allocation8 + $0x788] sm:$0xff]
    %v529 = vld [vmem:[#allocation8 + $0x790] sm:$0xff]
    %v530 = vld [vmem:[#allocation8 + $0x798] sm:$0xff]
    %v531 = vld [vmem:[#allocation8 + $0x7a0] sm:$0xff]
    %v532 = vld [vmem:[#allocation8 + $0x7a8] sm:$0xff]
    %v533 = vld [vmem:[#allocation8 + $0x7b0] sm:$0xff]
    %v534 = vld [vmem:[#allocation8 + $0x7b8] sm:$0xff]
    %v535 = vld [vmem:[#allocation8 + $0x7c0] sm:$0xff]
    %v536 = vld [vmem:[#allocation8 + $0x7c8] sm:$0xff]
    %v537 = vld [vmem:[#allocation8 + $0x7d0] sm:$0xff]
    %v538 = vld [vmem:[#allocation8 + $0x7d8] sm:$0xff]
    %v539 = vld [vmem:[#allocation8 + $0x7e0] sm:$0xff]
    %v540 = vld [vmem:[#allocation8 + $0x7e8] sm:$0xff]
    %v541 = vld [vmem:[#allocation8 + $0x7f0] sm:$0xff]
    %v542 = vld [vmem:[#allocation8 + $0x7f8] sm:$0xff]
    %v543 = vld [vmem:[#allocation8 + $0x800] sm:$0xff]
    %v544 = vld [vmem:[#allocation8 + $0x808] sm:$0xff]
    %v545 = vld [vmem:[#allocation8 + $0x810] sm:$0xff]
    %v546 = vld [vmem:[#allocation8 + $0x818] sm:$0xff]
    %v547 = vld [vmem:[#allocation8 + $0x820] sm:$0xff]
    %v548 = vld [vmem:[#allocation8 + $0x828] sm:$0xff]
    %v549 = vld [vmem:[#allocation8 + $0x830] sm:$0xff]
    %v550 = vld [vmem:[#allocation8 + $0x838] sm:$0xff]
    %v551 = vld [vmem:[#allocation8 + $0x840] sm:$0xff]
    %v552 = vld [vmem:[#allocation8 + $0x848] sm:$0xff]
    %v553 = vld [vmem:[#allocation8 + $0x850] sm:$0xff]
    %v554 = vld [vmem:[#allocation8 + $0x858] sm:$0xff]
    %v555 = vld [vmem:[#allocation8 + $0x860] sm:$0xff]
    %v556 = vld [vmem:[#allocation8 + $0x868] sm:$0xff]
    %v557 = vld [vmem:[#allocation8 + $0x870] sm:$0xff]
    %v558 = vld [vmem:[#allocation8 + $0x878] sm:$0xff]
    %v559 = vld [vmem:[#allocation8 + $0x880] sm:$0xff]
    %v560 = vld [vmem:[#allocation8 + $0x888] sm:$0xff]
    %v561 = vld [vmem:[#allocation8 + $0x890] sm:$0xff]
    %v562 = vld [vmem:[#allocation8 + $0x898] sm:$0xff]
    %v563 = vld [vmem:[#allocation8 + $0x8a0] sm:$0xff]
    %v564 = vld [vmem:[#allocation8 + $0x8a8] sm:$0xff]
    %v565 = vld [vmem:[#allocation8 + $0x8b0] sm:$0xff]
    %v566 = vld [vmem:[#allocation8 + $0x8b8] sm:$0xff]
    %v567 = vld [vmem:[#allocation8 + $0x8c0] sm:$0xff]
    %v568 = vld [vmem:[#allocation8 + $0x8c8] sm:$0xff]
    %v569 = vld [vmem:[#allocation8 + $0x8d0] sm:$0xff]
    %v570 = vld [vmem:[#allocation8 + $0x8d8] sm:$0xff]
    %v571 = vld [vmem:[#allocation8 + $0x8e0] sm:$0xff]
    %v572 = vld [vmem:[#allocation8 + $0x8e8] sm:$0xff]
    %v573 = vld [vmem:[#allocation8 + $0x8f0] sm:$0xff]
    %v574 = vld [vmem:[#allocation8 + $0x8f8] sm:$0xff]
    %v575 = vld [vmem:[#allocation8 + $0x900] sm:$0xff]
    %v576 = vld [vmem:[#allocation8 + $0x908] sm:$0xff]
    %v577 = vld [vmem:[#allocation8 + $0x910] sm:$0xff]
    %v578 = vld [vmem:[#allocation8 + $0x918] sm:$0xff]
    %v579 = vld [vmem:[#allocation8 + $0x920] sm:$0xff]
    %v580 = vld [vmem:[#allocation8 + $0x928] sm:$0xff]
    %v581 = vld [vmem:[#allocation8 + $0x930] sm:$0xff]
    %v582 = vld [vmem:[#allocation8 + $0x938] sm:$0xff]
    %v583 = vld [vmem:[#allocation8 + $0x940] sm:$0xff]
    %v584 = vld [vmem:[#allocation8 + $0x948] sm:$0xff]
    %v585 = vld [vmem:[#allocation8 + $0x950] sm:$0xff]
    %v586 = vld [vmem:[#allocation8 + $0x958] sm:$0xff]
    %v587 = vld [vmem:[#allocation8 + $0x960] sm:$0xff]
    %v588 = vld [vmem:[#allocation8 + $0x968] sm:$0xff]
    %v589 = vld [vmem:[#allocation8 + $0x970] sm:$0xff]
    %v590 = vld [vmem:[#allocation8 + $0x978] sm:$0xff]
    %v591 = vld [vmem:[#allocation8 + $0x980] sm:$0xff]
    %v592 = vld [vmem:[#allocation8 + $0x988] sm:$0xff]
    %v593 = vld [vmem:[#allocation8 + $0x990] sm:$0xff]
    %v594 = vld [vmem:[#allocation8 + $0x998] sm:$0xff]
    %v595 = vld [vmem:[#allocation8 + $0x9a0] sm:$0xff]
    %v596 = vld [vmem:[#allocation8 + $0x9a8] sm:$0xff]
    %v597 = vld [vmem:[#allocation8 + $0x9b0] sm:$0xff]
    %v598 = vld [vmem:[#allocation8 + $0x9b8] sm:$0xff]
    %v599 = vld [vmem:[#allocation8 + $0x9c0] sm:$0xff]
    %v600 = vld [vmem:[#allocation8 + $0x9c8] sm:$0xff]
    %v601 = vld [vmem:[#allocation8 + $0x9d0] sm:$0xff]
    %v602 = vld [vmem:[#allocation8 + $0x9d8] sm:$0xff]
    %v603 = vld [vmem:[#allocation8 + $0x9e0] sm:$0xff]
    %v604 = vld [vmem:[#allocation8 + $0x9e8] sm:$0xff]
    %v605 = vld [vmem:[#allocation8 + $0x9f0] sm:$0xff]
    %v606 = vld [vmem:[#allocation8 + $0x9f8] sm:$0xff]
    %v607 = vld [vmem:[#allocation8 + $0xa00] sm:$0xff]
    %v608 = vld [vmem:[#allocation8 + $0xa08] sm:$0xff]
    %v609 = vld [vmem:[#allocation8 + $0xa10] sm:$0xff]
    %v610 = vld [vmem:[#allocation8 + $0xa18] sm:$0xff]
    %v611 = vld [vmem:[#allocation8 + $0xa20] sm:$0xff]
    %v612 = vld [vmem:[#allocation8 + $0xa28] sm:$0xff]
    %v613 = vld [vmem:[#allocation8 + $0xa30] sm:$0xff]
    %v614 = vld [vmem:[#allocation8 + $0xa38] sm:$0xff]
    %v615 = vld [vmem:[#allocation8 + $0xa40] sm:$0xff]
    %v616 = vld [vmem:[#allocation8 + $0xa48] sm:$0xff]
    %v617 = vld [vmem:[#allocation8 + $0xa50] sm:$0xff]
    %v618 = vld [vmem:[#allocation8 + $0xa58] sm:$0xff]
    %v619 = vld [vmem:[#allocation8 + $0xa60] sm:$0xff]
    %v620 = vld [vmem:[#allocation8 + $0xa68] sm:$0xff]
    %v621 = vld [vmem:[#allocation8 + $0xa70] sm:$0xff]
    %v622 = vld [vmem:[#allocation8 + $0xa78] sm:$0xff]
    %v623 = vld [vmem:[#allocation8 + $0xa80] sm:$0xff]
    %v624 = vld [vmem:[#allocation8 + $0xa88] sm:$0xff]
    %v625 = vld [vmem:[#allocation8 + $0xa90] sm:$0xff]
    %v626 = vld [vmem:[#allocation8 + $0xa98] sm:$0xff]
    %v627 = vld [vmem:[#allocation8 + $0xaa0] sm:$0xff]
    %v628 = vld [vmem:[#allocation8 + $0xaa8] sm:$0xff]
    %v629 = vld [vmem:[#allocation8 + $0xab0] sm:$0xff]
    %v630 = vld [vmem:[#allocation8 + $0xab8] sm:$0xff]
    %v631 = vld [vmem:[#allocation8 + $0xac0] sm:$0xff]
    %v632 = vld [vmem:[#allocation8 + $0xac8] sm:$0xff]
    %v633 = vld [vmem:[#allocation8 + $0xad0] sm:$0xff]
    %v634 = vld [vmem:[#allocation8 + $0xad8] sm:$0xff]
    %v635 = vld [vmem:[#allocation8 + $0xae0] sm:$0xff]
    %v636 = vld [vmem:[#allocation8 + $0xae8] sm:$0xff]
    %v637 = vld [vmem:[#allocation8 + $0xaf0] sm:$0xff]
    %v638 = vld [vmem:[#allocation8 + $0xaf8] sm:$0xff]
    %v639 = vld [vmem:[#allocation8 + $0xb00] sm:$0xff]
    %v640 = vld [vmem:[#allocation8 + $0xb08] sm:$0xff]
    %v641 = vld [vmem:[#allocation8 + $0xb10] sm:$0xff]
    %v642 = vld [vmem:[#allocation8 + $0xb18] sm:$0xff]
    %v643 = vld [vmem:[#allocation8 + $0xb20] sm:$0xff]
    %v644 = vld [vmem:[#allocation8 + $0xb28] sm:$0xff]
    %v645 = vld [vmem:[#allocation8 + $0xb30] sm:$0xff]
    %v646 = vld [vmem:[#allocation8 + $0xb38] sm:$0xff]
    %v647 = vld [vmem:[#allocation8 + $0xb40] sm:$0xff]
    %v648 = vld [vmem:[#allocation8 + $0xb48] sm:$0xff]
    %v649 = vld [vmem:[#allocation8 + $0xb50] sm:$0xff]
    %v650 = vld [vmem:[#allocation8 + $0xb58] sm:$0xff]
    %v651 = vld [vmem:[#allocation8 + $0xb60] sm:$0xff]
    %v652 = vld [vmem:[#allocation8 + $0xb68] sm:$0xff]
    %v653 = vld [vmem:[#allocation8 + $0xb70] sm:$0xff]
    %v654 = vld [vmem:[#allocation8 + $0xb78] sm:$0xff]
    %v655 = vld [vmem:[#allocation8 + $0xb80] sm:$0xff]
    %v656 = vld [vmem:[#allocation8 + $0xb88] sm:$0xff]
    %v657 = vld [vmem:[#allocation8 + $0xb90] sm:$0xff]
    %v658 = vld [vmem:[#allocation8 + $0xb98] sm:$0xff]
    %v659 = vld [vmem:[#allocation8 + $0xba0] sm:$0xff]
    %v660 = vld [vmem:[#allocation8 + $0xba8] sm:$0xff]
    %v661 = vld [vmem:[#allocation8 + $0xbb0] sm:$0xff]
    %v662 = vld [vmem:[#allocation8 + $0xbb8] sm:$0xff]
    %v663 = vld [vmem:[#allocation8 + $0xbc0] sm:$0xff]
    %v664 = vld [vmem:[#allocation8 + $0xbc8] sm:$0xff]
    %v665 = vld [vmem:[#allocation8 + $0xbd0] sm:$0xff]
    %v666 = vld [vmem:[#allocation8 + $0xbd8] sm:$0xff]
    %v667 = vld [vmem:[#allocation8 + $0xbe0] sm:$0xff]
    %v668 = vld [vmem:[#allocation8 + $0xbe8] sm:$0xff]
    %v669 = vld [vmem:[#allocation8 + $0xbf0] sm:$0xff]
    %v670 = vld [vmem:[#allocation8 + $0xbf8] sm:$0xff]
    %v671 = vld [vmem:[#allocation8 + $0xc00] sm:$0xff]
    %v672 = vld [vmem:[#allocation8 + $0xc08] sm:$0xff]
    %v673 = vld [vmem:[#allocation8 + $0xc10] sm:$0xff]
    %v674 = vld [vmem:[#allocation8 + $0xc18] sm:$0xff]
    %v675 = vld [vmem:[#allocation8 + $0xc20] sm:$0xff]
    %v676 = vld [vmem:[#allocation8 + $0xc28] sm:$0xff]
    %v677 = vld [vmem:[#allocation8 + $0xc30] sm:$0xff]
    %v678 = vld [vmem:[#allocation8 + $0xc38] sm:$0xff]
    %v679 = vld [vmem:[#allocation8 + $0xc40] sm:$0xff]
    %v680 = vld [vmem:[#allocation8 + $0xc48] sm:$0xff]
    %v681 = vld [vmem:[#allocation8 + $0xc50] sm:$0xff]
    %v682 = vld [vmem:[#allocation8 + $0xc58] sm:$0xff]
    %v683 = vld [vmem:[#allocation8 + $0xc60] sm:$0xff]
    %v684 = vld [vmem:[#allocation8 + $0xc68] sm:$0xff]
    %v685 = vld [vmem:[#allocation8 + $0xc70] sm:$0xff]
    %v686 = vld [vmem:[#allocation8 + $0xc78] sm:$0xff]
    %v687 = vld [vmem:[#allocation8 + $0xc80] sm:$0xff]
    %v688 = vld [vmem:[#allocation8 + $0xc88] sm:$0xff]
    %v689 = vld [vmem:[#allocation8 + $0xc90] sm:$0xff]
    %v690 = vld [vmem:[#allocation8 + $0xc98] sm:$0xff]
    %v691 = vld [vmem:[#allocation8 + $0xca0] sm:$0xff]
    %v692 = vld [vmem:[#allocation8 + $0xca8] sm:$0xff]
    %v693 = vld [vmem:[#allocation8 + $0xcb0] sm:$0xff]
    %v694 = vld [vmem:[#allocation8 + $0xcb8] sm:$0xff]
    %v695 = vld [vmem:[#allocation8 + $0xcc0] sm:$0xff]
    %v696 = vld [vmem:[#allocation8 + $0xcc8] sm:$0xff]
    %v697 = vld [vmem:[#allocation8 + $0xcd0] sm:$0xff]
    %v698 = vld [vmem:[#allocation8 + $0xcd8] sm:$0xff]
    %v699 = vld [vmem:[#allocation8 + $0xce0] sm:$0xff]
    %v700 = vld [vmem:[#allocation8 + $0xce8] sm:$0xff]
    %v701 = vld [vmem:[#allocation8 + $0xcf0] sm:$0xff]
    %v702 = vld [vmem:[#allocation8 + $0xcf8] sm:$0xff]
    %v703 = vld [vmem:[#allocation8 + $0xd00] sm:$0xff]
    %v704 = vld [vmem:[#allocation8 + $0xd08] sm:$0xff]
    %v705 = vld [vmem:[#allocation8 + $0xd10] sm:$0xff]
    %v706 = vld [vmem:[#allocation8 + $0xd18] sm:$0xff]
    %v707 = vld [vmem:[#allocation8 + $0xd20] sm:$0xff]
    %v708 = vld [vmem:[#allocation8 + $0xd28] sm:$0xff]
    %v709 = vld [vmem:[#allocation8 + $0xd30] sm:$0xff]
    %v710 = vld [vmem:[#allocation8 + $0xd38] sm:$0xff]
    %v711 = vld [vmem:[#allocation8 + $0xd40] sm:$0xff]
    %v712 = vld [vmem:[#allocation8 + $0xd48] sm:$0xff]
    %v713 = vld [vmem:[#allocation8 + $0xd50] sm:$0xff]
    %v714 = vld [vmem:[#allocation8 + $0xd58] sm:$0xff]
    %v715 = vld [vmem:[#allocation8 + $0xd60] sm:$0xff]
    %v716 = vld [vmem:[#allocation8 + $0xd68] sm:$0xff]
    %v717 = vld [vmem:[#allocation8 + $0xd70] sm:$0xff]
    %v718 = vld [vmem:[#allocation8 + $0xd78] sm:$0xff]
    %v719 = vld [vmem:[#allocation8 + $0xd80] sm:$0xff]
    %v720 = vld [vmem:[#allocation8 + $0xd88] sm:$0xff]
    %v721 = vld [vmem:[#allocation8 + $0xd90] sm:$0xff]
    %v722 = vld [vmem:[#allocation8 + $0xd98] sm:$0xff]
    %v723 = vld [vmem:[#allocation8 + $0xda0] sm:$0xff]
    %v724 = vld [vmem:[#allocation8 + $0xda8] sm:$0xff]
    %v725 = vld [vmem:[#allocation8 + $0xdb0] sm:$0xff]
    %v726 = vld [vmem:[#allocation8 + $0xdb8] sm:$0xff]
    %v727 = vld [vmem:[#allocation8 + $0xdc0] sm:$0xff]
    %v728 = vld [vmem:[#allocation8 + $0xdc8] sm:$0xff]
    %v729 = vld [vmem:[#allocation8 + $0xdd0] sm:$0xff]
    %v730 = vld [vmem:[#allocation8 + $0xdd8] sm:$0xff]
    %v731 = vld [vmem:[#allocation8 + $0xde0] sm:$0xff]
    %v732 = vld [vmem:[#allocation8 + $0xde8] sm:$0xff]
    %v733 = vld [vmem:[#allocation8 + $0xdf0] sm:$0xff]
    %v734 = vld [vmem:[#allocation8 + $0xdf8] sm:$0xff]
    %v735 = vld [vmem:[#allocation8 + $0xe00] sm:$0xff]
    %v736 = vld [vmem:[#allocation8 + $0xe08] sm:$0xff]
    %v737 = vld [vmem:[#allocation8 + $0xe10] sm:$0xff]
    %v738 = vld [vmem:[#allocation8 + $0xe18] sm:$0xff]
    %v739 = vld [vmem:[#allocation8 + $0xe20] sm:$0xff]
    %v740 = vld [vmem:[#allocation8 + $0xe28] sm:$0xff]
    %v741 = vld [vmem:[#allocation8 + $0xe30] sm:$0xff]
    %v742 = vld [vmem:[#allocation8 + $0xe38] sm:$0xff]
    %v743 = vld [vmem:[#allocation8 + $0xe40] sm:$0xff]
    %v744 = vld [vmem:[#allocation8 + $0xe48] sm:$0xff]
    %v745 = vld [vmem:[#allocation8 + $0xe50] sm:$0xff]
    %v746 = vld [vmem:[#allocation8 + $0xe58] sm:$0xff]
    %v747 = vld [vmem:[#allocation8 + $0xe60] sm:$0xff]
    %v748 = vld [vmem:[#allocation8 + $0xe68] sm:$0xff]
    %v749 = vld [vmem:[#allocation8 + $0xe70] sm:$0xff]
    %v750 = vld [vmem:[#allocation8 + $0xe78] sm:$0xff]
    %v751 = vld [vmem:[#allocation8 + $0xe80] sm:$0xff]
    %v752 = vld [vmem:[#allocation8 + $0xe88] sm:$0xff]
    %v753 = vld [vmem:[#allocation8 + $0xe90] sm:$0xff]
    %v754 = vld [vmem:[#allocation8 + $0xe98] sm:$0xff]
    %v755 = vld [vmem:[#allocation8 + $0xea0] sm:$0xff]
    %v756 = vld [vmem:[#allocation8 + $0xea8] sm:$0xff]
    %v757 = vld [vmem:[#allocation8 + $0xeb0] sm:$0xff]
    %v758 = vld [vmem:[#allocation8 + $0xeb8] sm:$0xff]
    %v759 = vld [vmem:[#allocation8 + $0xec0] sm:$0xff]
    %v760 = vld [vmem:[#allocation8 + $0xec8] sm:$0xff]
    %v761 = vld [vmem:[#allocation8 + $0xed0] sm:$0xff]
    %v762 = vld [vmem:[#allocation8 + $0xed8] sm:$0xff]
    %v763 = vld [vmem:[#allocation8 + $0xee0] sm:$0xff]
    %v764 = vld [vmem:[#allocation8 + $0xee8] sm:$0xff]
    %v765 = vld [vmem:[#allocation8 + $0xef0] sm:$0xff]
    %v766 = vld [vmem:[#allocation8 + $0xef8] sm:$0xff]
    %v767 = vld [vmem:[#allocation8 + $0xf00] sm:$0xff]
    %v768 = vld [vmem:[#allocation8 + $0xf08] sm:$0xff]
    %v769 = vld [vmem:[#allocation8 + $0xf10] sm:$0xff]
    %v770 = vld [vmem:[#allocation8 + $0xf18] sm:$0xff]
    %v771 = vld [vmem:[#allocation8 + $0xf20] sm:$0xff]
    %v772 = vld [vmem:[#allocation8 + $0xf28] sm:$0xff]
    %v773 = vld [vmem:[#allocation8 + $0xf30] sm:$0xff]
    %v774 = vld [vmem:[#allocation8 + $0xf38] sm:$0xff]
    %v775 = vld [vmem:[#allocation8 + $0xf40] sm:$0xff]
    %v776 = vld [vmem:[#allocation8 + $0xf48] sm:$0xff]
    %v777 = vld [vmem:[#allocation8 + $0xf50] sm:$0xff]
    %v778 = vld [vmem:[#allocation8 + $0xf58] sm:$0xff]
    %v779 = vld [vmem:[#allocation8 + $0xf60] sm:$0xff]
    %v780 = vld [vmem:[#allocation8 + $0xf68] sm:$0xff]
    %v781 = vld [vmem:[#allocation8 + $0xf70] sm:$0xff]
    %v782 = vld [vmem:[#allocation8 + $0xf78] sm:$0xff]
    %v783 = vld [vmem:[#allocation8 + $0xf80] sm:$0xff]
    %v784 = vld [vmem:[#allocation8 + $0xf88] sm:$0xff]
    %v785 = vld [vmem:[#allocation8 + $0xf90] sm:$0xff]
    %v786 = vld [vmem:[#allocation8 + $0xf98] sm:$0xff]
    %v787 = vld [vmem:[#allocation8 + $0xfa0] sm:$0xff]
    %v788 = vld [vmem:[#allocation8 + $0xfa8] sm:$0xff]
    %v789 = vld [vmem:[#allocation8 + $0xfb0] sm:$0xff]
    %v790 = vld [vmem:[#allocation8 + $0xfb8] sm:$0xff]
    %v791 = vld [vmem:[#allocation8 + $0xfc0] sm:$0xff]
    %v792 = vld [vmem:[#allocation8 + $0xfc8] sm:$0xff]
    %v793 = vld [vmem:[#allocation8 + $0xfd0] sm:$0xff]
    %v794 = vld [vmem:[#allocation8 + $0xfd8] sm:$0xff]
    %v795 = vld [vmem:[#allocation8 + $0xfe0] sm:$0xff]
    %v796 = vld [vmem:[#allocation8 + $0xfe8] sm:$0xff]
    %v797 = vld [vmem:[#allocation8 + $0xff0] sm:$0xff]
    %v798 = vld [vmem:[#allocation8 + $0xff8] sm:$0xff]
    %v799 = vld [vmem:[#allocation8 + $0x1000] sm:$0xff]
    %v800 = vld [vmem:[#allocation8 + $0x1008] sm:$0xff]
    %v801 = vld [vmem:[#allocation8 + $0x1010] sm:$0xff]
    %v802 = vld [vmem:[#allocation8 + $0x1018] sm:$0xff]
    %v803 = vld [vmem:[#allocation8 + $0x1020] sm:$0xff]
    %v804 = vld [vmem:[#allocation8 + $0x1028] sm:$0xff]
    %v805 = vld [vmem:[#allocation8 + $0x1030] sm:$0xff]
    %v806 = vld [vmem:[#allocation8 + $0x1038] sm:$0xff]
    %v807 = vld [vmem:[#allocation8 + $0x1040] sm:$0xff]
    %v808 = vld [vmem:[#allocation8 + $0x1048] sm:$0xff]
    %v809 = vld [vmem:[#allocation8 + $0x1050] sm:$0xff]
    %v810 = vld [vmem:[#allocation8 + $0x1058] sm:$0xff]
    %v811 = vld [vmem:[#allocation8 + $0x1060] sm:$0xff]
    %v812 = vld [vmem:[#allocation8 + $0x1068] sm:$0xff]
    %v813 = vld [vmem:[#allocation8 + $0x1070] sm:$0xff]
    %v814 = vld [vmem:[#allocation8 + $0x1078] sm:$0xff]
    %v815 = vld [vmem:[#allocation8 + $0x1080] sm:$0xff]
    %v816 = vld [vmem:[#allocation8 + $0x1088] sm:$0xff]
    %v817 = vld [vmem:[#allocation8 + $0x1090] sm:$0xff]
    %v818 = vld [vmem:[#allocation8 + $0x1098] sm:$0xff]
    %v819 = vld [vmem:[#allocation8 + $0x10a0] sm:$0xff]
    %v820 = vld [vmem:[#allocation8 + $0x10a8] sm:$0xff]
    %v821 = vld [vmem:[#allocation8 + $0x10b0] sm:$0xff]
    %v822 = vld [vmem:[#allocation8 + $0x10b8] sm:$0xff]
    %v823 = vld [vmem:[#allocation8 + $0x10c0] sm:$0xff]
    %v824 = vld [vmem:[#allocation8 + $0x10c8] sm:$0xff]
    %v825 = vld [vmem:[#allocation8 + $0x10d0] sm:$0xff]
    %v826 = vld [vmem:[#allocation8 + $0x10d8] sm:$0xff]
    %v827 = vld [vmem:[#allocation8 + $0x10e0] sm:$0xff]
    %v828 = vld [vmem:[#allocation8 + $0x10e8] sm:$0xff]
    %v829 = vld [vmem:[#allocation8 + $0x10f0] sm:$0xff]
    %v830 = vld [vmem:[#allocation8 + $0x10f8] sm:$0xff]
    %v831 = vld [vmem:[#allocation8 + $0x1100] sm:$0xff]
    %v832 = vld [vmem:[#allocation8 + $0x1108] sm:$0xff]
    %v833 = vld [vmem:[#allocation8 + $0x1110] sm:$0xff]
    %v834 = vld [vmem:[#allocation8 + $0x1118] sm:$0xff]
    %v835 = vld [vmem:[#allocation8 + $0x1120] sm:$0xff]
    %v836 = vld [vmem:[#allocation8 + $0x1128] sm:$0xff]
    %v837 = vld [vmem:[#allocation8 + $0x1130] sm:$0xff]
    %v838 = vld [vmem:[#allocation8 + $0x1138] sm:$0xff]
    %v839 = vld [vmem:[#allocation8 + $0x1140] sm:$0xff]
    %v840 = vld [vmem:[#allocation8 + $0x1148] sm:$0xff]
    %v841 = vld [vmem:[#allocation8 + $0x1150] sm:$0xff]
    %v842 = vld [vmem:[#allocation8 + $0x1158] sm:$0xff]
    %v843 = vld [vmem:[#allocation8 + $0x1160] sm:$0xff]
    %v844 = vld [vmem:[#allocation8 + $0x1168] sm:$0xff]
    %v845 = vld [vmem:[#allocation8 + $0x1170] sm:$0xff]
    %v846 = vld [vmem:[#allocation8 + $0x1178] sm:$0xff]
    %v847 = vld [vmem:[#allocation8 + $0x1180] sm:$0xff]
    %v848 = vld [vmem:[#allocation8 + $0x1188] sm:$0xff]
    %v849 = vld [vmem:[#allocation8 + $0x1190] sm:$0xff]
    %v850 = vld [vmem:[#allocation8 + $0x1198] sm:$0xff]
    %v851 = vld [vmem:[#allocation8 + $0x11a0] sm:$0xff]
    %v852 = vld [vmem:[#allocation8 + $0x11a8] sm:$0xff]
    %v853 = vld [vmem:[#allocation8 + $0x11b0] sm:$0xff]
    %v854 = vld [vmem:[#allocation8 + $0x11b8] sm:$0xff]
    %v855 = vld [vmem:[#allocation8 + $0x11c0] sm:$0xff]
    %v856 = vld [vmem:[#allocation8 + $0x11c8] sm:$0xff]
    %v857 = vld [vmem:[#allocation8 + $0x11d0] sm:$0xff]
    %v858 = vld [vmem:[#allocation8 + $0x11d8] sm:$0xff]
    %v859 = vld [vmem:[#allocation8 + $0x11e0] sm:$0xff]
    %v860 = vld [vmem:[#allocation8 + $0x11e8] sm:$0xff]
    %v861 = vld [vmem:[#allocation8 + $0x11f0] sm:$0xff]
    %v862 = vld [vmem:[#allocation8 + $0x11f8] sm:$0xff]
    %v863 = vld [vmem:[#allocation8 + $0x1200] sm:$0xff]
    %v864 = vld [vmem:[#allocation8 + $0x1208] sm:$0xff]
    %v865 = vld [vmem:[#allocation8 + $0x1210] sm:$0xff]
    %v866 = vld [vmem:[#allocation8 + $0x1218] sm:$0xff]
    %v867 = vld [vmem:[#allocation8 + $0x1220] sm:$0xff]
    %v868 = vld [vmem:[#allocation8 + $0x1228] sm:$0xff]
    %v869 = vld [vmem:[#allocation8 + $0x1230] sm:$0xff]
    %v870 = vld [vmem:[#allocation8 + $0x1238] sm:$0xff]
    %v871 = vld [vmem:[#allocation8 + $0x1240] sm:$0xff]
    %v872 = vld [vmem:[#allocation8 + $0x1248] sm:$0xff]
    %v873 = vld [vmem:[#allocation8 + $0x1250] sm:$0xff]
    %v874 = vld [vmem:[#allocation8 + $0x1258] sm:$0xff]
    %v875 = vld [vmem:[#allocation8 + $0x1260] sm:$0xff]
    %v876 = vld [vmem:[#allocation8 + $0x1268] sm:$0xff]
    %v877 = vld [vmem:[#allocation8 + $0x1270] sm:$0xff]
    %v878 = vld [vmem:[#allocation8 + $0x1278] sm:$0xff]
    %v879 = vld [vmem:[#allocation8 + $0x1280] sm:$0xff]
    %v880 = vld [vmem:[#allocation8 + $0x1288] sm:$0xff]
    %v881 = vld [vmem:[#allocation8 + $0x1290] sm:$0xff]
    %v882 = vld [vmem:[#allocation8 + $0x1298] sm:$0xff]
    %v883 = vld [vmem:[#allocation8 + $0x12a0] sm:$0xff]
    %v884 = vld [vmem:[#allocation8 + $0x12a8] sm:$0xff]
    %v885 = vld [vmem:[#allocation8 + $0x12b0] sm:$0xff]
    %v886 = vld [vmem:[#allocation8 + $0x12b8] sm:$0xff]
    %v887 = vld [vmem:[#allocation8 + $0x12c0] sm:$0xff]
    %v888 = vld [vmem:[#allocation8 + $0x12c8] sm:$0xff]
    %v889 = vld [vmem:[#allocation8 + $0x12d0] sm:$0xff]
    %v890 = vld [vmem:[#allocation8 + $0x12d8] sm:$0xff]
    %v891 = vld [vmem:[#allocation8 + $0x12e0] sm:$0xff]
    %v892 = vld [vmem:[#allocation8 + $0x12e8] sm:$0xff]
    %v893 = vld [vmem:[#allocation8 + $0x12f0] sm:$0xff]
    %v894 = vld [vmem:[#allocation8 + $0x12f8] sm:$0xff]
    %v895 = vld [vmem:[#allocation8 + $0x1300] sm:$0xff]
    %v896 = vld [vmem:[#allocation8 + $0x1308] sm:$0xff]
    %v897 = vld [vmem:[#allocation8 + $0x1310] sm:$0xff]
    %v898 = vld [vmem:[#allocation8 + $0x1318] sm:$0xff]
    %v899 = vld [vmem:[#allocation8 + $0x1320] sm:$0xff]
    %v900 = vld [vmem:[#allocation8 + $0x1328] sm:$0xff]
    %v901 = vld [vmem:[#allocation8 + $0x1330] sm:$0xff]
    %v902 = vld [vmem:[#allocation8 + $0x1338] sm:$0xff]
    %v903 = vld [vmem:[#allocation8 + $0x1340] sm:$0xff]
    %v904 = vld [vmem:[#allocation8 + $0x1348] sm:$0xff]
    %v905 = vld [vmem:[#allocation8 + $0x1350] sm:$0xff]
    %v906 = vld [vmem:[#allocation8 + $0x1358] sm:$0xff]
    %v907 = vld [vmem:[#allocation8 + $0x1360] sm:$0xff]
    %v908 = vld [vmem:[#allocation8 + $0x1368] sm:$0xff]
    %v909 = vld [vmem:[#allocation8 + $0x1370] sm:$0xff]
    %v910 = vld [vmem:[#allocation8 + $0x1378] sm:$0xff]
    %v911 = vld [vmem:[#allocation8 + $0x1380] sm:$0xff]
    %v912 = vld [vmem:[#allocation8 + $0x1388] sm:$0xff]
    %v913 = vld [vmem:[#allocation8 + $0x1390] sm:$0xff]
    %v914 = vld [vmem:[#allocation8 + $0x1398] sm:$0xff]
    %v915 = vld [vmem:[#allocation8 + $0x13a0] sm:$0xff]
    %v916 = vld [vmem:[#allocation8 + $0x13a8] sm:$0xff]
    %v917 = vld [vmem:[#allocation8 + $0x13b0] sm:$0xff]
    %v918 = vld [vmem:[#allocation8 + $0x13b8] sm:$0xff]
    %v919 = vld [vmem:[#allocation8 + $0x13c0] sm:$0xff]
    %v920 = vld [vmem:[#allocation8 + $0x13c8] sm:$0xff]
    %v921 = vld [vmem:[#allocation8 + $0x13d0] sm:$0xff]
    %v922 = vld [vmem:[#allocation8 + $0x13d8] sm:$0xff]
    %v923 = vld [vmem:[#allocation8 + $0x13e0] sm:$0xff]
    %v924 = vld [vmem:[#allocation8 + $0x13e8] sm:$0xff]
    %v925 = vld [vmem:[#allocation8 + $0x13f0] sm:$0xff]
    %v926 = vld [vmem:[#allocation8 + $0x13f8] sm:$0xff]
    %v927 = vld [vmem:[#allocation8 + $0x1400] sm:$0xff]
    %v928 = vld [vmem:[#allocation8 + $0x1408] sm:$0xff]
    %v929 = vld [vmem:[#allocation8 + $0x1410] sm:$0xff]
    %v930 = vld [vmem:[#allocation8 + $0x1418] sm:$0xff]
    %v931 = vld [vmem:[#allocation8 + $0x1420] sm:$0xff]
    %v932 = vld [vmem:[#allocation8 + $0x1428] sm:$0xff]
    %v933 = vld [vmem:[#allocation8 + $0x1430] sm:$0xff]
    %v934 = vld [vmem:[#allocation8 + $0x1438] sm:$0xff]
    %v935 = vld [vmem:[#allocation8 + $0x1440] sm:$0xff]
    %v936 = vld [vmem:[#allocation8 + $0x1448] sm:$0xff]
    %v937 = vld [vmem:[#allocation8 + $0x1450] sm:$0xff]
    %v938 = vld [vmem:[#allocation8 + $0x1458] sm:$0xff]
    %v939 = vld [vmem:[#allocation8 + $0x1460] sm:$0xff]
    %v940 = vld [vmem:[#allocation8 + $0x1468] sm:$0xff]
    %v941 = vld [vmem:[#allocation8 + $0x1470] sm:$0xff]
    %v942 = vld [vmem:[#allocation8 + $0x1478] sm:$0xff]
    %v943 = vld [vmem:[#allocation8 + $0x1480] sm:$0xff]
    %v944 = vld [vmem:[#allocation8 + $0x1488] sm:$0xff]
    %v945 = vld [vmem:[#allocation8 + $0x1490] sm:$0xff]
    %v946 = vld [vmem:[#allocation8 + $0x1498] sm:$0xff]
    %v947 = vld [vmem:[#allocation8 + $0x14a0] sm:$0xff]
    %v948 = vld [vmem:[#allocation8 + $0x14a8] sm:$0xff]
    %v949 = vld [vmem:[#allocation8 + $0x14b0] sm:$0xff]
    %v950 = vld [vmem:[#allocation8 + $0x14b8] sm:$0xff]
    %v951 = vld [vmem:[#allocation8 + $0x14c0] sm:$0xff]
    %v952 = vld [vmem:[#allocation8 + $0x14c8] sm:$0xff]
    %v953 = vld [vmem:[#allocation8 + $0x14d0] sm:$0xff]
    %v954 = vld [vmem:[#allocation8 + $0x14d8] sm:$0xff]
    %v955 = vld [vmem:[#allocation8 + $0x14e0] sm:$0xff]
    %v956 = vld [vmem:[#allocation8 + $0x14e8] sm:$0xff]
    %v957 = vld [vmem:[#allocation8 + $0x14f0] sm:$0xff]
    %v958 = vld [vmem:[#allocation8 + $0x14f8] sm:$0xff]
    %v959 = vld [vmem:[#allocation8 + $0x1500] sm:$0xff]
    %v960 = vld [vmem:[#allocation8 + $0x1508] sm:$0xff]
    %v961 = vld [vmem:[#allocation8 + $0x1510] sm:$0xff]
    %v962 = vld [vmem:[#allocation8 + $0x1518] sm:$0xff]
    %v963 = vld [vmem:[#allocation8 + $0x1520] sm:$0xff]
    %v964 = vld [vmem:[#allocation8 + $0x1528] sm:$0xff]
    %v965 = vld [vmem:[#allocation8 + $0x1530] sm:$0xff]
    %v966 = vld [vmem:[#allocation8 + $0x1538] sm:$0xff]
    %v967 = vld [vmem:[#allocation8 + $0x1540] sm:$0xff]
    %v968 = vld [vmem:[#allocation8 + $0x1548] sm:$0xff]
    %v969 = vld [vmem:[#allocation8 + $0x1550] sm:$0xff]
    %v970 = vld [vmem:[#allocation8 + $0x1558] sm:$0xff]
    %v971 = vld [vmem:[#allocation8 + $0x1560] sm:$0xff]
    %v972 = vld [vmem:[#allocation8 + $0x1568] sm:$0xff]
    %v973 = vld [vmem:[#allocation8 + $0x1570] sm:$0xff]
    %v974 = vld [vmem:[#allocation8 + $0x1578] sm:$0xff]
    %v975 = vld [vmem:[#allocation8 + $0x1580] sm:$0xff]
    %v976 = vld [vmem:[#allocation8 + $0x1588] sm:$0xff]
    %v977 = vld [vmem:[#allocation8 + $0x1590] sm:$0xff]
    %v978 = vld [vmem:[#allocation8 + $0x1598] sm:$0xff]
    %v979 = vld [vmem:[#allocation8 + $0x15a0] sm:$0xff]
    %v980 = vld [vmem:[#allocation8 + $0x15a8] sm:$0xff]
    %v981 = vld [vmem:[#allocation8 + $0x15b0] sm:$0xff]
    %v982 = vld [vmem:[#allocation8 + $0x15b8] sm:$0xff]
    %v983 = vld [vmem:[#allocation8 + $0x15c0] sm:$0xff]
    %v984 = vld [vmem:[#allocation8 + $0x15c8] sm:$0xff]
    %v985 = vld [vmem:[#allocation8 + $0x15d0] sm:$0xff]
    %v986 = vld [vmem:[#allocation8 + $0x15d8] sm:$0xff]
    %v987 = vld [vmem:[#allocation8 + $0x15e0] sm:$0xff]
    %v988 = vld [vmem:[#allocation8 + $0x15e8] sm:$0xff]
    %v989 = vld [vmem:[#allocation8 + $0x15f0] sm:$0xff]
    %v990 = vld [vmem:[#allocation8 + $0x15f8] sm:$0xff]
    %v991 = vld [vmem:[#allocation8 + $0x1600] sm:$0xff]
    %v992 = vld [vmem:[#allocation8 + $0x1608] sm:$0xff]
    %v993 = vld [vmem:[#allocation8 + $0x1610] sm:$0xff]
    %v994 = vld [vmem:[#allocation8 + $0x1618] sm:$0xff]
    %v995 = vld [vmem:[#allocation8 + $0x1620] sm:$0xff]
    %v996 = vld [vmem:[#allocation8 + $0x1628] sm:$0xff]
    %v997 = vld [vmem:[#allocation8 + $0x1630] sm:$0xff]
    %v998 = vld [vmem:[#allocation8 + $0x1638] sm:$0xff]
    %v999 = vld [vmem:[#allocation8 + $0x1640] sm:$0xff]
    %v1000 = vld [vmem:[#allocation8 + $0x1648] sm:$0xff]
    %v1001 = vld [vmem:[#allocation8 + $0x1650] sm:$0xff]
    %v1002 = vld [vmem:[#allocation8 + $0x1658] sm:$0xff]
    %v1003 = vld [vmem:[#allocation8 + $0x1660] sm:$0xff]
    %v1004 = vld [vmem:[#allocation8 + $0x1668] sm:$0xff]
    %v1005 = vld [vmem:[#allocation8 + $0x1670] sm:$0xff]
    %v1006 = vld [vmem:[#allocation8 + $0x1678] sm:$0xff]
    %v1007 = vld [vmem:[#allocation8 + $0x1680] sm:$0xff]
    %v1008 = vld [vmem:[#allocation8 + $0x1688] sm:$0xff]
    %v1009 = vld [vmem:[#allocation8 + $0x1690] sm:$0xff]
    %v1010 = vld [vmem:[#allocation8 + $0x1698] sm:$0xff]
    %v1011 = vld [vmem:[#allocation8 + $0x16a0] sm:$0xff]
    %v1012 = vld [vmem:[#allocation8 + $0x16a8] sm:$0xff]
    %v1013 = vld [vmem:[#allocation8 + $0x16b0] sm:$0xff]
    %v1014 = vld [vmem:[#allocation8 + $0x16b8] sm:$0xff]
    %v1015 = vld [vmem:[#allocation8 + $0x16c0] sm:$0xff]
    %v1016 = vld [vmem:[#allocation8 + $0x16c8] sm:$0xff]
    %v1017 = vld [vmem:[#allocation8 + $0x16d0] sm:$0xff]
    %v1018 = vld [vmem:[#allocation8 + $0x16d8] sm:$0xff]
    %v1019 = vld [vmem:[#allocation8 + $0x16e0] sm:$0xff]
    %v1020 = vld [vmem:[#allocation8 + $0x16e8] sm:$0xff]
    %v1021 = vld [vmem:[#allocation8 + $0x16f0] sm:$0xff]
    %v1022 = vld [vmem:[#allocation8 + $0x16f8] sm:$0xff]
    %v1023 = vld [vmem:[#allocation8 + $0x1700] sm:$0xff]
    %v1024 = vld [vmem:[#allocation8 + $0x1708] sm:$0xff]
    %v1025 = vld [vmem:[#allocation8 + $0x1710] sm:$0xff]
    %v1026 = vld [vmem:[#allocation8 + $0x1718] sm:$0xff]
    %v1027 = vld [vmem:[#allocation8 + $0x1720] sm:$0xff]
    %v1028 = vld [vmem:[#allocation8 + $0x1728] sm:$0xff]
    %v1029 = vld [vmem:[#allocation8 + $0x1730] sm:$0xff]
    %v1030 = vld [vmem:[#allocation8 + $0x1738] sm:$0xff]
    %v1031 = vld [vmem:[#allocation8 + $0x1740] sm:$0xff]
    %v1032 = vld [vmem:[#allocation8 + $0x1748] sm:$0xff]
    %v1033 = vld [vmem:[#allocation8 + $0x1750] sm:$0xff]
    %v1034 = vld [vmem:[#allocation8 + $0x1758] sm:$0xff]
    %v1035 = vld [vmem:[#allocation8 + $0x1760] sm:$0xff]
    %v1036 = vld [vmem:[#allocation8 + $0x1768] sm:$0xff]
    %v1037 = vld [vmem:[#allocation8 + $0x1770] sm:$0xff]
    %v1038 = vld [vmem:[#allocation8 + $0x1778] sm:$0xff]
    %v1039 = vld [vmem:[#allocation8 + $0x1780] sm:$0xff]
    %v1040 = vld [vmem:[#allocation8 + $0x1788] sm:$0xff]
    %v1041 = vld [vmem:[#allocation8 + $0x1790] sm:$0xff]
    %v1042 = vld [vmem:[#allocation8 + $0x1798] sm:$0xff]
    %v1043 = vld [vmem:[#allocation8 + $0x17a0] sm:$0xff]
    %v1044 = vld [vmem:[#allocation8 + $0x17a8] sm:$0xff]
    %v1045 = vld [vmem:[#allocation8 + $0x17b0] sm:$0xff]
    %v1046 = vld [vmem:[#allocation8 + $0x17b8] sm:$0xff]
    %v1047 = vld [vmem:[#allocation8 + $0x17c0] sm:$0xff]
    %v1048 = vld [vmem:[#allocation8 + $0x17c8] sm:$0xff]
    %v1049 = vld [vmem:[#allocation8 + $0x17d0] sm:$0xff]
    %v1050 = vld [vmem:[#allocation8 + $0x17d8] sm:$0xff]
    %v1051 = vld [vmem:[#allocation8 + $0x17e0] sm:$0xff]
    %v1052 = vld [vmem:[#allocation8 + $0x17e8] sm:$0xff]
    %v1053 = vld [vmem:[#allocation8 + $0x17f0] sm:$0xff]
    %v1054 = vld [vmem:[#allocation8 + $0x17f8] sm:$0xff]
    %v1055 = vld [vmem:[#allocation8 + $0x1800] sm:$0xff]
    %v1056 = vld [vmem:[#allocation8 + $0x1808] sm:$0xff]
    %v1057 = vld [vmem:[#allocation8 + $0x1810] sm:$0xff]
    %v1058 = vld [vmem:[#allocation8 + $0x1818] sm:$0xff]
    %v1059 = vld [vmem:[#allocation8 + $0x1820] sm:$0xff]
    %v1060 = vld [vmem:[#allocation8 + $0x1828] sm:$0xff]
    %v1061 = vld [vmem:[#allocation8 + $0x1830] sm:$0xff]
    %v1062 = vld [vmem:[#allocation8 + $0x1838] sm:$0xff]
    %v1063 = vld [vmem:[#allocation8 + $0x1840] sm:$0xff]
    %v1064 = vld [vmem:[#allocation8 + $0x1848] sm:$0xff]
    %v1065 = vld [vmem:[#allocation8 + $0x1850] sm:$0xff]
    %v1066 = vld [vmem:[#allocation8 + $0x1858] sm:$0xff]
    %v1067 = vld [vmem:[#allocation8 + $0x1860] sm:$0xff]
    %v1068 = vld [vmem:[#allocation8 + $0x1868] sm:$0xff]
    %v1069 = vld [vmem:[#allocation8 + $0x1870] sm:$0xff]
    %v1070 = vld [vmem:[#allocation8 + $0x1878] sm:$0xff]
    %v1071 = vld [vmem:[#allocation8 + $0x1880] sm:$0xff]
    %v1072 = vld [vmem:[#allocation8 + $0x1888] sm:$0xff]
    %v1073 = vld [vmem:[#allocation8 + $0x1890] sm:$0xff]
    %v1074 = vld [vmem:[#allocation8 + $0x1898] sm:$0xff]
    %v1075 = vld [vmem:[#allocation8 + $0x18a0] sm:$0xff]
    %v1076 = vld [vmem:[#allocation8 + $0x18a8] sm:$0xff]
    %v1077 = vld [vmem:[#allocation8 + $0x18b0] sm:$0xff]
    %v1078 = vld [vmem:[#allocation8 + $0x18b8] sm:$0xff]
    %v1079 = vld [vmem:[#allocation8 + $0x18c0] sm:$0xff]
    %v1080 = vld [vmem:[#allocation8 + $0x18c8] sm:$0xff]
    %v1081 = vld [vmem:[#allocation8 + $0x18d0] sm:$0xff]
    %v1082 = vld [vmem:[#allocation8 + $0x18d8] sm:$0xff]
    %v1083 = vld [vmem:[#allocation8 + $0x18e0] sm:$0xff]
    %v1084 = vld [vmem:[#allocation8 + $0x18e8] sm:$0xff]
    %v1085 = vld [vmem:[#allocation8 + $0x18f0] sm:$0xff]
    %v1086 = vld [vmem:[#allocation8 + $0x18f8] sm:$0xff]
    %v1087 = vld [vmem:[#allocation8 + $0x1900] sm:$0xff]
    %v1088 = vld [vmem:[#allocation8 + $0x1908] sm:$0xff]
    %v1089 = vld [vmem:[#allocation8 + $0x1910] sm:$0xff]
    %v1090 = vld [vmem:[#allocation8 + $0x1918] sm:$0xff]
    %v1091 = vld [vmem:[#allocation8 + $0x1920] sm:$0xff]
    %v1092 = vld [vmem:[#allocation8 + $0x1928] sm:$0xff]
    %v1093 = vld [vmem:[#allocation8 + $0x1930] sm:$0xff]
    %v1094 = vld [vmem:[#allocation8 + $0x1938] sm:$0xff]
    %v1095 = vld [vmem:[#allocation8 + $0x1940] sm:$0xff]
    %v1096 = vld [vmem:[#allocation8 + $0x1948] sm:$0xff]
    %v1097 = vld [vmem:[#allocation8 + $0x1950] sm:$0xff]
    %v1098 = vld [vmem:[#allocation8 + $0x1958] sm:$0xff]
    %v1099 = vld [vmem:[#allocation8 + $0x1960] sm:$0xff]
    %v1100 = vld [vmem:[#allocation8 + $0x1968] sm:$0xff]
    %v1101 = vld [vmem:[#allocation8 + $0x1970] sm:$0xff]
    %v1102 = vld [vmem:[#allocation8 + $0x1978] sm:$0xff]
    %v1103 = vld [vmem:[#allocation8 + $0x1980] sm:$0xff]
    %v1104 = vld [vmem:[#allocation8 + $0x1988] sm:$0xff]
    %v1105 = vld [vmem:[#allocation8 + $0x1990] sm:$0xff]
    %v1106 = vld [vmem:[#allocation8 + $0x1998] sm:$0xff]
    %v1107 = vld [vmem:[#allocation8 + $0x19a0] sm:$0xff]
    %v1108 = vld [vmem:[#allocation8 + $0x19a8] sm:$0xff]
    %v1109 = vld [vmem:[#allocation8 + $0x19b0] sm:$0xff]
    %v1110 = vld [vmem:[#allocation8 + $0x19b8] sm:$0xff]
    %v1111 = vld [vmem:[#allocation8 + $0x19c0] sm:$0xff]
    %v1112 = vld [vmem:[#allocation8 + $0x19c8] sm:$0xff]
    %v1113 = vld [vmem:[#allocation8 + $0x19d0] sm:$0xff]
    %v1114 = vld [vmem:[#allocation8 + $0x19d8] sm:$0xff]
    %v1115 = vld [vmem:[#allocation8 + $0x19e0] sm:$0xff]
    %v1116 = vld [vmem:[#allocation8 + $0x19e8] sm:$0xff]
    %v1117 = vld [vmem:[#allocation8 + $0x19f0] sm:$0xff]
    %v1118 = vld [vmem:[#allocation8 + $0x19f8] sm:$0xff]
    %v1119 = vld [vmem:[#allocation8 + $0x1a00] sm:$0xff]
    %v1120 = vld [vmem:[#allocation8 + $0x1a08] sm:$0xff]
    %v1121 = vld [vmem:[#allocation8 + $0x1a10] sm:$0xff]
    %v1122 = vld [vmem:[#allocation8 + $0x1a18] sm:$0xff]
    %v1123 = vld [vmem:[#allocation8 + $0x1a20] sm:$0xff]
    %v1124 = vld [vmem:[#allocation8 + $0x1a28] sm:$0xff]
    %v1125 = vld [vmem:[#allocation8 + $0x1a30] sm:$0xff]
    %v1126 = vld [vmem:[#allocation8 + $0x1a38] sm:$0xff]
    %v1127 = vld [vmem:[#allocation8 + $0x1a40] sm:$0xff]
    %v1128 = vld [vmem:[#allocation8 + $0x1a48] sm:$0xff]
    %v1129 = vld [vmem:[#allocation8 + $0x1a50] sm:$0xff]
    %v1130 = vld [vmem:[#allocation8 + $0x1a58] sm:$0xff]
    %v1131 = vld [vmem:[#allocation8 + $0x1a60] sm:$0xff]
    %v1132 = vld [vmem:[#allocation8 + $0x1a68] sm:$0xff]
    %v1133 = vld [vmem:[#allocation8 + $0x1a70] sm:$0xff]
    %v1134 = vld [vmem:[#allocation8 + $0x1a78] sm:$0xff]
    %v1135 = vld [vmem:[#allocation8 + $0x1a80] sm:$0xff]
    %v1136 = vld [vmem:[#allocation8 + $0x1a88] sm:$0xff]
    %v1137 = vld [vmem:[#allocation8 + $0x1a90] sm:$0xff]
    %v1138 = vld [vmem:[#allocation8 + $0x1a98] sm:$0xff]
    %v1139 = vld [vmem:[#allocation8 + $0x1aa0] sm:$0xff]
    %v1140 = vld [vmem:[#allocation8 + $0x1aa8] sm:$0xff]
    %v1141 = vld [vmem:[#allocation8 + $0x1ab0] sm:$0xff]
    %v1142 = vld [vmem:[#allocation8 + $0x1ab8] sm:$0xff]
    %v1143 = vld [vmem:[#allocation8 + $0x1ac0] sm:$0xff]
    %v1144 = vld [vmem:[#allocation8 + $0x1ac8] sm:$0xff]
    %v1145 = vld [vmem:[#allocation8 + $0x1ad0] sm:$0xff]
    %v1146 = vld [vmem:[#allocation8 + $0x1ad8] sm:$0xff]
    %v1147 = vld [vmem:[#allocation8 + $0x1ae0] sm:$0xff]
    %v1148 = vld [vmem:[#allocation8 + $0x1ae8] sm:$0xff]
    %v1149 = vld [vmem:[#allocation8 + $0x1af0] sm:$0xff]
    %v1150 = vld [vmem:[#allocation8 + $0x1af8] sm:$0xff]
    %v1151 = vld [vmem:[#allocation8 + $0x1b00] sm:$0xff]
    %v1152 = vld [vmem:[#allocation8 + $0x1b08] sm:$0xff]
    %v1153 = vld [vmem:[#allocation8 + $0x1b10] sm:$0xff]
    %v1154 = vld [vmem:[#allocation8 + $0x1b18] sm:$0xff]
    %v1155 = vld [vmem:[#allocation8 + $0x1b20] sm:$0xff]
    %v1156 = vld [vmem:[#allocation8 + $0x1b28] sm:$0xff]
    %v1157 = vld [vmem:[#allocation8 + $0x1b30] sm:$0xff]
    %v1158 = vld [vmem:[#allocation8 + $0x1b38] sm:$0xff]
    %v1159 = vld [vmem:[#allocation8 + $0x1b40] sm:$0xff]
    %v1160 = vld [vmem:[#allocation8 + $0x1b48] sm:$0xff]
    %v1161 = vld [vmem:[#allocation8 + $0x1b50] sm:$0xff]
    %v1162 = vld [vmem:[#allocation8 + $0x1b58] sm:$0xff]
    %v1163 = vld [vmem:[#allocation8 + $0x1b60] sm:$0xff]
    %v1164 = vld [vmem:[#allocation8 + $0x1b68] sm:$0xff]
    %v1165 = vld [vmem:[#allocation8 + $0x1b70] sm:$0xff]
    %v1166 = vld [vmem:[#allocation8 + $0x1b78] sm:$0xff]
    %v1167 = vld [vmem:[#allocation8 + $0x1b80] sm:$0xff]
    %v1168 = vld [vmem:[#allocation8 + $0x1b88] sm:$0xff]
    %v1169 = vld [vmem:[#allocation8 + $0x1b90] sm:$0xff]
    %v1170 = vld [vmem:[#allocation8 + $0x1b98] sm:$0xff]
    %v1171 = vld [vmem:[#allocation8 + $0x1ba0] sm:$0xff]
    %v1172 = vld [vmem:[#allocation8 + $0x1ba8] sm:$0xff]
    %v1173 = vld [vmem:[#allocation8 + $0x1bb0] sm:$0xff]
    %v1174 = vld [vmem:[#allocation8 + $0x1bb8] sm:$0xff]
    %v1175 = vld [vmem:[#allocation8 + $0x1bc0] sm:$0xff]
    %v1176 = vld [vmem:[#allocation8 + $0x1bc8] sm:$0xff]
    %v1177 = vld [vmem:[#allocation8 + $0x1bd0] sm:$0xff]
    %v1178 = vld [vmem:[#allocation8 + $0x1bd8] sm:$0xff]
    %v1179 = vld [vmem:[#allocation8 + $0x1be0] sm:$0xff]
    %v1180 = vld [vmem:[#allocation8 + $0x1be8] sm:$0xff]
    %v1181 = vld [vmem:[#allocation8 + $0x1bf0] sm:$0xff]
    %v1182 = vld [vmem:[#allocation8 + $0x1bf8] sm:$0xff]
    %v1183 = vld [vmem:[#allocation8 + $0x1c00] sm:$0xff]
    %v1184 = vld [vmem:[#allocation8 + $0x1c08] sm:$0xff]
    %v1185 = vld [vmem:[#allocation8 + $0x1c10] sm:$0xff]
    %v1186 = vld [vmem:[#allocation8 + $0x1c18] sm:$0xff]
    %v1187 = vld [vmem:[#allocation8 + $0x1c20] sm:$0xff]
    %v1188 = vld [vmem:[#allocation8 + $0x1c28] sm:$0xff]
    %v1189 = vld [vmem:[#allocation8 + $0x1c30] sm:$0xff]
    %v1190 = vld [vmem:[#allocation8 + $0x1c38] sm:$0xff]
    %v1191 = vld [vmem:[#allocation8 + $0x1c40] sm:$0xff]
    %v1192 = vld [vmem:[#allocation8 + $0x1c48] sm:$0xff]
    %v1193 = vld [vmem:[#allocation8 + $0x1c50] sm:$0xff]
    %v1194 = vld [vmem:[#allocation8 + $0x1c58] sm:$0xff]
    %v1195 = vld [vmem:[#allocation8 + $0x1c60] sm:$0xff]
    %v1196 = vld [vmem:[#allocation8 + $0x1c68] sm:$0xff]
    %v1197 = vld [vmem:[#allocation8 + $0x1c70] sm:$0xff]
    %v1198 = vld [vmem:[#allocation8 + $0x1c78] sm:$0xff]
    %v1199 = vld [vmem:[#allocation8 + $0x1c80] sm:$0xff]
    %v1200 = vld [vmem:[#allocation8 + $0x1c88] sm:$0xff]
    %v1201 = vld [vmem:[#allocation8 + $0x1c90] sm:$0xff]
    %v1202 = vld [vmem:[#allocation8 + $0x1c98] sm:$0xff]
    %v1203 = vld [vmem:[#allocation8 + $0x1ca0] sm:$0xff]
    %v1204 = vld [vmem:[#allocation8 + $0x1ca8] sm:$0xff]
    %v1205 = vld [vmem:[#allocation8 + $0x1cb0] sm:$0xff]
    %v1206 = vld [vmem:[#allocation8 + $0x1cb8] sm:$0xff]
    %v1207 = vld [vmem:[#allocation8 + $0x1cc0] sm:$0xff]
    %v1208 = vld [vmem:[#allocation8 + $0x1cc8] sm:$0xff]
    %v1209 = vld [vmem:[#allocation8 + $0x1cd0] sm:$0xff]
    %v1210 = vld [vmem:[#allocation8 + $0x1cd8] sm:$0xff]
    %v1211 = vld [vmem:[#allocation8 + $0x1ce0] sm:$0xff]
    %v1212 = vld [vmem:[#allocation8 + $0x1ce8] sm:$0xff]
    %v1213 = vld [vmem:[#allocation8 + $0x1cf0] sm:$0xff]
    %v1214 = vld [vmem:[#allocation8 + $0x1cf8] sm:$0xff]
    %v1215 = vld [vmem:[#allocation8 + $0x1d00] sm:$0xff]
    %v1216 = vld [vmem:[#allocation8 + $0x1d08] sm:$0xff]
    %v1217 = vld [vmem:[#allocation8 + $0x1d10] sm:$0xff]
    %v1218 = vld [vmem:[#allocation8 + $0x1d18] sm:$0xff]
    %v1219 = vld [vmem:[#allocation8 + $0x1d20] sm:$0xff]
    %v1220 = vld [vmem:[#allocation8 + $0x1d28] sm:$0xff]
    %v1221 = vld [vmem:[#allocation8 + $0x1d30] sm:$0xff]
    %v1222 = vld [vmem:[#allocation8 + $0x1d38] sm:$0xff]
    %v1223 = vld [vmem:[#allocation8 + $0x1d40] sm:$0xff]
    %v1224 = vld [vmem:[#allocation8 + $0x1d48] sm:$0xff]
    %v1225 = vld [vmem:[#allocation8 + $0x1d50] sm:$0xff]
    %v1226 = vld [vmem:[#allocation8 + $0x1d58] sm:$0xff]
    %v1227 = vld [vmem:[#allocation8 + $0x1d60] sm:$0xff]
    %v1228 = vld [vmem:[#allocation8 + $0x1d68] sm:$0xff]
    %v1229 = vld [vmem:[#allocation8 + $0x1d70] sm:$0xff]
    %v1230 = vld [vmem:[#allocation8 + $0x1d78] sm:$0xff]
    %v1231 = vld [vmem:[#allocation8 + $0x1d80] sm:$0xff]
    %v1232 = vld [vmem:[#allocation8 + $0x1d88] sm:$0xff]
    %v1233 = vld [vmem:[#allocation8 + $0x1d90] sm:$0xff]
    %v1234 = vld [vmem:[#allocation8 + $0x1d98] sm:$0xff]
    %v1235 = vld [vmem:[#allocation8 + $0x1da0] sm:$0xff]
    %v1236 = vld [vmem:[#allocation8 + $0x1da8] sm:$0xff]
    %v1237 = vld [vmem:[#allocation8 + $0x1db0] sm:$0xff]
    %v1238 = vld [vmem:[#allocation8 + $0x1db8] sm:$0xff]
    %v1239 = vld [vmem:[#allocation8 + $0x1dc0] sm:$0xff]
    %v1240 = vld [vmem:[#allocation8 + $0x1dc8] sm:$0xff]
    %v1241 = vld [vmem:[#allocation8 + $0x1dd0] sm:$0xff]
    %v1242 = vld [vmem:[#allocation8 + $0x1dd8] sm:$0xff]
    %v1243 = vld [vmem:[#allocation8 + $0x1de0] sm:$0xff]
    %v1244 = vld [vmem:[#allocation8 + $0x1de8] sm:$0xff]
    %v1245 = vld [vmem:[#allocation8 + $0x1df0] sm:$0xff]
    %v1246 = vld [vmem:[#allocation8 + $0x1df8] sm:$0xff]
    %v1247 = vld [vmem:[#allocation8 + $0x1e00] sm:$0xff]
    %v1248 = vld [vmem:[#allocation8 + $0x1e08] sm:$0xff]
    %v1249 = vld [vmem:[#allocation8 + $0x1e10] sm:$0xff]
    %v1250 = vld [vmem:[#allocation8 + $0x1e18] sm:$0xff]
    %v1251 = vld [vmem:[#allocation8 + $0x1e20] sm:$0xff]
    %v1252 = vld [vmem:[#allocation8 + $0x1e28] sm:$0xff]
    %v1253 = vld [vmem:[#allocation8 + $0x1e30] sm:$0xff]
    %v1254 = vld [vmem:[#allocation8 + $0x1e38] sm:$0xff]
    %v1255 = vld [vmem:[#allocation8 + $0x1e40] sm:$0xff]
    %v1256 = vld [vmem:[#allocation8 + $0x1e48] sm:$0xff]
    %v1257 = vld [vmem:[#allocation8 + $0x1e50] sm:$0xff]
    %v1258 = vld [vmem:[#allocation8 + $0x1e58] sm:$0xff]
    %v1259 = vld [vmem:[#allocation8 + $0x1e60] sm:$0xff]
    %v1260 = vld [vmem:[#allocation8 + $0x1e68] sm:$0xff]
    %v1261 = vld [vmem:[#allocation8 + $0x1e70] sm:$0xff]
    %v1262 = vld [vmem:[#allocation8 + $0x1e78] sm:$0xff]
    %v1263 = vld [vmem:[#allocation8 + $0x1e80] sm:$0xff]
    %v1264 = vld [vmem:[#allocation8 + $0x1e88] sm:$0xff]
    %v1265 = vld [vmem:[#allocation8 + $0x1e90] sm:$0xff]
    %v1266 = vld [vmem:[#allocation8 + $0x1e98] sm:$0xff]
    %v1267 = vld [vmem:[#allocation8 + $0x1ea0] sm:$0xff]
    %v1268 = vld [vmem:[#allocation8 + $0x1ea8] sm:$0xff]
    %v1269 = vld [vmem:[#allocation8 + $0x1eb0] sm:$0xff]
    %v1270 = vld [vmem:[#allocation8 + $0x1eb8] sm:$0xff]
    %v1271 = vld [vmem:[#allocation8 + $0x1ec0] sm:$0xff]
    %v1272 = vld [vmem:[#allocation8 + $0x1ec8] sm:$0xff]
    %v1273 = vld [vmem:[#allocation8 + $0x1ed0] sm:$0xff]
    %v1274 = vld [vmem:[#allocation8 + $0x1ed8] sm:$0xff]
    %v1275 = vld [vmem:[#allocation8 + $0x1ee0] sm:$0xff]
    %v1276 = vld [vmem:[#allocation8 + $0x1ee8] sm:$0xff]
    %v1277 = vld [vmem:[#allocation8 + $0x1ef0] sm:$0xff]
    %v1278 = vld [vmem:[#allocation8 + $0x1ef8] sm:$0xff]
    %v1279 = vld [vmem:[#allocation8 + $0x1f00] sm:$0xff]
    %v1280 = vld [vmem:[#allocation8 + $0x1f08] sm:$0xff]
    %v1281 = vld [vmem:[#allocation8 + $0x1f10] sm:$0xff]
    %v1282 = vld [vmem:[#allocation8 + $0x1f18] sm:$0xff]
    %v1283 = vld [vmem:[#allocation8 + $0x1f20] sm:$0xff]
    %v1284 = vld [vmem:[#allocation8 + $0x1f28] sm:$0xff]
    %v1285 = vld [vmem:[#allocation8 + $0x1f30] sm:$0xff]
    %v1286 = vld [vmem:[#allocation8 + $0x1f38] sm:$0xff]
    %v1287 = vld [vmem:[#allocation8 + $0x1f40] sm:$0xff]
    %v1288 = vld [vmem:[#allocation8 + $0x1f48] sm:$0xff]
    %v1289 = vld [vmem:[#allocation8 + $0x1f50] sm:$0xff]
    %v1290 = vld [vmem:[#allocation8 + $0x1f58] sm:$0xff]
    %v1291 = vld [vmem:[#allocation8 + $0x1f60] sm:$0xff]
    %v1292 = vld [vmem:[#allocation8 + $0x1f68] sm:$0xff]
    %v1293 = vld [vmem:[#allocation8 + $0x1f70] sm:$0xff]
    %v1294 = vld [vmem:[#allocation8 + $0x1f78] sm:$0xff]
    %v1295 = vld [vmem:[#allocation8 + $0x1f80] sm:$0xff]
    %v1296 = vld [vmem:[#allocation8 + $0x1f88] sm:$0xff]
    %v1297 = vld [vmem:[#allocation8 + $0x1f90] sm:$0xff]
    %v1298 = vld [vmem:[#allocation8 + $0x1f98] sm:$0xff]
    %v1299 = vld [vmem:[#allocation8 + $0x1fa0] sm:$0xff]
    %v1300 = vld [vmem:[#allocation8 + $0x1fa8] sm:$0xff]
    %v1301 = vld [vmem:[#allocation8 + $0x1fb0] sm:$0xff]
    %v1302 = vld [vmem:[#allocation8 + $0x1fb8] sm:$0xff]
    %v1303 = vld [vmem:[#allocation8 + $0x1fc0] sm:$0xff]
    %v1304 = vld [vmem:[#allocation8 + $0x1fc8] sm:$0xff]
    %v1305 = vld [vmem:[#allocation8 + $0x1fd0] sm:$0xff]
    %v1306 = vld [vmem:[#allocation8 + $0x1fd8] sm:$0xff]
    %v1307 = vld [vmem:[#allocation8 + $0x1fe0] sm:$0xff]
    %v1308 = vld [vmem:[#allocation8 + $0x1fe8] sm:$0xff]
    %v1309 = vld [vmem:[#allocation8 + $0x1ff0] sm:$0xff]
    %v1310 = vld [vmem:[#allocation8 + $0x1ff8] sm:$0xff]
    %v1311 = vld [vmem:[#allocation10] sm:$0xff]
    %v1313 = vperm.slane %v1311, 0
    %v1314 = vperm.slane %v1311, 1
    %v1315 = vperm.slane %v1311, 2
    %v1316 = vperm.slane %v1311, 3
    %v1317 = vperm.slane %v1311, 4
    %v1318 = vperm.slane %v1311, 5
    %v1319 = vperm.slane %v1311, 6
    %v1320 = vperm.slane %v1311, 7
    %1329 = vmatpush.msra.mxu0 %v407
    %1330 = vmatpush.msra.mxu0 %v399
    %1331 = vmatpush.msra.mxu0 %v391
    %1332 = vmatpush.msra.mxu0 %v383
    %1333 = vmatpush.msra.mxu0 %v375
    %1334 = vmatpush.msra.mxu0 %v367
    %1335 = vmatpush.msra.mxu0 %v359
    %1336 = vmatpush.msra.mxu0 %v351
    %1337 = vmatpush.msra.mxu0 %v343
    %1338 = vmatpush.msra.mxu0 %v335
    %1339 = vmatpush.msra.mxu0 %v327
    %1340 = vmatpush.msra.mxu0 %v319
    %1341 = vmatpush.msra.mxu0 %v311
    %1342 = vmatpush.msra.mxu0 %v303
    %1343 = vmatpush.msra.mxu0 %v295
    %1344 = vmatpush.msra.mxu0 %v287
    %1345 = vmatmul.f32.gmra.mxu0 %v271
    %v1346 = vpop.f32.mrf.mxu0
    %v1347 = vadd.f32 %v1313, %v1346
    %1348 = vmatmul.f32.gmra.mxu0 %v279
    %v1349 = vpop.f32.mrf.mxu0
    %v1350 = vadd.f32 %v1313, %v1349
    %1351 = vdwg.mxu0
    %1352 = vmatpush.msra.mxu0 %v535
    %1353 = vmatpush.msra.mxu0 %v527
    %1354 = vmatpush.msra.mxu0 %v519
    %1355 = vmatpush.msra.mxu0 %v511
    %1356 = vmatpush.msra.mxu0 %v503
    %1357 = vmatpush.msra.mxu0 %v495
    %1358 = vmatpush.msra.mxu0 %v487
    %1359 = vmatpush.msra.mxu0 %v479
    %1360 = vmatpush.msra.mxu0 %v471
    %1361 = vmatpush.msra.mxu0 %v463
    %1362 = vmatpush.msra.mxu0 %v455
    %1363 = vmatpush.msra.mxu0 %v447
    %1364 = vmatpush.msra.mxu0 %v439
    %1365 = vmatpush.msra.mxu0 %v431
    %1366 = vmatpush.msra.mxu0 %v423
    %1367 = vmatpush.msra.mxu0 %v415
    %1368 = vmatmul.f32.gmra.mxu0 %v272
    %v1369 = vpop.f32.mrf.mxu0
    %v1370 = vadd.f32 %v1347, %v1369
    %1371 = vmatmul.f32.gmra.mxu0 %v280
    %v1372 = vpop.f32.mrf.mxu0
    %v1373 = vadd.f32 %v1350, %v1372
    %1374 = vdwg.mxu0
    %1375 = vmatpush.msra.mxu0 %v663
    %1376 = vmatpush.msra.mxu0 %v655
    %1377 = vmatpush.msra.mxu0 %v647
    %1378 = vmatpush.msra.mxu0 %v639
    %1379 = vmatpush.msra.mxu0 %v631
    %1380 = vmatpush.msra.mxu0 %v623
    %1381 = vmatpush.msra.mxu0 %v615
    %1382 = vmatpush.msra.mxu0 %v607
    %1383 = vmatpush.msra.mxu0 %v599
    %1384 = vmatpush.msra.mxu0 %v591
    %1385 = vmatpush.msra.mxu0 %v583
    %1386 = vmatpush.msra.mxu0 %v575
    %1387 = vmatpush.msra.mxu0 %v567
    %1388 = vmatpush.msra.mxu0 %v559
    %1389 = vmatpush.msra.mxu0 %v551
    %1390 = vmatpush.msra.mxu0 %v543
    %1391 = vmatmul.f32.gmra.mxu0 %v273
    %v1392 = vpop.f32.mrf.mxu0
    %v1393 = vadd.f32 %v1370, %v1392
    %1394 = vmatmul.f32.gmra.mxu0 %v281
    %v1395 = vpop.f32.mrf.mxu0
    %v1396 = vadd.f32 %v1373, %v1395
    %1397 = vdwg.mxu0
    %1398 = vmatpush.msra.mxu0 %v791
    %1399 = vmatpush.msra.mxu0 %v783
    %1400 = vmatpush.msra.mxu0 %v775
    %1401 = vmatpush.msra.mxu0 %v767
    %1402 = vmatpush.msra.mxu0 %v759
    %1403 = vmatpush.msra.mxu0 %v751
    %1404 = vmatpush.msra.mxu0 %v743
    %1405 = vmatpush.msra.mxu0 %v735
    %1406 = vmatpush.msra.mxu0 %v727
    %1407 = vmatpush.msra.mxu0 %v719
    %1408 = vmatpush.msra.mxu0 %v711
    %1409 = vmatpush.msra.mxu0 %v703
    %1410 = vmatpush.msra.mxu0 %v695
    %1411 = vmatpush.msra.mxu0 %v687
    %1412 = vmatpush.msra.mxu0 %v679
    %1413 = vmatpush.msra.mxu0 %v671
    %1414 = vmatmul.f32.gmra.mxu0 %v274
    %v1415 = vpop.f32.mrf.mxu0
    %v1416 = vadd.f32 %v1393, %v1415
    %1417 = vmatmul.f32.gmra.mxu0 %v282
    %v1418 = vpop.f32.mrf.mxu0
    %v1419 = vadd.f32 %v1396, %v1418
    %1420 = vdwg.mxu0
    %1421 = vmatpush.msra.mxu0 %v919
    %1422 = vmatpush.msra.mxu0 %v911
    %1423 = vmatpush.msra.mxu0 %v903
    %1424 = vmatpush.msra.mxu0 %v895
    %1425 = vmatpush.msra.mxu0 %v887
    %1426 = vmatpush.msra.mxu0 %v879
    %1427 = vmatpush.msra.mxu0 %v871
    %1428 = vmatpush.msra.mxu0 %v863
    %1429 = vmatpush.msra.mxu0 %v855
    %1430 = vmatpush.msra.mxu0 %v847
    %1431 = vmatpush.msra.mxu0 %v839
    %1432 = vmatpush.msra.mxu0 %v831
    %1433 = vmatpush.msra.mxu0 %v823
    %1434 = vmatpush.msra.mxu0 %v815
    %1435 = vmatpush.msra.mxu0 %v807
    %1436 = vmatpush.msra.mxu0 %v799
    %1437 = vmatmul.f32.gmra.mxu0 %v275
    %v1438 = vpop.f32.mrf.mxu0
    %v1439 = vadd.f32 %v1416, %v1438
    %1440 = vmatmul.f32.gmra.mxu0 %v283
    %v1441 = vpop.f32.mrf.mxu0
    %v1442 = vadd.f32 %v1419, %v1441
    %1443 = vdwg.mxu0
    %1444 = vmatpush.msra.mxu0 %v1047
    %1445 = vmatpush.msra.mxu0 %v1039
    %1446 = vmatpush.msra.mxu0 %v1031
    %1447 = vmatpush.msra.mxu0 %v1023
    %1448 = vmatpush.msra.mxu0 %v1015
    %1449 = vmatpush.msra.mxu0 %v1007
    %1450 = vmatpush.msra.mxu0 %v999
    %1451 = vmatpush.msra.mxu0 %v991
    %1452 = vmatpush.msra.mxu0 %v983
    %1453 = vmatpush.msra.mxu0 %v975
    %1454 = vmatpush.msra.mxu0 %v967
    %1455 = vmatpush.msra.mxu0 %v959
    %1456 = vmatpush.msra.mxu0 %v951
    %1457 = vmatpush.msra.mxu0 %v943
    %1458 = vmatpush.msra.mxu0 %v935
    %1459 = vmatpush.msra.mxu0 %v927
    %1460 = vmatmul.f32.gmra.mxu0 %v276
    %v1461 = vpop.f32.mrf.mxu0
    %v1462 = vadd.f32 %v1439, %v1461
    %1463 = vmatmul.f32.gmra.mxu0 %v284
    %v1464 = vpop.f32.mrf.mxu0
    %v1465 = vadd.f32 %v1442, %v1464
    %1466 = vdwg.mxu0
    %1467 = vmatpush.msra.mxu0 %v1175
    %1468 = vmatpush.msra.mxu0 %v1167
    %1469 = vmatpush.msra.mxu0 %v1159
    %1470 = vmatpush.msra.mxu0 %v1151
    %1471 = vmatpush.msra.mxu0 %v1143
    %1472 = vmatpush.msra.mxu0 %v1135
    %1473 = vmatpush.msra.mxu0 %v1127
    %1474 = vmatpush.msra.mxu0 %v1119
    %1475 = vmatpush.msra.mxu0 %v1111
    %1476 = vmatpush.msra.mxu0 %v1103
    %1477 = vmatpush.msra.mxu0 %v1095
    %1478 = vmatpush.msra.mxu0 %v1087
    %1479 = vmatpush.msra.mxu0 %v1079
    %1480 = vmatpush.msra.mxu0 %v1071
    %1481 = vmatpush.msra.mxu0 %v1063
    %1482 = vmatpush.msra.mxu0 %v1055
    %1483 = vmatmul.f32.gmra.mxu0 %v277
    %v1484 = vpop.f32.mrf.mxu0
    %v1485 = vadd.f32 %v1462, %v1484
    %1486 = vmatmul.f32.gmra.mxu0 %v285
    %v1487 = vpop.f32.mrf.mxu0
    %v1488 = vadd.f32 %v1465, %v1487
    %1489 = vdwg.mxu0
    %1490 = vmatpush.msra.mxu0 %v1303
    %1491 = vmatpush.msra.mxu0 %v1295
    %1492 = vmatpush.msra.mxu0 %v1287
    %1493 = vmatpush.msra.mxu0 %v1279
    %1494 = vmatpush.msra.mxu0 %v1271
    %1495 = vmatpush.msra.mxu0 %v1263
    %1496 = vmatpush.msra.mxu0 %v1255
    %1497 = vmatpush.msra.mxu0 %v1247
    %1498 = vmatpush.msra.mxu0 %v1239
    %1499 = vmatpush.msra.mxu0 %v1231
    %1500 = vmatpush.msra.mxu0 %v1223
    %1501 = vmatpush.msra.mxu0 %v1215
    %1502 = vmatpush.msra.mxu0 %v1207
    %1503 = vmatpush.msra.mxu0 %v1199
    %1504 = vmatpush.msra.mxu0 %v1191
    %1505 = vmatpush.msra.mxu0 %v1183
    %1506 = vmatmul.f32.gmra.mxu0 %v278
    %v1507 = vpop.f32.mrf.mxu0
    %v1508 = vadd.f32 %v1485, %v1507
    %1509 = vmatmul.f32.gmra.mxu0 %v286
    %v1510 = vpop.f32.mrf.mxu0
    %v1511 = vadd.f32 %v1488, %v1510
    %1512 = vdwg.mxu0
    %1513 = vmatpush.msra.mxu0 %v408
    %1514 = vmatpush.msra.mxu0 %v400
    %1515 = vmatpush.msra.mxu0 %v392
    %1516 = vmatpush.msra.mxu0 %v384
    %1517 = vmatpush.msra.mxu0 %v376
    %1518 = vmatpush.msra.mxu0 %v368
    %1519 = vmatpush.msra.mxu0 %v360
    %1520 = vmatpush.msra.mxu0 %v352
    %1521 = vmatpush.msra.mxu0 %v344
    %1522 = vmatpush.msra.mxu0 %v336
    %1523 = vmatpush.msra.mxu0 %v328
    %1524 = vmatpush.msra.mxu0 %v320
    %1525 = vmatpush.msra.mxu0 %v312
    %1526 = vmatpush.msra.mxu0 %v304
    %1527 = vmatpush.msra.mxu0 %v296
    %1528 = vmatpush.msra.mxu0 %v288
    %1529 = vmatmul.f32.gmra.mxu0 %v271
    %v1530 = vpop.f32.mrf.mxu0
    %v1531 = vadd.f32 %v1314, %v1530
    %1532 = vmatmul.f32.gmra.mxu0 %v279
    %v1533 = vpop.f32.mrf.mxu0
    %v1534 = vadd.f32 %v1314, %v1533
    %1535 = vdwg.mxu0
    %1536 = vmatpush.msra.mxu0 %v536
    %1537 = vmatpush.msra.mxu0 %v528
    %1538 = vmatpush.msra.mxu0 %v520
    %1539 = vmatpush.msra.mxu0 %v512
    %1540 = vmatpush.msra.mxu0 %v504
    %1541 = vmatpush.msra.mxu0 %v496
    %1542 = vmatpush.msra.mxu0 %v488
    %1543 = vmatpush.msra.mxu0 %v480
    %1544 = vmatpush.msra.mxu0 %v472
    %1545 = vmatpush.msra.mxu0 %v464
    %1546 = vmatpush.msra.mxu0 %v456
    %1547 = vmatpush.msra.mxu0 %v448
    %1548 = vmatpush.msra.mxu0 %v440
    %1549 = vmatpush.msra.mxu0 %v432
    %1550 = vmatpush.msra.mxu0 %v424
    %1551 = vmatpush.msra.mxu0 %v416
    %1552 = vmatmul.f32.gmra.mxu0 %v272
    %v1553 = vpop.f32.mrf.mxu0
    %v1554 = vadd.f32 %v1531, %v1553
    %1555 = vmatmul.f32.gmra.mxu0 %v280
    %v1556 = vpop.f32.mrf.mxu0
    %v1557 = vadd.f32 %v1534, %v1556
    %1558 = vdwg.mxu0
    %1559 = vmatpush.msra.mxu0 %v664
    %1560 = vmatpush.msra.mxu0 %v656
    %1561 = vmatpush.msra.mxu0 %v648
    %1562 = vmatpush.msra.mxu0 %v640
    %1563 = vmatpush.msra.mxu0 %v632
    %1564 = vmatpush.msra.mxu0 %v624
    %1565 = vmatpush.msra.mxu0 %v616
    %1566 = vmatpush.msra.mxu0 %v608
    %1567 = vmatpush.msra.mxu0 %v600
    %1568 = vmatpush.msra.mxu0 %v592
    %1569 = vmatpush.msra.mxu0 %v584
    %1570 = vmatpush.msra.mxu0 %v576
    %1571 = vmatpush.msra.mxu0 %v568
    %1572 = vmatpush.msra.mxu0 %v560
    %1573 = vmatpush.msra.mxu0 %v552
    %1574 = vmatpush.msra.mxu0 %v544
    %1575 = vmatmul.f32.gmra.mxu0 %v273
    %v1576 = vpop.f32.mrf.mxu0
    %v1577 = vadd.f32 %v1554, %v1576
    %1578 = vmatmul.f32.gmra.mxu0 %v281
    %v1579 = vpop.f32.mrf.mxu0
    %v1580 = vadd.f32 %v1557, %v1579
    %1581 = vdwg.mxu0
    %1582 = vmatpush.msra.mxu0 %v792
    %1583 = vmatpush.msra.mxu0 %v784
    %1584 = vmatpush.msra.mxu0 %v776
    %1585 = vmatpush.msra.mxu0 %v768
    %1586 = vmatpush.msra.mxu0 %v760
    %1587 = vmatpush.msra.mxu0 %v752
    %1588 = vmatpush.msra.mxu0 %v744
    %1589 = vmatpush.msra.mxu0 %v736
    %1590 = vmatpush.msra.mxu0 %v728
    %1591 = vmatpush.msra.mxu0 %v720
    %1592 = vmatpush.msra.mxu0 %v712
    %1593 = vmatpush.msra.mxu0 %v704
    %1594 = vmatpush.msra.mxu0 %v696
    %1595 = vmatpush.msra.mxu0 %v688
    %1596 = vmatpush.msra.mxu0 %v680
    %1597 = vmatpush.msra.mxu0 %v672
    %1598 = vmatmul.f32.gmra.mxu0 %v274
    %v1599 = vpop.f32.mrf.mxu0
    %v1600 = vadd.f32 %v1577, %v1599
    %1601 = vmatmul.f32.gmra.mxu0 %v282
    %v1602 = vpop.f32.mrf.mxu0
    %v1603 = vadd.f32 %v1580, %v1602
    %1604 = vdwg.mxu0
    %1605 = vmatpush.msra.mxu0 %v920
    %1606 = vmatpush.msra.mxu0 %v912
    %1607 = vmatpush.msra.mxu0 %v904
    %1608 = vmatpush.msra.mxu0 %v896
    %1609 = vmatpush.msra.mxu0 %v888
    %1610 = vmatpush.msra.mxu0 %v880
    %1611 = vmatpush.msra.mxu0 %v872
    %1612 = vmatpush.msra.mxu0 %v864
    %1613 = vmatpush.msra.mxu0 %v856
    %1614 = vmatpush.msra.mxu0 %v848
    %1615 = vmatpush.msra.mxu0 %v840
    %1616 = vmatpush.msra.mxu0 %v832
    %1617 = vmatpush.msra.mxu0 %v824
    %1618 = vmatpush.msra.mxu0 %v816
    %1619 = vmatpush.msra.mxu0 %v808
    %1620 = vmatpush.msra.mxu0 %v800
    %1621 = vmatmul.f32.gmra.mxu0 %v275
    %v1622 = vpop.f32.mrf.mxu0
    %v1623 = vadd.f32 %v1600, %v1622
    %1624 = vmatmul.f32.gmra.mxu0 %v283
    %v1625 = vpop.f32.mrf.mxu0
    %v1626 = vadd.f32 %v1603, %v1625
    %1627 = vdwg.mxu0
    %1628 = vmatpush.msra.mxu0 %v1048
    %1629 = vmatpush.msra.mxu0 %v1040
    %1630 = vmatpush.msra.mxu0 %v1032
    %1631 = vmatpush.msra.mxu0 %v1024
    %1632 = vmatpush.msra.mxu0 %v1016
    %1633 = vmatpush.msra.mxu0 %v1008
    %1634 = vmatpush.msra.mxu0 %v1000
    %1635 = vmatpush.msra.mxu0 %v992
    %1636 = vmatpush.msra.mxu0 %v984
    %1637 = vmatpush.msra.mxu0 %v976
    %1638 = vmatpush.msra.mxu0 %v968
    %1639 = vmatpush.msra.mxu0 %v960
    %1640 = vmatpush.msra.mxu0 %v952
    %1641 = vmatpush.msra.mxu0 %v944
    %1642 = vmatpush.msra.mxu0 %v936
    %1643 = vmatpush.msra.mxu0 %v928
    %1644 = vmatmul.f32.gmra.mxu0 %v276
    %v1645 = vpop.f32.mrf.mxu0
    %v1646 = vadd.f32 %v1623, %v1645
    %1647 = vmatmul.f32.gmra.mxu0 %v284
    %v1648 = vpop.f32.mrf.mxu0
    %v1649 = vadd.f32 %v1626, %v1648
    %1650 = vdwg.mxu0
    %1651 = vmatpush.msra.mxu0 %v1176
    %1652 = vmatpush.msra.mxu0 %v1168
    %1653 = vmatpush.msra.mxu0 %v1160
    %1654 = vmatpush.msra.mxu0 %v1152
    %1655 = vmatpush.msra.mxu0 %v1144
    %1656 = vmatpush.msra.mxu0 %v1136
    %1657 = vmatpush.msra.mxu0 %v1128
    %1658 = vmatpush.msra.mxu0 %v1120
    %1659 = vmatpush.msra.mxu0 %v1112
    %1660 = vmatpush.msra.mxu0 %v1104
    %1661 = vmatpush.msra.mxu0 %v1096
    %1662 = vmatpush.msra.mxu0 %v1088
    %1663 = vmatpush.msra.mxu0 %v1080
    %1664 = vmatpush.msra.mxu0 %v1072
    %1665 = vmatpush.msra.mxu0 %v1064
    %1666 = vmatpush.msra.mxu0 %v1056
    %1667 = vmatmul.f32.gmra.mxu0 %v277
    %v1668 = vpop.f32.mrf.mxu0
    %v1669 = vadd.f32 %v1646, %v1668
    %1670 = vmatmul.f32.gmra.mxu0 %v285
    %v1671 = vpop.f32.mrf.mxu0
    %v1672 = vadd.f32 %v1649, %v1671
    %1673 = vdwg.mxu0
    %1674 = vmatpush.msra.mxu0 %v1304
    %1675 = vmatpush.msra.mxu0 %v1296
    %1676 = vmatpush.msra.mxu0 %v1288
    %1677 = vmatpush.msra.mxu0 %v1280
    %1678 = vmatpush.msra.mxu0 %v1272
    %1679 = vmatpush.msra.mxu0 %v1264
    %1680 = vmatpush.msra.mxu0 %v1256
    %1681 = vmatpush.msra.mxu0 %v1248
    %1682 = vmatpush.msra.mxu0 %v1240
    %1683 = vmatpush.msra.mxu0 %v1232
    %1684 = vmatpush.msra.mxu0 %v1224
    %1685 = vmatpush.msra.mxu0 %v1216
    %1686 = vmatpush.msra.mxu0 %v1208
    %1687 = vmatpush.msra.mxu0 %v1200
    %1688 = vmatpush.msra.mxu0 %v1192
    %1689 = vmatpush.msra.mxu0 %v1184
    %1690 = vmatmul.f32.gmra.mxu0 %v278
    %v1691 = vpop.f32.mrf.mxu0
    %v1692 = vadd.f32 %v1669, %v1691
    %1693 = vmatmul.f32.gmra.mxu0 %v286
    %v1694 = vpop.f32.mrf.mxu0
    %v1695 = vadd.f32 %v1672, %v1694
    %1696 = vdwg.mxu0
    %1697 = vmatpush.msra.mxu0 %v409
    %1698 = vmatpush.msra.mxu0 %v401
    %1699 = vmatpush.msra.mxu0 %v393
    %1700 = vmatpush.msra.mxu0 %v385
    %1701 = vmatpush.msra.mxu0 %v377
    %1702 = vmatpush.msra.mxu0 %v369
    %1703 = vmatpush.msra.mxu0 %v361
    %1704 = vmatpush.msra.mxu0 %v353
    %1705 = vmatpush.msra.mxu0 %v345
    %1706 = vmatpush.msra.mxu0 %v337
    %1707 = vmatpush.msra.mxu0 %v329
    %1708 = vmatpush.msra.mxu0 %v321
    %1709 = vmatpush.msra.mxu0 %v313
    %1710 = vmatpush.msra.mxu0 %v305
    %1711 = vmatpush.msra.mxu0 %v297
    %1712 = vmatpush.msra.mxu0 %v289
    %1713 = vmatmul.f32.gmra.mxu0 %v271
    %v1714 = vpop.f32.mrf.mxu0
    %v1715 = vadd.f32 %v1315, %v1714
    %1716 = vmatmul.f32.gmra.mxu0 %v279
    %v1717 = vpop.f32.mrf.mxu0
    %v1718 = vadd.f32 %v1315, %v1717
    %1719 = vdwg.mxu0
    %1720 = vmatpush.msra.mxu0 %v537
    %1721 = vmatpush.msra.mxu0 %v529
    %1722 = vmatpush.msra.mxu0 %v521
    %1723 = vmatpush.msra.mxu0 %v513
    %1724 = vmatpush.msra.mxu0 %v505
    %1725 = vmatpush.msra.mxu0 %v497
    %1726 = vmatpush.msra.mxu0 %v489
    %1727 = vmatpush.msra.mxu0 %v481
    %1728 = vmatpush.msra.mxu0 %v473
    %1729 = vmatpush.msra.mxu0 %v465
    %1730 = vmatpush.msra.mxu0 %v457
    %1731 = vmatpush.msra.mxu0 %v449
    %1732 = vmatpush.msra.mxu0 %v441
    %1733 = vmatpush.msra.mxu0 %v433
    %1734 = vmatpush.msra.mxu0 %v425
    %1735 = vmatpush.msra.mxu0 %v417
    %1736 = vmatmul.f32.gmra.mxu0 %v272
    %v1737 = vpop.f32.mrf.mxu0
    %v1738 = vadd.f32 %v1715, %v1737
    %1739 = vmatmul.f32.gmra.mxu0 %v280
    %v1740 = vpop.f32.mrf.mxu0
    %v1741 = vadd.f32 %v1718, %v1740
    %1742 = vdwg.mxu0
    %1743 = vmatpush.msra.mxu0 %v665
    %1744 = vmatpush.msra.mxu0 %v657
    %1745 = vmatpush.msra.mxu0 %v649
    %1746 = vmatpush.msra.mxu0 %v641
    %1747 = vmatpush.msra.mxu0 %v633
    %1748 = vmatpush.msra.mxu0 %v625
    %1749 = vmatpush.msra.mxu0 %v617
    %1750 = vmatpush.msra.mxu0 %v609
    %1751 = vmatpush.msra.mxu0 %v601
    %1752 = vmatpush.msra.mxu0 %v593
    %1753 = vmatpush.msra.mxu0 %v585
    %1754 = vmatpush.msra.mxu0 %v577
    %1755 = vmatpush.msra.mxu0 %v569
    %1756 = vmatpush.msra.mxu0 %v561
    %1757 = vmatpush.msra.mxu0 %v553
    %1758 = vmatpush.msra.mxu0 %v545
    %1759 = vmatmul.f32.gmra.mxu0 %v273
    %v1760 = vpop.f32.mrf.mxu0
    %v1761 = vadd.f32 %v1738, %v1760
    %1762 = vmatmul.f32.gmra.mxu0 %v281
    %v1763 = vpop.f32.mrf.mxu0
    %v1764 = vadd.f32 %v1741, %v1763
    %1765 = vdwg.mxu0
    %1766 = vmatpush.msra.mxu0 %v793
    %1767 = vmatpush.msra.mxu0 %v785
    %1768 = vmatpush.msra.mxu0 %v777
    %1769 = vmatpush.msra.mxu0 %v769
    %1770 = vmatpush.msra.mxu0 %v761
    %1771 = vmatpush.msra.mxu0 %v753
    %1772 = vmatpush.msra.mxu0 %v745
    %1773 = vmatpush.msra.mxu0 %v737
    %1774 = vmatpush.msra.mxu0 %v729
    %1775 = vmatpush.msra.mxu0 %v721
    %1776 = vmatpush.msra.mxu0 %v713
    %1777 = vmatpush.msra.mxu0 %v705
    %1778 = vmatpush.msra.mxu0 %v697
    %1779 = vmatpush.msra.mxu0 %v689
    %1780 = vmatpush.msra.mxu0 %v681
    %1781 = vmatpush.msra.mxu0 %v673
    %1782 = vmatmul.f32.gmra.mxu0 %v274
    %v1783 = vpop.f32.mrf.mxu0
    %v1784 = vadd.f32 %v1761, %v1783
    %1785 = vmatmul.f32.gmra.mxu0 %v282
    %v1786 = vpop.f32.mrf.mxu0
    %v1787 = vadd.f32 %v1764, %v1786
    %1788 = vdwg.mxu0
    %1789 = vmatpush.msra.mxu0 %v921
    %1790 = vmatpush.msra.mxu0 %v913
    %1791 = vmatpush.msra.mxu0 %v905
    %1792 = vmatpush.msra.mxu0 %v897
    %1793 = vmatpush.msra.mxu0 %v889
    %1794 = vmatpush.msra.mxu0 %v881
    %1795 = vmatpush.msra.mxu0 %v873
    %1796 = vmatpush.msra.mxu0 %v865
    %1797 = vmatpush.msra.mxu0 %v857
    %1798 = vmatpush.msra.mxu0 %v849
    %1799 = vmatpush.msra.mxu0 %v841
    %1800 = vmatpush.msra.mxu0 %v833
    %1801 = vmatpush.msra.mxu0 %v825
    %1802 = vmatpush.msra.mxu0 %v817
    %1803 = vmatpush.msra.mxu0 %v809
    %1804 = vmatpush.msra.mxu0 %v801
    %1805 = vmatmul.f32.gmra.mxu0 %v275
    %v1806 = vpop.f32.mrf.mxu0
    %v1807 = vadd.f32 %v1784, %v1806
    %1808 = vmatmul.f32.gmra.mxu0 %v283
    %v1809 = vpop.f32.mrf.mxu0
    %v1810 = vadd.f32 %v1787, %v1809
    %1811 = vdwg.mxu0
    %1812 = vmatpush.msra.mxu0 %v1049
    %1813 = vmatpush.msra.mxu0 %v1041
    %1814 = vmatpush.msra.mxu0 %v1033
    %1815 = vmatpush.msra.mxu0 %v1025
    %1816 = vmatpush.msra.mxu0 %v1017
    %1817 = vmatpush.msra.mxu0 %v1009
    %1818 = vmatpush.msra.mxu0 %v1001
    %1819 = vmatpush.msra.mxu0 %v993
    %1820 = vmatpush.msra.mxu0 %v985
    %1821 = vmatpush.msra.mxu0 %v977
    %1822 = vmatpush.msra.mxu0 %v969
    %1823 = vmatpush.msra.mxu0 %v961
    %1824 = vmatpush.msra.mxu0 %v953
    %1825 = vmatpush.msra.mxu0 %v945
    %1826 = vmatpush.msra.mxu0 %v937
    %1827 = vmatpush.msra.mxu0 %v929
    %1828 = vmatmul.f32.gmra.mxu0 %v276
    %v1829 = vpop.f32.mrf.mxu0
    %v1830 = vadd.f32 %v1807, %v1829
    %1831 = vmatmul.f32.gmra.mxu0 %v284
    %v1832 = vpop.f32.mrf.mxu0
    %v1833 = vadd.f32 %v1810, %v1832
    %1834 = vdwg.mxu0
    %1835 = vmatpush.msra.mxu0 %v1177
    %1836 = vmatpush.msra.mxu0 %v1169
    %1837 = vmatpush.msra.mxu0 %v1161
    %1838 = vmatpush.msra.mxu0 %v1153
    %1839 = vmatpush.msra.mxu0 %v1145
    %1840 = vmatpush.msra.mxu0 %v1137
    %1841 = vmatpush.msra.mxu0 %v1129
    %1842 = vmatpush.msra.mxu0 %v1121
    %1843 = vmatpush.msra.mxu0 %v1113
    %1844 = vmatpush.msra.mxu0 %v1105
    %1845 = vmatpush.msra.mxu0 %v1097
    %1846 = vmatpush.msra.mxu0 %v1089
    %1847 = vmatpush.msra.mxu0 %v1081
    %1848 = vmatpush.msra.mxu0 %v1073
    %1849 = vmatpush.msra.mxu0 %v1065
    %1850 = vmatpush.msra.mxu0 %v1057
    %1851 = vmatmul.f32.gmra.mxu0 %v277
    %v1852 = vpop.f32.mrf.mxu0
    %v1853 = vadd.f32 %v1830, %v1852
    %1854 = vmatmul.f32.gmra.mxu0 %v285
    %v1855 = vpop.f32.mrf.mxu0
    %v1856 = vadd.f32 %v1833, %v1855
    %1857 = vdwg.mxu0
    %1858 = vmatpush.msra.mxu0 %v1305
    %1859 = vmatpush.msra.mxu0 %v1297
    %1860 = vmatpush.msra.mxu0 %v1289
    %1861 = vmatpush.msra.mxu0 %v1281
    %1862 = vmatpush.msra.mxu0 %v1273
    %1863 = vmatpush.msra.mxu0 %v1265
    %1864 = vmatpush.msra.mxu0 %v1257
    %1865 = vmatpush.msra.mxu0 %v1249
    %1866 = vmatpush.msra.mxu0 %v1241
    %1867 = vmatpush.msra.mxu0 %v1233
    %1868 = vmatpush.msra.mxu0 %v1225
    %1869 = vmatpush.msra.mxu0 %v1217
    %1870 = vmatpush.msra.mxu0 %v1209
    %1871 = vmatpush.msra.mxu0 %v1201
    %1872 = vmatpush.msra.mxu0 %v1193
    %1873 = vmatpush.msra.mxu0 %v1185
    %1874 = vmatmul.f32.gmra.mxu0 %v278
    %v1875 = vpop.f32.mrf.mxu0
    %v1876 = vadd.f32 %v1853, %v1875
    %1877 = vmatmul.f32.gmra.mxu0 %v286
    %v1878 = vpop.f32.mrf.mxu0
    %v1879 = vadd.f32 %v1856, %v1878
    %1880 = vdwg.mxu0
    %1881 = vmatpush.msra.mxu0 %v410
    %1882 = vmatpush.msra.mxu0 %v402
    %1883 = vmatpush.msra.mxu0 %v394
    %1884 = vmatpush.msra.mxu0 %v386
    %1885 = vmatpush.msra.mxu0 %v378
    %1886 = vmatpush.msra.mxu0 %v370
    %1887 = vmatpush.msra.mxu0 %v362
    %1888 = vmatpush.msra.mxu0 %v354
    %1889 = vmatpush.msra.mxu0 %v346
    %1890 = vmatpush.msra.mxu0 %v338
    %1891 = vmatpush.msra.mxu0 %v330
    %1892 = vmatpush.msra.mxu0 %v322
    %1893 = vmatpush.msra.mxu0 %v314
    %1894 = vmatpush.msra.mxu0 %v306
    %1895 = vmatpush.msra.mxu0 %v298
    %1896 = vmatpush.msra.mxu0 %v290
    %1897 = vmatmul.f32.gmra.mxu0 %v271
    %v1898 = vpop.f32.mrf.mxu0
    %v1899 = vadd.f32 %v1316, %v1898
    %1900 = vmatmul.f32.gmra.mxu0 %v279
    %v1901 = vpop.f32.mrf.mxu0
    %v1902 = vadd.f32 %v1316, %v1901
    %1903 = vdwg.mxu0
    %1904 = vmatpush.msra.mxu0 %v538
    %1905 = vmatpush.msra.mxu0 %v530
    %1906 = vmatpush.msra.mxu0 %v522
    %1907 = vmatpush.msra.mxu0 %v514
    %1908 = vmatpush.msra.mxu0 %v506
    %1909 = vmatpush.msra.mxu0 %v498
    %1910 = vmatpush.msra.mxu0 %v490
    %1911 = vmatpush.msra.mxu0 %v482
    %1912 = vmatpush.msra.mxu0 %v474
    %1913 = vmatpush.msra.mxu0 %v466
    %1914 = vmatpush.msra.mxu0 %v458
    %1915 = vmatpush.msra.mxu0 %v450
    %1916 = vmatpush.msra.mxu0 %v442
    %1917 = vmatpush.msra.mxu0 %v434
    %1918 = vmatpush.msra.mxu0 %v426
    %1919 = vmatpush.msra.mxu0 %v418
    %1920 = vmatmul.f32.gmra.mxu0 %v272
    %v1921 = vpop.f32.mrf.mxu0
    %v1922 = vadd.f32 %v1899, %v1921
    %1923 = vmatmul.f32.gmra.mxu0 %v280
    %v1924 = vpop.f32.mrf.mxu0
    %v1925 = vadd.f32 %v1902, %v1924
    %1926 = vdwg.mxu0
    %1927 = vmatpush.msra.mxu0 %v666
    %1928 = vmatpush.msra.mxu0 %v658
    %1929 = vmatpush.msra.mxu0 %v650
    %1930 = vmatpush.msra.mxu0 %v642
    %1931 = vmatpush.msra.mxu0 %v634
    %1932 = vmatpush.msra.mxu0 %v626
    %1933 = vmatpush.msra.mxu0 %v618
    %1934 = vmatpush.msra.mxu0 %v610
    %1935 = vmatpush.msra.mxu0 %v602
    %1936 = vmatpush.msra.mxu0 %v594
    %1937 = vmatpush.msra.mxu0 %v586
    %1938 = vmatpush.msra.mxu0 %v578
    %1939 = vmatpush.msra.mxu0 %v570
    %1940 = vmatpush.msra.mxu0 %v562
    %1941 = vmatpush.msra.mxu0 %v554
    %1942 = vmatpush.msra.mxu0 %v546
    %1943 = vmatmul.f32.gmra.mxu0 %v273
    %v1944 = vpop.f32.mrf.mxu0
    %v1945 = vadd.f32 %v1922, %v1944
    %1946 = vmatmul.f32.gmra.mxu0 %v281
    %v1947 = vpop.f32.mrf.mxu0
    %v1948 = vadd.f32 %v1925, %v1947
    %1949 = vdwg.mxu0
    %1950 = vmatpush.msra.mxu0 %v794
    %1951 = vmatpush.msra.mxu0 %v786
    %1952 = vmatpush.msra.mxu0 %v778
    %1953 = vmatpush.msra.mxu0 %v770
    %1954 = vmatpush.msra.mxu0 %v762
    %1955 = vmatpush.msra.mxu0 %v754
    %1956 = vmatpush.msra.mxu0 %v746
    %1957 = vmatpush.msra.mxu0 %v738
    %1958 = vmatpush.msra.mxu0 %v730
    %1959 = vmatpush.msra.mxu0 %v722
    %1960 = vmatpush.msra.mxu0 %v714
    %1961 = vmatpush.msra.mxu0 %v706
    %1962 = vmatpush.msra.mxu0 %v698
    %1963 = vmatpush.msra.mxu0 %v690
    %1964 = vmatpush.msra.mxu0 %v682
    %1965 = vmatpush.msra.mxu0 %v674
    %1966 = vmatmul.f32.gmra.mxu0 %v274
    %v1967 = vpop.f32.mrf.mxu0
    %v1968 = vadd.f32 %v1945, %v1967
    %1969 = vmatmul.f32.gmra.mxu0 %v282
    %v1970 = vpop.f32.mrf.mxu0
    %v1971 = vadd.f32 %v1948, %v1970
    %1972 = vdwg.mxu0
    %1973 = vmatpush.msra.mxu0 %v922
    %1974 = vmatpush.msra.mxu0 %v914
    %1975 = vmatpush.msra.mxu0 %v906
    %1976 = vmatpush.msra.mxu0 %v898
    %1977 = vmatpush.msra.mxu0 %v890
    %1978 = vmatpush.msra.mxu0 %v882
    %1979 = vmatpush.msra.mxu0 %v874
    %1980 = vmatpush.msra.mxu0 %v866
    %1981 = vmatpush.msra.mxu0 %v858
    %1982 = vmatpush.msra.mxu0 %v850
    %1983 = vmatpush.msra.mxu0 %v842
    %1984 = vmatpush.msra.mxu0 %v834
    %1985 = vmatpush.msra.mxu0 %v826
    %1986 = vmatpush.msra.mxu0 %v818
    %1987 = vmatpush.msra.mxu0 %v810
    %1988 = vmatpush.msra.mxu0 %v802
    %1989 = vmatmul.f32.gmra.mxu0 %v275
    %v1990 = vpop.f32.mrf.mxu0
    %v1991 = vadd.f32 %v1968, %v1990
    %1992 = vmatmul.f32.gmra.mxu0 %v283
    %v1993 = vpop.f32.mrf.mxu0
    %v1994 = vadd.f32 %v1971, %v1993
    %1995 = vdwg.mxu0
    %1996 = vmatpush.msra.mxu0 %v1050
    %1997 = vmatpush.msra.mxu0 %v1042
    %1998 = vmatpush.msra.mxu0 %v1034
    %1999 = vmatpush.msra.mxu0 %v1026
    %2000 = vmatpush.msra.mxu0 %v1018
    %2001 = vmatpush.msra.mxu0 %v1010
    %2002 = vmatpush.msra.mxu0 %v1002
    %2003 = vmatpush.msra.mxu0 %v994
    %2004 = vmatpush.msra.mxu0 %v986
    %2005 = vmatpush.msra.mxu0 %v978
    %2006 = vmatpush.msra.mxu0 %v970
    %2007 = vmatpush.msra.mxu0 %v962
    %2008 = vmatpush.msra.mxu0 %v954
    %2009 = vmatpush.msra.mxu0 %v946
    %2010 = vmatpush.msra.mxu0 %v938
    %2011 = vmatpush.msra.mxu0 %v930
    %2012 = vmatmul.f32.gmra.mxu0 %v276
    %v2013 = vpop.f32.mrf.mxu0
    %v2014 = vadd.f32 %v1991, %v2013
    %2015 = vmatmul.f32.gmra.mxu0 %v284
    %v2016 = vpop.f32.mrf.mxu0
    %v2017 = vadd.f32 %v1994, %v2016
    %2018 = vdwg.mxu0
    %2019 = vmatpush.msra.mxu0 %v1178
    %2020 = vmatpush.msra.mxu0 %v1170
    %2021 = vmatpush.msra.mxu0 %v1162
    %2022 = vmatpush.msra.mxu0 %v1154
    %2023 = vmatpush.msra.mxu0 %v1146
    %2024 = vmatpush.msra.mxu0 %v1138
    %2025 = vmatpush.msra.mxu0 %v1130
    %2026 = vmatpush.msra.mxu0 %v1122
    %2027 = vmatpush.msra.mxu0 %v1114
    %2028 = vmatpush.msra.mxu0 %v1106
    %2029 = vmatpush.msra.mxu0 %v1098
    %2030 = vmatpush.msra.mxu0 %v1090
    %2031 = vmatpush.msra.mxu0 %v1082
    %2032 = vmatpush.msra.mxu0 %v1074
    %2033 = vmatpush.msra.mxu0 %v1066
    %2034 = vmatpush.msra.mxu0 %v1058
    %2035 = vmatmul.f32.gmra.mxu0 %v277
    %v2036 = vpop.f32.mrf.mxu0
    %v2037 = vadd.f32 %v2014, %v2036
    %2038 = vmatmul.f32.gmra.mxu0 %v285
    %v2039 = vpop.f32.mrf.mxu0
    %v2040 = vadd.f32 %v2017, %v2039
    %2041 = vdwg.mxu0
    %2042 = vmatpush.msra.mxu0 %v1306
    %2043 = vmatpush.msra.mxu0 %v1298
    %2044 = vmatpush.msra.mxu0 %v1290
    %2045 = vmatpush.msra.mxu0 %v1282
    %2046 = vmatpush.msra.mxu0 %v1274
    %2047 = vmatpush.msra.mxu0 %v1266
    %2048 = vmatpush.msra.mxu0 %v1258
    %2049 = vmatpush.msra.mxu0 %v1250
    %2050 = vmatpush.msra.mxu0 %v1242
    %2051 = vmatpush.msra.mxu0 %v1234
    %2052 = vmatpush.msra.mxu0 %v1226
    %2053 = vmatpush.msra.mxu0 %v1218
    %2054 = vmatpush.msra.mxu0 %v1210
    %2055 = vmatpush.msra.mxu0 %v1202
    %2056 = vmatpush.msra.mxu0 %v1194
    %2057 = vmatpush.msra.mxu0 %v1186
    %2058 = vmatmul.f32.gmra.mxu0 %v278
    %v2059 = vpop.f32.mrf.mxu0
    %v2060 = vadd.f32 %v2037, %v2059
    %2061 = vmatmul.f32.gmra.mxu0 %v286
    %v2062 = vpop.f32.mrf.mxu0
    %v2063 = vadd.f32 %v2040, %v2062
    %2064 = vdwg.mxu0
    %2065 = vmatpush.msra.mxu0 %v411
    %2066 = vmatpush.msra.mxu0 %v403
    %2067 = vmatpush.msra.mxu0 %v395
    %2068 = vmatpush.msra.mxu0 %v387
    %2069 = vmatpush.msra.mxu0 %v379
    %2070 = vmatpush.msra.mxu0 %v371
    %2071 = vmatpush.msra.mxu0 %v363
    %2072 = vmatpush.msra.mxu0 %v355
    %2073 = vmatpush.msra.mxu0 %v347
    %2074 = vmatpush.msra.mxu0 %v339
    %2075 = vmatpush.msra.mxu0 %v331
    %2076 = vmatpush.msra.mxu0 %v323
    %2077 = vmatpush.msra.mxu0 %v315
    %2078 = vmatpush.msra.mxu0 %v307
    %2079 = vmatpush.msra.mxu0 %v299
    %2080 = vmatpush.msra.mxu0 %v291
    %2081 = vmatmul.f32.gmra.mxu0 %v271
    %v2082 = vpop.f32.mrf.mxu0
    %v2083 = vadd.f32 %v1317, %v2082
    %2084 = vmatmul.f32.gmra.mxu0 %v279
    %v2085 = vpop.f32.mrf.mxu0
    %v2086 = vadd.f32 %v1317, %v2085
    %2087 = vdwg.mxu0
    %2088 = vmatpush.msra.mxu0 %v539
    %2089 = vmatpush.msra.mxu0 %v531
    %2090 = vmatpush.msra.mxu0 %v523
    %2091 = vmatpush.msra.mxu0 %v515
    %2092 = vmatpush.msra.mxu0 %v507
    %2093 = vmatpush.msra.mxu0 %v499
    %2094 = vmatpush.msra.mxu0 %v491
    %2095 = vmatpush.msra.mxu0 %v483
    %2096 = vmatpush.msra.mxu0 %v475
    %2097 = vmatpush.msra.mxu0 %v467
    %2098 = vmatpush.msra.mxu0 %v459
    %2099 = vmatpush.msra.mxu0 %v451
    %2100 = vmatpush.msra.mxu0 %v443
    %2101 = vmatpush.msra.mxu0 %v435
    %2102 = vmatpush.msra.mxu0 %v427
    %2103 = vmatpush.msra.mxu0 %v419
    %2104 = vmatmul.f32.gmra.mxu0 %v272
    %v2105 = vpop.f32.mrf.mxu0
    %v2106 = vadd.f32 %v2083, %v2105
    %2107 = vmatmul.f32.gmra.mxu0 %v280
    %v2108 = vpop.f32.mrf.mxu0
    %v2109 = vadd.f32 %v2086, %v2108
    %2110 = vdwg.mxu0
    %2111 = vmatpush.msra.mxu0 %v667
    %2112 = vmatpush.msra.mxu0 %v659
    %2113 = vmatpush.msra.mxu0 %v651
    %2114 = vmatpush.msra.mxu0 %v643
    %2115 = vmatpush.msra.mxu0 %v635
    %2116 = vmatpush.msra.mxu0 %v627
    %2117 = vmatpush.msra.mxu0 %v619
    %2118 = vmatpush.msra.mxu0 %v611
    %2119 = vmatpush.msra.mxu0 %v603
    %2120 = vmatpush.msra.mxu0 %v595
    %2121 = vmatpush.msra.mxu0 %v587
    %2122 = vmatpush.msra.mxu0 %v579
    %2123 = vmatpush.msra.mxu0 %v571
    %2124 = vmatpush.msra.mxu0 %v563
    %2125 = vmatpush.msra.mxu0 %v555
    %2126 = vmatpush.msra.mxu0 %v547
    %2127 = vmatmul.f32.gmra.mxu0 %v273
    %v2128 = vpop.f32.mrf.mxu0
    %v2129 = vadd.f32 %v2106, %v2128
    %2130 = vmatmul.f32.gmra.mxu0 %v281
    %v2131 = vpop.f32.mrf.mxu0
    %v2132 = vadd.f32 %v2109, %v2131
    %2133 = vdwg.mxu0
    %2134 = vmatpush.msra.mxu0 %v795
    %2135 = vmatpush.msra.mxu0 %v787
    %2136 = vmatpush.msra.mxu0 %v779
    %2137 = vmatpush.msra.mxu0 %v771
    %2138 = vmatpush.msra.mxu0 %v763
    %2139 = vmatpush.msra.mxu0 %v755
    %2140 = vmatpush.msra.mxu0 %v747
    %2141 = vmatpush.msra.mxu0 %v739
    %2142 = vmatpush.msra.mxu0 %v731
    %2143 = vmatpush.msra.mxu0 %v723
    %2144 = vmatpush.msra.mxu0 %v715
    %2145 = vmatpush.msra.mxu0 %v707
    %2146 = vmatpush.msra.mxu0 %v699
    %2147 = vmatpush.msra.mxu0 %v691
    %2148 = vmatpush.msra.mxu0 %v683
    %2149 = vmatpush.msra.mxu0 %v675
    %2150 = vmatmul.f32.gmra.mxu0 %v274
    %v2151 = vpop.f32.mrf.mxu0
    %v2152 = vadd.f32 %v2129, %v2151
    %2153 = vmatmul.f32.gmra.mxu0 %v282
    %v2154 = vpop.f32.mrf.mxu0
    %v2155 = vadd.f32 %v2132, %v2154
    %2156 = vdwg.mxu0
    %2157 = vmatpush.msra.mxu0 %v923
    %2158 = vmatpush.msra.mxu0 %v915
    %2159 = vmatpush.msra.mxu0 %v907
    %2160 = vmatpush.msra.mxu0 %v899
    %2161 = vmatpush.msra.mxu0 %v891
    %2162 = vmatpush.msra.mxu0 %v883
    %2163 = vmatpush.msra.mxu0 %v875
    %2164 = vmatpush.msra.mxu0 %v867
    %2165 = vmatpush.msra.mxu0 %v859
    %2166 = vmatpush.msra.mxu0 %v851
    %2167 = vmatpush.msra.mxu0 %v843
    %2168 = vmatpush.msra.mxu0 %v835
    %2169 = vmatpush.msra.mxu0 %v827
    %2170 = vmatpush.msra.mxu0 %v819
    %2171 = vmatpush.msra.mxu0 %v811
    %2172 = vmatpush.msra.mxu0 %v803
    %2173 = vmatmul.f32.gmra.mxu0 %v275
    %v2174 = vpop.f32.mrf.mxu0
    %v2175 = vadd.f32 %v2152, %v2174
    %2176 = vmatmul.f32.gmra.mxu0 %v283
    %v2177 = vpop.f32.mrf.mxu0
    %v2178 = vadd.f32 %v2155, %v2177
    %2179 = vdwg.mxu0
    %2180 = vmatpush.msra.mxu0 %v1051
    %2181 = vmatpush.msra.mxu0 %v1043
    %2182 = vmatpush.msra.mxu0 %v1035
    %2183 = vmatpush.msra.mxu0 %v1027
    %2184 = vmatpush.msra.mxu0 %v1019
    %2185 = vmatpush.msra.mxu0 %v1011
    %2186 = vmatpush.msra.mxu0 %v1003
    %2187 = vmatpush.msra.mxu0 %v995
    %2188 = vmatpush.msra.mxu0 %v987
    %2189 = vmatpush.msra.mxu0 %v979
    %2190 = vmatpush.msra.mxu0 %v971
    %2191 = vmatpush.msra.mxu0 %v963
    %2192 = vmatpush.msra.mxu0 %v955
    %2193 = vmatpush.msra.mxu0 %v947
    %2194 = vmatpush.msra.mxu0 %v939
    %2195 = vmatpush.msra.mxu0 %v931
    %2196 = vmatmul.f32.gmra.mxu0 %v276
    %v2197 = vpop.f32.mrf.mxu0
    %v2198 = vadd.f32 %v2175, %v2197
    %2199 = vmatmul.f32.gmra.mxu0 %v284
    %v2200 = vpop.f32.mrf.mxu0
    %v2201 = vadd.f32 %v2178, %v2200
    %2202 = vdwg.mxu0
    %2203 = vmatpush.msra.mxu0 %v1179
    %2204 = vmatpush.msra.mxu0 %v1171
    %2205 = vmatpush.msra.mxu0 %v1163
    %2206 = vmatpush.msra.mxu0 %v1155
    %2207 = vmatpush.msra.mxu0 %v1147
    %2208 = vmatpush.msra.mxu0 %v1139
    %2209 = vmatpush.msra.mxu0 %v1131
    %2210 = vmatpush.msra.mxu0 %v1123
    %2211 = vmatpush.msra.mxu0 %v1115
    %2212 = vmatpush.msra.mxu0 %v1107
    %2213 = vmatpush.msra.mxu0 %v1099
    %2214 = vmatpush.msra.mxu0 %v1091
    %2215 = vmatpush.msra.mxu0 %v1083
    %2216 = vmatpush.msra.mxu0 %v1075
    %2217 = vmatpush.msra.mxu0 %v1067
    %2218 = vmatpush.msra.mxu0 %v1059
    %2219 = vmatmul.f32.gmra.mxu0 %v277
    %v2220 = vpop.f32.mrf.mxu0
    %v2221 = vadd.f32 %v2198, %v2220
    %2222 = vmatmul.f32.gmra.mxu0 %v285
    %v2223 = vpop.f32.mrf.mxu0
    %v2224 = vadd.f32 %v2201, %v2223
    %2225 = vdwg.mxu0
    %2226 = vmatpush.msra.mxu0 %v1307
    %2227 = vmatpush.msra.mxu0 %v1299
    %2228 = vmatpush.msra.mxu0 %v1291
    %2229 = vmatpush.msra.mxu0 %v1283
    %2230 = vmatpush.msra.mxu0 %v1275
    %2231 = vmatpush.msra.mxu0 %v1267
    %2232 = vmatpush.msra.mxu0 %v1259
    %2233 = vmatpush.msra.mxu0 %v1251
    %2234 = vmatpush.msra.mxu0 %v1243
    %2235 = vmatpush.msra.mxu0 %v1235
    %2236 = vmatpush.msra.mxu0 %v1227
    %2237 = vmatpush.msra.mxu0 %v1219
    %2238 = vmatpush.msra.mxu0 %v1211
    %2239 = vmatpush.msra.mxu0 %v1203
    %2240 = vmatpush.msra.mxu0 %v1195
    %2241 = vmatpush.msra.mxu0 %v1187
    %2242 = vmatmul.f32.gmra.mxu0 %v278
    %v2243 = vpop.f32.mrf.mxu0
    %v2244 = vadd.f32 %v2221, %v2243
    %2245 = vmatmul.f32.gmra.mxu0 %v286
    %v2246 = vpop.f32.mrf.mxu0
    %v2247 = vadd.f32 %v2224, %v2246
    %2248 = vdwg.mxu0
    %2249 = vmatpush.msra.mxu0 %v412
    %2250 = vmatpush.msra.mxu0 %v404
    %2251 = vmatpush.msra.mxu0 %v396
    %2252 = vmatpush.msra.mxu0 %v388
    %2253 = vmatpush.msra.mxu0 %v380
    %2254 = vmatpush.msra.mxu0 %v372
    %2255 = vmatpush.msra.mxu0 %v364
    %2256 = vmatpush.msra.mxu0 %v356
    %2257 = vmatpush.msra.mxu0 %v348
    %2258 = vmatpush.msra.mxu0 %v340
    %2259 = vmatpush.msra.mxu0 %v332
    %2260 = vmatpush.msra.mxu0 %v324
    %2261 = vmatpush.msra.mxu0 %v316
    %2262 = vmatpush.msra.mxu0 %v308
    %2263 = vmatpush.msra.mxu0 %v300
    %2264 = vmatpush.msra.mxu0 %v292
    %2265 = vmatmul.f32.gmra.mxu0 %v271
    %v2266 = vpop.f32.mrf.mxu0
    %v2267 = vadd.f32 %v1318, %v2266
    %2268 = vmatmul.f32.gmra.mxu0 %v279
    %v2269 = vpop.f32.mrf.mxu0
    %v2270 = vadd.f32 %v1318, %v2269
    %2271 = vdwg.mxu0
    %2272 = vmatpush.msra.mxu0 %v540
    %2273 = vmatpush.msra.mxu0 %v532
    %2274 = vmatpush.msra.mxu0 %v524
    %2275 = vmatpush.msra.mxu0 %v516
    %2276 = vmatpush.msra.mxu0 %v508
    %2277 = vmatpush.msra.mxu0 %v500
    %2278 = vmatpush.msra.mxu0 %v492
    %2279 = vmatpush.msra.mxu0 %v484
    %2280 = vmatpush.msra.mxu0 %v476
    %2281 = vmatpush.msra.mxu0 %v468
    %2282 = vmatpush.msra.mxu0 %v460
    %2283 = vmatpush.msra.mxu0 %v452
    %2284 = vmatpush.msra.mxu0 %v444
    %2285 = vmatpush.msra.mxu0 %v436
    %2286 = vmatpush.msra.mxu0 %v428
    %2287 = vmatpush.msra.mxu0 %v420
    %2288 = vmatmul.f32.gmra.mxu0 %v272
    %v2289 = vpop.f32.mrf.mxu0
    %v2290 = vadd.f32 %v2267, %v2289
    %2291 = vmatmul.f32.gmra.mxu0 %v280
    %v2292 = vpop.f32.mrf.mxu0
    %v2293 = vadd.f32 %v2270, %v2292
    %2294 = vdwg.mxu0
    %2295 = vmatpush.msra.mxu0 %v668
    %2296 = vmatpush.msra.mxu0 %v660
    %2297 = vmatpush.msra.mxu0 %v652
    %2298 = vmatpush.msra.mxu0 %v644
    %2299 = vmatpush.msra.mxu0 %v636
    %2300 = vmatpush.msra.mxu0 %v628
    %2301 = vmatpush.msra.mxu0 %v620
    %2302 = vmatpush.msra.mxu0 %v612
    %2303 = vmatpush.msra.mxu0 %v604
    %2304 = vmatpush.msra.mxu0 %v596
    %2305 = vmatpush.msra.mxu0 %v588
    %2306 = vmatpush.msra.mxu0 %v580
    %2307 = vmatpush.msra.mxu0 %v572
    %2308 = vmatpush.msra.mxu0 %v564
    %2309 = vmatpush.msra.mxu0 %v556
    %2310 = vmatpush.msra.mxu0 %v548
    %2311 = vmatmul.f32.gmra.mxu0 %v273
    %v2312 = vpop.f32.mrf.mxu0
    %v2313 = vadd.f32 %v2290, %v2312
    %2314 = vmatmul.f32.gmra.mxu0 %v281
    %v2315 = vpop.f32.mrf.mxu0
    %v2316 = vadd.f32 %v2293, %v2315
    %2317 = vdwg.mxu0
    %2318 = vmatpush.msra.mxu0 %v796
    %2319 = vmatpush.msra.mxu0 %v788
    %2320 = vmatpush.msra.mxu0 %v780
    %2321 = vmatpush.msra.mxu0 %v772
    %2322 = vmatpush.msra.mxu0 %v764
    %2323 = vmatpush.msra.mxu0 %v756
    %2324 = vmatpush.msra.mxu0 %v748
    %2325 = vmatpush.msra.mxu0 %v740
    %2326 = vmatpush.msra.mxu0 %v732
    %2327 = vmatpush.msra.mxu0 %v724
    %2328 = vmatpush.msra.mxu0 %v716
    %2329 = vmatpush.msra.mxu0 %v708
    %2330 = vmatpush.msra.mxu0 %v700
    %2331 = vmatpush.msra.mxu0 %v692
    %2332 = vmatpush.msra.mxu0 %v684
    %2333 = vmatpush.msra.mxu0 %v676
    %2334 = vmatmul.f32.gmra.mxu0 %v274
    %v2335 = vpop.f32.mrf.mxu0
    %v2336 = vadd.f32 %v2313, %v2335
    %2337 = vmatmul.f32.gmra.mxu0 %v282
    %v2338 = vpop.f32.mrf.mxu0
    %v2339 = vadd.f32 %v2316, %v2338
    %2340 = vdwg.mxu0
    %2341 = vmatpush.msra.mxu0 %v924
    %2342 = vmatpush.msra.mxu0 %v916
    %2343 = vmatpush.msra.mxu0 %v908
    %2344 = vmatpush.msra.mxu0 %v900
    %2345 = vmatpush.msra.mxu0 %v892
    %2346 = vmatpush.msra.mxu0 %v884
    %2347 = vmatpush.msra.mxu0 %v876
    %2348 = vmatpush.msra.mxu0 %v868
    %2349 = vmatpush.msra.mxu0 %v860
    %2350 = vmatpush.msra.mxu0 %v852
    %2351 = vmatpush.msra.mxu0 %v844
    %2352 = vmatpush.msra.mxu0 %v836
    %2353 = vmatpush.msra.mxu0 %v828
    %2354 = vmatpush.msra.mxu0 %v820
    %2355 = vmatpush.msra.mxu0 %v812
    %2356 = vmatpush.msra.mxu0 %v804
    %2357 = vmatmul.f32.gmra.mxu0 %v275
    %v2358 = vpop.f32.mrf.mxu0
    %v2359 = vadd.f32 %v2336, %v2358
    %2360 = vmatmul.f32.gmra.mxu0 %v283
    %v2361 = vpop.f32.mrf.mxu0
    %v2362 = vadd.f32 %v2339, %v2361
    %2363 = vdwg.mxu0
    %2364 = vmatpush.msra.mxu0 %v1052
    %2365 = vmatpush.msra.mxu0 %v1044
    %2366 = vmatpush.msra.mxu0 %v1036
    %2367 = vmatpush.msra.mxu0 %v1028
    %2368 = vmatpush.msra.mxu0 %v1020
    %2369 = vmatpush.msra.mxu0 %v1012
    %2370 = vmatpush.msra.mxu0 %v1004
    %2371 = vmatpush.msra.mxu0 %v996
    %2372 = vmatpush.msra.mxu0 %v988
    %2373 = vmatpush.msra.mxu0 %v980
    %2374 = vmatpush.msra.mxu0 %v972
    %2375 = vmatpush.msra.mxu0 %v964
    %2376 = vmatpush.msra.mxu0 %v956
    %2377 = vmatpush.msra.mxu0 %v948
    %2378 = vmatpush.msra.mxu0 %v940
    %2379 = vmatpush.msra.mxu0 %v932
    %2380 = vmatmul.f32.gmra.mxu0 %v276
    %v2381 = vpop.f32.mrf.mxu0
    %v2382 = vadd.f32 %v2359, %v2381
    %2383 = vmatmul.f32.gmra.mxu0 %v284
    %v2384 = vpop.f32.mrf.mxu0
    %v2385 = vadd.f32 %v2362, %v2384
    %2386 = vdwg.mxu0
    %2387 = vmatpush.msra.mxu0 %v1180
    %2388 = vmatpush.msra.mxu0 %v1172
    %2389 = vmatpush.msra.mxu0 %v1164
    %2390 = vmatpush.msra.mxu0 %v1156
    %2391 = vmatpush.msra.mxu0 %v1148
    %2392 = vmatpush.msra.mxu0 %v1140
    %2393 = vmatpush.msra.mxu0 %v1132
    %2394 = vmatpush.msra.mxu0 %v1124
    %2395 = vmatpush.msra.mxu0 %v1116
    %2396 = vmatpush.msra.mxu0 %v1108
    %2397 = vmatpush.msra.mxu0 %v1100
    %2398 = vmatpush.msra.mxu0 %v1092
    %2399 = vmatpush.msra.mxu0 %v1084
    %2400 = vmatpush.msra.mxu0 %v1076
    %2401 = vmatpush.msra.mxu0 %v1068
    %2402 = vmatpush.msra.mxu0 %v1060
    %2403 = vmatmul.f32.gmra.mxu0 %v277
    %v2404 = vpop.f32.mrf.mxu0
    %v2405 = vadd.f32 %v2382, %v2404
    %2406 = vmatmul.f32.gmra.mxu0 %v285
    %v2407 = vpop.f32.mrf.mxu0
    %v2408 = vadd.f32 %v2385, %v2407
    %2409 = vdwg.mxu0
    %2410 = vmatpush.msra.mxu0 %v1308
    %2411 = vmatpush.msra.mxu0 %v1300
    %2412 = vmatpush.msra.mxu0 %v1292
    %2413 = vmatpush.msra.mxu0 %v1284
    %2414 = vmatpush.msra.mxu0 %v1276
    %2415 = vmatpush.msra.mxu0 %v1268
    %2416 = vmatpush.msra.mxu0 %v1260
    %2417 = vmatpush.msra.mxu0 %v1252
    %2418 = vmatpush.msra.mxu0 %v1244
    %2419 = vmatpush.msra.mxu0 %v1236
    %2420 = vmatpush.msra.mxu0 %v1228
    %2421 = vmatpush.msra.mxu0 %v1220
    %2422 = vmatpush.msra.mxu0 %v1212
    %2423 = vmatpush.msra.mxu0 %v1204
    %2424 = vmatpush.msra.mxu0 %v1196
    %2425 = vmatpush.msra.mxu0 %v1188
    %2426 = vmatmul.f32.gmra.mxu0 %v278
    %v2427 = vpop.f32.mrf.mxu0
    %v2428 = vadd.f32 %v2405, %v2427
    %2429 = vmatmul.f32.gmra.mxu0 %v286
    %v2430 = vpop.f32.mrf.mxu0
    %v2431 = vadd.f32 %v2408, %v2430
    %2432 = vdwg.mxu0
    %2433 = vmatpush.msra.mxu0 %v413
    %2434 = vmatpush.msra.mxu0 %v405
    %2435 = vmatpush.msra.mxu0 %v397
    %2436 = vmatpush.msra.mxu0 %v389
    %2437 = vmatpush.msra.mxu0 %v381
    %2438 = vmatpush.msra.mxu0 %v373
    %2439 = vmatpush.msra.mxu0 %v365
    %2440 = vmatpush.msra.mxu0 %v357
    %2441 = vmatpush.msra.mxu0 %v349
    %2442 = vmatpush.msra.mxu0 %v341
    %2443 = vmatpush.msra.mxu0 %v333
    %2444 = vmatpush.msra.mxu0 %v325
    %2445 = vmatpush.msra.mxu0 %v317
    %2446 = vmatpush.msra.mxu0 %v309
    %2447 = vmatpush.msra.mxu0 %v301
    %2448 = vmatpush.msra.mxu0 %v293
    %2449 = vmatmul.f32.gmra.mxu0 %v271
    %v2450 = vpop.f32.mrf.mxu0
    %v2451 = vadd.f32 %v1319, %v2450
    %2452 = vmatmul.f32.gmra.mxu0 %v279
    %v2453 = vpop.f32.mrf.mxu0
    %v2454 = vadd.f32 %v1319, %v2453
    %2455 = vdwg.mxu0
    %2456 = vmatpush.msra.mxu0 %v541
    %2457 = vmatpush.msra.mxu0 %v533
    %2458 = vmatpush.msra.mxu0 %v525
    %2459 = vmatpush.msra.mxu0 %v517
    %2460 = vmatpush.msra.mxu0 %v509
    %2461 = vmatpush.msra.mxu0 %v501
    %2462 = vmatpush.msra.mxu0 %v493
    %2463 = vmatpush.msra.mxu0 %v485
    %2464 = vmatpush.msra.mxu0 %v477
    %2465 = vmatpush.msra.mxu0 %v469
    %2466 = vmatpush.msra.mxu0 %v461
    %2467 = vmatpush.msra.mxu0 %v453
    %2468 = vmatpush.msra.mxu0 %v445
    %2469 = vmatpush.msra.mxu0 %v437
    %2470 = vmatpush.msra.mxu0 %v429
    %2471 = vmatpush.msra.mxu0 %v421
    %2472 = vmatmul.f32.gmra.mxu0 %v272
    %v2473 = vpop.f32.mrf.mxu0
    %v2474 = vadd.f32 %v2451, %v2473
    %2475 = vmatmul.f32.gmra.mxu0 %v280
    %v2476 = vpop.f32.mrf.mxu0
    %v2477 = vadd.f32 %v2454, %v2476
    %2478 = vdwg.mxu0
    %2479 = vmatpush.msra.mxu0 %v669
    %2480 = vmatpush.msra.mxu0 %v661
    %2481 = vmatpush.msra.mxu0 %v653
    %2482 = vmatpush.msra.mxu0 %v645
    %2483 = vmatpush.msra.mxu0 %v637
    %2484 = vmatpush.msra.mxu0 %v629
    %2485 = vmatpush.msra.mxu0 %v621
    %2486 = vmatpush.msra.mxu0 %v613
    %2487 = vmatpush.msra.mxu0 %v605
    %2488 = vmatpush.msra.mxu0 %v597
    %2489 = vmatpush.msra.mxu0 %v589
    %2490 = vmatpush.msra.mxu0 %v581
    %2491 = vmatpush.msra.mxu0 %v573
    %2492 = vmatpush.msra.mxu0 %v565
    %2493 = vmatpush.msra.mxu0 %v557
    %2494 = vmatpush.msra.mxu0 %v549
    %2495 = vmatmul.f32.gmra.mxu0 %v273
    %v2496 = vpop.f32.mrf.mxu0
    %v2497 = vadd.f32 %v2474, %v2496
    %2498 = vmatmul.f32.gmra.mxu0 %v281
    %v2499 = vpop.f32.mrf.mxu0
    %v2500 = vadd.f32 %v2477, %v2499
    %2501 = vdwg.mxu0
    %2502 = vmatpush.msra.mxu0 %v797
    %2503 = vmatpush.msra.mxu0 %v789
    %2504 = vmatpush.msra.mxu0 %v781
    %2505 = vmatpush.msra.mxu0 %v773
    %2506 = vmatpush.msra.mxu0 %v765
    %2507 = vmatpush.msra.mxu0 %v757
    %2508 = vmatpush.msra.mxu0 %v749
    %2509 = vmatpush.msra.mxu0 %v741
    %2510 = vmatpush.msra.mxu0 %v733
    %2511 = vmatpush.msra.mxu0 %v725
    %2512 = vmatpush.msra.mxu0 %v717
    %2513 = vmatpush.msra.mxu0 %v709
    %2514 = vmatpush.msra.mxu0 %v701
    %2515 = vmatpush.msra.mxu0 %v693
    %2516 = vmatpush.msra.mxu0 %v685
    %2517 = vmatpush.msra.mxu0 %v677
    %2518 = vmatmul.f32.gmra.mxu0 %v274
    %v2519 = vpop.f32.mrf.mxu0
    %v2520 = vadd.f32 %v2497, %v2519
    %2521 = vmatmul.f32.gmra.mxu0 %v282
    %v2522 = vpop.f32.mrf.mxu0
    %v2523 = vadd.f32 %v2500, %v2522
    %2524 = vdwg.mxu0
    %2525 = vmatpush.msra.mxu0 %v925
    %2526 = vmatpush.msra.mxu0 %v917
    %2527 = vmatpush.msra.mxu0 %v909
    %2528 = vmatpush.msra.mxu0 %v901
    %2529 = vmatpush.msra.mxu0 %v893
    %2530 = vmatpush.msra.mxu0 %v885
    %2531 = vmatpush.msra.mxu0 %v877
    %2532 = vmatpush.msra.mxu0 %v869
    %2533 = vmatpush.msra.mxu0 %v861
    %2534 = vmatpush.msra.mxu0 %v853
    %2535 = vmatpush.msra.mxu0 %v845
    %2536 = vmatpush.msra.mxu0 %v837
    %2537 = vmatpush.msra.mxu0 %v829
    %2538 = vmatpush.msra.mxu0 %v821
    %2539 = vmatpush.msra.mxu0 %v813
    %2540 = vmatpush.msra.mxu0 %v805
    %2541 = vmatmul.f32.gmra.mxu0 %v275
    %v2542 = vpop.f32.mrf.mxu0
    %v2543 = vadd.f32 %v2520, %v2542
    %2544 = vmatmul.f32.gmra.mxu0 %v283
    %v2545 = vpop.f32.mrf.mxu0
    %v2546 = vadd.f32 %v2523, %v2545
    %2547 = vdwg.mxu0
    %2548 = vmatpush.msra.mxu0 %v1053
    %2549 = vmatpush.msra.mxu0 %v1045
    %2550 = vmatpush.msra.mxu0 %v1037
    %2551 = vmatpush.msra.mxu0 %v1029
    %2552 = vmatpush.msra.mxu0 %v1021
    %2553 = vmatpush.msra.mxu0 %v1013
    %2554 = vmatpush.msra.mxu0 %v1005
    %2555 = vmatpush.msra.mxu0 %v997
    %2556 = vmatpush.msra.mxu0 %v989
    %2557 = vmatpush.msra.mxu0 %v981
    %2558 = vmatpush.msra.mxu0 %v973
    %2559 = vmatpush.msra.mxu0 %v965
    %2560 = vmatpush.msra.mxu0 %v957
    %2561 = vmatpush.msra.mxu0 %v949
    %2562 = vmatpush.msra.mxu0 %v941
    %2563 = vmatpush.msra.mxu0 %v933
    %2564 = vmatmul.f32.gmra.mxu0 %v276
    %v2565 = vpop.f32.mrf.mxu0
    %v2566 = vadd.f32 %v2543, %v2565
    %2567 = vmatmul.f32.gmra.mxu0 %v284
    %v2568 = vpop.f32.mrf.mxu0
    %v2569 = vadd.f32 %v2546, %v2568
    %2570 = vdwg.mxu0
    %2571 = vmatpush.msra.mxu0 %v1181
    %2572 = vmatpush.msra.mxu0 %v1173
    %2573 = vmatpush.msra.mxu0 %v1165
    %2574 = vmatpush.msra.mxu0 %v1157
    %2575 = vmatpush.msra.mxu0 %v1149
    %2576 = vmatpush.msra.mxu0 %v1141
    %2577 = vmatpush.msra.mxu0 %v1133
    %2578 = vmatpush.msra.mxu0 %v1125
    %2579 = vmatpush.msra.mxu0 %v1117
    %2580 = vmatpush.msra.mxu0 %v1109
    %2581 = vmatpush.msra.mxu0 %v1101
    %2582 = vmatpush.msra.mxu0 %v1093
    %2583 = vmatpush.msra.mxu0 %v1085
    %2584 = vmatpush.msra.mxu0 %v1077
    %2585 = vmatpush.msra.mxu0 %v1069
    %2586 = vmatpush.msra.mxu0 %v1061
    %2587 = vmatmul.f32.gmra.mxu0 %v277
    %v2588 = vpop.f32.mrf.mxu0
    %v2589 = vadd.f32 %v2566, %v2588
    %2590 = vmatmul.f32.gmra.mxu0 %v285
    %v2591 = vpop.f32.mrf.mxu0
    %v2592 = vadd.f32 %v2569, %v2591
    %2593 = vdwg.mxu0
    %2594 = vmatpush.msra.mxu0 %v1309
    %2595 = vmatpush.msra.mxu0 %v1301
    %2596 = vmatpush.msra.mxu0 %v1293
    %2597 = vmatpush.msra.mxu0 %v1285
    %2598 = vmatpush.msra.mxu0 %v1277
    %2599 = vmatpush.msra.mxu0 %v1269
    %2600 = vmatpush.msra.mxu0 %v1261
    %2601 = vmatpush.msra.mxu0 %v1253
    %2602 = vmatpush.msra.mxu0 %v1245
    %2603 = vmatpush.msra.mxu0 %v1237
    %2604 = vmatpush.msra.mxu0 %v1229
    %2605 = vmatpush.msra.mxu0 %v1221
    %2606 = vmatpush.msra.mxu0 %v1213
    %2607 = vmatpush.msra.mxu0 %v1205
    %2608 = vmatpush.msra.mxu0 %v1197
    %2609 = vmatpush.msra.mxu0 %v1189
    %2610 = vmatmul.f32.gmra.mxu0 %v278
    %v2611 = vpop.f32.mrf.mxu0
    %v2612 = vadd.f32 %v2589, %v2611
    %2613 = vmatmul.f32.gmra.mxu0 %v286
    %v2614 = vpop.f32.mrf.mxu0
    %v2615 = vadd.f32 %v2592, %v2614
    %2616 = vdwg.mxu0
    %2617 = vmatpush.msra.mxu0 %v414
    %2618 = vmatpush.msra.mxu0 %v406
    %2619 = vmatpush.msra.mxu0 %v398
    %2620 = vmatpush.msra.mxu0 %v390
    %2621 = vmatpush.msra.mxu0 %v382
    %2622 = vmatpush.msra.mxu0 %v374
    %2623 = vmatpush.msra.mxu0 %v366
    %2624 = vmatpush.msra.mxu0 %v358
    %2625 = vmatpush.msra.mxu0 %v350
    %2626 = vmatpush.msra.mxu0 %v342
    %2627 = vmatpush.msra.mxu0 %v334
    %2628 = vmatpush.msra.mxu0 %v326
    %2629 = vmatpush.msra.mxu0 %v318
    %2630 = vmatpush.msra.mxu0 %v310
    %2631 = vmatpush.msra.mxu0 %v302
    %2632 = vmatpush.msra.mxu0 %v294
    %2633 = vmatmul.f32.gmra.mxu0 %v271
    %v2634 = vpop.f32.mrf.mxu0
    %v2635 = vadd.f32 %v1320, %v2634
    %2636 = vmatmul.f32.gmra.mxu0 %v279
    %v2637 = vpop.f32.mrf.mxu0
    %v2638 = vadd.f32 %v1320, %v2637
    %2639 = vdwg.mxu0
    %2640 = vmatpush.msra.mxu0 %v542
    %2641 = vmatpush.msra.mxu0 %v534
    %2642 = vmatpush.msra.mxu0 %v526
    %2643 = vmatpush.msra.mxu0 %v518
    %2644 = vmatpush.msra.mxu0 %v510
    %2645 = vmatpush.msra.mxu0 %v502
    %2646 = vmatpush.msra.mxu0 %v494
    %2647 = vmatpush.msra.mxu0 %v486
    %2648 = vmatpush.msra.mxu0 %v478
    %2649 = vmatpush.msra.mxu0 %v470
    %2650 = vmatpush.msra.mxu0 %v462
    %2651 = vmatpush.msra.mxu0 %v454
    %2652 = vmatpush.msra.mxu0 %v446
    %2653 = vmatpush.msra.mxu0 %v438
    %2654 = vmatpush.msra.mxu0 %v430
    %2655 = vmatpush.msra.mxu0 %v422
    %2656 = vmatmul.f32.gmra.mxu0 %v272
    %v2657 = vpop.f32.mrf.mxu0
    %v2658 = vadd.f32 %v2635, %v2657
    %2659 = vmatmul.f32.gmra.mxu0 %v280
    %v2660 = vpop.f32.mrf.mxu0
    %v2661 = vadd.f32 %v2638, %v2660
    %2662 = vdwg.mxu0
    %2663 = vmatpush.msra.mxu0 %v670
    %2664 = vmatpush.msra.mxu0 %v662
    %2665 = vmatpush.msra.mxu0 %v654
    %2666 = vmatpush.msra.mxu0 %v646
    %2667 = vmatpush.msra.mxu0 %v638
    %2668 = vmatpush.msra.mxu0 %v630
    %2669 = vmatpush.msra.mxu0 %v622
    %2670 = vmatpush.msra.mxu0 %v614
    %2671 = vmatpush.msra.mxu0 %v606
    %2672 = vmatpush.msra.mxu0 %v598
    %2673 = vmatpush.msra.mxu0 %v590
    %2674 = vmatpush.msra.mxu0 %v582
    %2675 = vmatpush.msra.mxu0 %v574
    %2676 = vmatpush.msra.mxu0 %v566
    %2677 = vmatpush.msra.mxu0 %v558
    %2678 = vmatpush.msra.mxu0 %v550
    %2679 = vmatmul.f32.gmra.mxu0 %v273
    %v2680 = vpop.f32.mrf.mxu0
    %v2681 = vadd.f32 %v2658, %v2680
    %2682 = vmatmul.f32.gmra.mxu0 %v281
    %v2683 = vpop.f32.mrf.mxu0
    %v2684 = vadd.f32 %v2661, %v2683
    %2685 = vdwg.mxu0
    %2686 = vmatpush.msra.mxu0 %v798
    %2687 = vmatpush.msra.mxu0 %v790
    %2688 = vmatpush.msra.mxu0 %v782
    %2689 = vmatpush.msra.mxu0 %v774
    %2690 = vmatpush.msra.mxu0 %v766
    %2691 = vmatpush.msra.mxu0 %v758
    %2692 = vmatpush.msra.mxu0 %v750
    %2693 = vmatpush.msra.mxu0 %v742
    %2694 = vmatpush.msra.mxu0 %v734
    %2695 = vmatpush.msra.mxu0 %v726
    %2696 = vmatpush.msra.mxu0 %v718
    %2697 = vmatpush.msra.mxu0 %v710
    %2698 = vmatpush.msra.mxu0 %v702
    %2699 = vmatpush.msra.mxu0 %v694
    %2700 = vmatpush.msra.mxu0 %v686
    %2701 = vmatpush.msra.mxu0 %v678
    %2702 = vmatmul.f32.gmra.mxu0 %v274
    %v2703 = vpop.f32.mrf.mxu0
    %v2704 = vadd.f32 %v2681, %v2703
    %2705 = vmatmul.f32.gmra.mxu0 %v282
    %v2706 = vpop.f32.mrf.mxu0
    %v2707 = vadd.f32 %v2684, %v2706
    %2708 = vdwg.mxu0
    %2709 = vmatpush.msra.mxu0 %v926
    %2710 = vmatpush.msra.mxu0 %v918
    %2711 = vmatpush.msra.mxu0 %v910
    %2712 = vmatpush.msra.mxu0 %v902
    %2713 = vmatpush.msra.mxu0 %v894
    %2714 = vmatpush.msra.mxu0 %v886
    %2715 = vmatpush.msra.mxu0 %v878
    %2716 = vmatpush.msra.mxu0 %v870
    %2717 = vmatpush.msra.mxu0 %v862
    %2718 = vmatpush.msra.mxu0 %v854
    %2719 = vmatpush.msra.mxu0 %v846
    %2720 = vmatpush.msra.mxu0 %v838
    %2721 = vmatpush.msra.mxu0 %v830
    %2722 = vmatpush.msra.mxu0 %v822
    %2723 = vmatpush.msra.mxu0 %v814
    %2724 = vmatpush.msra.mxu0 %v806
    %2725 = vmatmul.f32.gmra.mxu0 %v275
    %v2726 = vpop.f32.mrf.mxu0
    %v2727 = vadd.f32 %v2704, %v2726
    %2728 = vmatmul.f32.gmra.mxu0 %v283
    %v2729 = vpop.f32.mrf.mxu0
    %v2730 = vadd.f32 %v2707, %v2729
    %2731 = vdwg.mxu0
    %2732 = vmatpush.msra.mxu0 %v1054
    %2733 = vmatpush.msra.mxu0 %v1046
    %2734 = vmatpush.msra.mxu0 %v1038
    %2735 = vmatpush.msra.mxu0 %v1030
    %2736 = vmatpush.msra.mxu0 %v1022
    %2737 = vmatpush.msra.mxu0 %v1014
    %2738 = vmatpush.msra.mxu0 %v1006
    %2739 = vmatpush.msra.mxu0 %v998
    %2740 = vmatpush.msra.mxu0 %v990
    %2741 = vmatpush.msra.mxu0 %v982
    %2742 = vmatpush.msra.mxu0 %v974
    %2743 = vmatpush.msra.mxu0 %v966
    %2744 = vmatpush.msra.mxu0 %v958
    %2745 = vmatpush.msra.mxu0 %v950
    %2746 = vmatpush.msra.mxu0 %v942
    %2747 = vmatpush.msra.mxu0 %v934
    %2748 = vmatmul.f32.gmra.mxu0 %v276
    %v2749 = vpop.f32.mrf.mxu0
    %v2750 = vadd.f32 %v2727, %v2749
    %2751 = vmatmul.f32.gmra.mxu0 %v284
    %v2752 = vpop.f32.mrf.mxu0
    %v2753 = vadd.f32 %v2730, %v2752
    %2754 = vdwg.mxu0
    %2755 = vmatpush.msra.mxu0 %v1182
    %2756 = vmatpush.msra.mxu0 %v1174
    %2757 = vmatpush.msra.mxu0 %v1166
    %2758 = vmatpush.msra.mxu0 %v1158
    %2759 = vmatpush.msra.mxu0 %v1150
    %2760 = vmatpush.msra.mxu0 %v1142
    %2761 = vmatpush.msra.mxu0 %v1134
    %2762 = vmatpush.msra.mxu0 %v1126
    %2763 = vmatpush.msra.mxu0 %v1118
    %2764 = vmatpush.msra.mxu0 %v1110
    %2765 = vmatpush.msra.mxu0 %v1102
    %2766 = vmatpush.msra.mxu0 %v1094
    %2767 = vmatpush.msra.mxu0 %v1086
    %2768 = vmatpush.msra.mxu0 %v1078
    %2769 = vmatpush.msra.mxu0 %v1070
    %2770 = vmatpush.msra.mxu0 %v1062
    %2771 = vmatmul.f32.gmra.mxu0 %v277
    %v2772 = vpop.f32.mrf.mxu0
    %v2773 = vadd.f32 %v2750, %v2772
    %2774 = vmatmul.f32.gmra.mxu0 %v285
    %v2775 = vpop.f32.mrf.mxu0
    %v2776 = vadd.f32 %v2753, %v2775
    %2777 = vdwg.mxu0
    %2778 = vmatpush.msra.mxu0 %v1310
    %2779 = vmatpush.msra.mxu0 %v1302
    %2780 = vmatpush.msra.mxu0 %v1294
    %2781 = vmatpush.msra.mxu0 %v1286
    %2782 = vmatpush.msra.mxu0 %v1278
    %2783 = vmatpush.msra.mxu0 %v1270
    %2784 = vmatpush.msra.mxu0 %v1262
    %2785 = vmatpush.msra.mxu0 %v1254
    %2786 = vmatpush.msra.mxu0 %v1246
    %2787 = vmatpush.msra.mxu0 %v1238
    %2788 = vmatpush.msra.mxu0 %v1230
    %2789 = vmatpush.msra.mxu0 %v1222
    %2790 = vmatpush.msra.mxu0 %v1214
    %2791 = vmatpush.msra.mxu0 %v1206
    %2792 = vmatpush.msra.mxu0 %v1198
    %2793 = vmatpush.msra.mxu0 %v1190
    %2794 = vmatmul.f32.gmra.mxu0 %v278
    %v2795 = vpop.f32.mrf.mxu0
    %v2796 = vadd.f32 %v2773, %v2795
    %2797 = vmatmul.f32.gmra.mxu0 %v286
    %v2798 = vpop.f32.mrf.mxu0
    %v2799 = vadd.f32 %v2776, %v2798
    %2800 = vdwg.mxu0
    %2801 = vst [vmem:[#allocation11] sm:$0xff] %v1508
    %2802 = vst [vmem:[#allocation11 + $0x8] sm:$0xff] %v1692
    %2803 = vst [vmem:[#allocation11 + $0x10] sm:$0xff] %v1876
    %2804 = vst [vmem:[#allocation11 + $0x18] sm:$0xff] %v2060
    %2805 = vst [vmem:[#allocation11 + $0x20] sm:$0xff] %v2244
    %2806 = vst [vmem:[#allocation11 + $0x28] sm:$0xff] %v2428
    %2807 = vst [vmem:[#allocation11 + $0x30] sm:$0xff] %v2612
    %2808 = vst [vmem:[#allocation11 + $0x38] sm:$0xff] %v2796
    %2809 = vst [vmem:[#allocation11 + $0x40] sm:$0xff] %v1511
    %2810 = vst [vmem:[#allocation11 + $0x48] sm:$0xff] %v1695
    %2811 = vst [vmem:[#allocation11 + $0x50] sm:$0xff] %v1879
    %2812 = vst [vmem:[#allocation11 + $0x58] sm:$0xff] %v2063
    %2813 = vst [vmem:[#allocation11 + $0x60] sm:$0xff] %v2247
    %2814 = vst [vmem:[#allocation11 + $0x68] sm:$0xff] %v2431
    %2815 = vst [vmem:[#allocation11 + $0x70] sm:$0xff] %v2615
    %2816 = vst [vmem:[#allocation11 + $0x78] sm:$0xff] %v2799
    // Predicated region
    $region42: #{tpu_custom_call.1} parent=1 // pred_check
      _
    $region43: #{tpu_custom_call.1} parent=1 // pred_check_branch
      %2818 = sbr.rel (0) target = $region45
    $region44: #{tpu_custom_call.1} parent=1 // pred_region
      %2820 = vsyncadd [#allocation4], 0
      %s2821 = sshll.u32 [#allocation11], 4
      %s2822 = int_to_ptr.vmem [resolvable:$true] %s2821
      %s2823 = sshll.u32 %s5, 4
      %s2824 = int_to_ptr.hbm [resolvable:$true] %s2823
      %2829 = dma.vmem_to_hbm [thread:$0]  %s2822, 2048, %s2824, [#allocation4], 1024, 1024, 64
    $region45: #{tpu_custom_call.1} parent=1 // pred_fallthru
      _
    // Predicated region
    $region46: #{tpu_custom_call.1} parent=1 // pred_check
      _
    $region47: #{tpu_custom_call.1} parent=1 // pred_check_branch
      %2831 = sbr.rel (0) target = $region49
    $region48: #{tpu_custom_call.1} parent=1 // pred_region
      %2833 = dma.done [#allocation4], 2048
    $region49: #{tpu_custom_call.1} parent=1 // pred_fallthru
      _
    %2834 = vsyncpa [#allocation3], 1
    %2835 = vsyncpa [#allocation6], 1
    %2836 = vsyncpa [#allocation9], 1
    %2837 = vsyncpa [#allocation4], 1

</llo_original>
